<compile_context>
chip_gen: v7x
topology: tpu7x:2x2x1
jax: 0.10.0
libtpu: 0.0.40
codegen_flags: <defaults>
</compile_context>

<pallas_src>
import functools
import math

import jax
import jax.numpy as jnp
from jax.experimental import pallas as pl
from jax.experimental.pallas import tpu as pltpu

EPS = 1e-5           # nn.BatchNorm2d default eps
LANE = 128           # channel padding multiple (lane width)
ROW_TILE = 1024      # row tile for the BN1 stats kernel (raised per review)


def _round_up(v, m):
    return ((v + m - 1) // m) * m


def _nbytes(shape, dtype):
    return math.prod(shape) * jnp.dtype(dtype).itemsize


def _mosaic(semantics, block_bytes):
    """Per-call VMEM limit from actual block sizes (x2 double-buffer + slack)."""
    limit = int(min(max(2 * block_bytes + (8 << 20), 24 << 20), 44 << 20))
    return pltpu.CompilerParams(dimension_semantics=semantics,
                                vmem_limit_bytes=limit)


# ---------------------------------------------------------------------------
# Pallas kernels
# ---------------------------------------------------------------------------
def _stats_kernel(x_ref, st_ref, *, m_true, tm):
    """Per-channel [sum; sum-of-squares] -> single resident (2, C) block."""
    i = pl.program_id(0)

    @pl.when(i == 0)
    def _init():
        st_ref[...] = jnp.zeros_like(st_ref)

    x = x_ref[...].astype(jnp.float32)
    row = i * tm + jax.lax.broadcasted_iota(jnp.int32, (tm, 1), 0)
    x = jnp.where(row < m_true, x, 0.0)          # mask OOB rows of last tile
    st_ref[...] += jnp.concatenate(
        [jnp.sum(x, axis=0, keepdims=True),
         jnp.sum(x * x, axis=0, keepdims=True)], axis=0)


def _bn_relu_pad_kernel(x_ref, scale_ref, shift_ref, o_ref, *, h, w):
    """y = relu(x*scale + shift) written into the interior of a pre-zeroed
    (H+2, W+2, C) block -> the conv halo pad never hits HBM separately."""
    y = x_ref[0].astype(jnp.float32) * scale_ref[...] + shift_ref[...]
    y = jnp.maximum(y, 0.0).astype(o_ref.dtype)
    o_ref[...] = jnp.zeros_like(o_ref)
    o_ref[0, pl.ds(1, h), pl.ds(1, w), :] = y


def _im2col_lhs(x_ref, *, stride, ho, wo, cp):
    """(Ho*Wo, 9*Cp) im2col strip from 9 contiguous VMEM windows, so the whole
    3x3 conv is a single K=9*Cp MXU matmul."""
    wins = []
    for t in range(9):
        dy, dx = divmod(t, 3)
        if stride == 1:
            win = x_ref[0, dy:dy + ho, dx:dx + wo, :]
        else:  # stride == 2: parity-deinterleaved block (1, 2, 2, Hh, Wh, C)
            oy, ox = dy // 2, dx // 2
            win = x_ref[0, dy % 2, dx % 2, oy:oy + ho, ox:ox + wo, :]
        wins.append(win.reshape(ho * wo, cp))
    return jnp.concatenate(wins, axis=-1)


def _conv1_kernel(x_ref, w_ref, o_ref, st_ref, *, stride, ho, wo, cp):
    lhs = _im2col_lhs(x_ref, stride=stride, ho=ho, wo=wo, cp=cp)
    acc = jnp.dot(lhs, w_ref[...], preferred_element_type=jnp.float32)
    yb = acc.astype(o_ref.dtype)
    o_ref[0] = yb.reshape(ho, wo, -1)
    # Fused per-image BN2 statistics (no separate HBM re-read of b).
    yf = yb.astype(jnp.float32)
    st_ref[0] = jnp.concatenate(
        [jnp.sum(yf, axis=0, keepdims=True),
         jnp.sum(yf * yf, axis=0, keepdims=True)], axis=0)


def _conv2_res_kernel(x_ref, w_ref, r_ref, o_ref, *, ho, wo, cp):
    """conv2 + identity residual add (fused)."""
    lhs = _im2col_lhs(x_ref, stride=1, ho=ho, wo=wo, cp=cp)
    acc = jnp.dot(lhs, w_ref[...], preferred_element_type=jnp.float32)
    acc = acc + r_ref[0].astype(jnp.float32)
    o_ref[0] = acc.reshape(ho, wo, -1).astype(o_ref.dtype)


def _conv2_proj_kernel(x_ref, w_ref, s_ref, sw_ref, o_ref, *, ho, wo, cp, off):
    """conv2 + fused 1x1 projection shortcut matmul + residual add."""
    lhs = _im2col_lhs(x_ref, stride=1, ho=ho, wo=wo, cp=cp)
    acc = jnp.dot(lhs, w_ref[...], preferred_element_type=jnp.float32)
    sc = s_ref[0, off:off + ho, off:off + wo, :]
    sc = sc.reshape(ho * wo, sc.shape[-1])
    acc = acc + jnp.dot(sc, sw_ref[...], preferred_element_type=jnp.float32)
    o_ref[0] = acc.reshape(ho, wo, -1).astype(o_ref.dtype)


# ---------------------------------------------------------------------------
# pallas_call wrappers
# ---------------------------------------------------------------------------
def _img_spec(shape):
    nd = len(shape)
    return pl.BlockSpec((1,) + tuple(shape[1:]), lambda n: (n,) + (0,) * (nd - 1))


def channel_stats(x_rows):
    m, c = x_rows.shape
    tm = min(m, ROW_TILE)
    kernel = functools.partial(_stats_kernel, m_true=m, tm=tm)
    blk = _nbytes((tm, c), x_rows.dtype) + _nbytes((2, c), jnp.float32)
    return pl.pallas_call(
        kernel,
        out_shape=jax.ShapeDtypeStruct((2, c), jnp.float32),
        grid=(pl.cdiv(m, tm),),
        in_specs=[pl.BlockSpec((tm, c), lambda i: (i, 0))],
        out_specs=pl.BlockSpec((2, c), lambda i: (0, 0)),
        compiler_params=_mosaic(("arbitrary",), blk),      # reduction axis
    )(x_rows)


def bn_relu_pad(x_img, scale, shift, out_dtype=jnp.bfloat16):
    n, h, w, c = x_img.shape
    kernel = functools.partial(_bn_relu_pad_kernel, h=h, w=w)
    blk = (_nbytes((h, w, c), x_img.dtype)
           + _nbytes((h + 2, w + 2, c), out_dtype) + 2 * _nbytes((1, c), jnp.float32))
    return pl.pallas_call(
        kernel,
        out_shape=jax.ShapeDtypeStruct((n, h + 2, w + 2, c), out_dtype),
        grid=(n,),
        in_specs=[_img_spec(x_img.shape),
                  pl.BlockSpec((1, c), lambda i: (0, 0)),
                  pl.BlockSpec((1, c), lambda i: (0, 0))],
        out_specs=pl.BlockSpec((1, h + 2, w + 2, c), lambda i: (i, 0, 0, 0)),
        compiler_params=_mosaic(("parallel",), blk),
    )(x_img, scale, shift)


def conv1_stats(x_img, w9, *, stride, ho, wo, out_dtype=jnp.bfloat16):
    n = x_img.shape[0]
    ci, co = w9.shape[0] // 9, w9.shape[1]
    kernel = functools.partial(_conv1_kernel, stride=stride, ho=ho, wo=wo, cp=ci)
    blk = (_nbytes(x_img.shape[1:], x_img.dtype) + _nbytes(w9.shape, w9.dtype)
           + _nbytes((ho, wo, co), out_dtype) + _nbytes((2, co), jnp.float32)
           + _nbytes((ho * wo, 9 * ci), x_img.dtype)     # im2col strip
           + _nbytes((ho * wo, co), jnp.float32))        # f32 accumulator
    flops = 2 * n * ho * wo * 9 * ci * co
    bytes_acc = (x_img.size * x_img.dtype.itemsize + w9.size * w9.dtype.itemsize
                 + n * ho * wo * co * jnp.dtype(out_dtype).itemsize
                 + n * 2 * co * 4)
    return pl.pallas_call(
        kernel,
        out_shape=(jax.ShapeDtypeStruct((n, ho, wo, co), out_dtype),
                   jax.ShapeDtypeStruct((n, 2, co), jnp.float32)),
        grid=(n,),
        in_specs=[_img_spec(x_img.shape),
                  pl.BlockSpec(w9.shape, lambda i: (0, 0))],
        out_specs=(pl.BlockSpec((1, ho, wo, co), lambda i: (i, 0, 0, 0)),
                   pl.BlockSpec((1, 2, co), lambda i: (i, 0, 0))),
        compiler_params=_mosaic(("parallel",), blk),
        cost_estimate=pl.CostEstimate(flops=flops, transcendentals=0,
                                      bytes_accessed=bytes_acc),
    )(x_img, w9)


def conv2_residual(c_pad, w9, res, *, ho, wo, out_dtype=jnp.bfloat16):
    n = c_pad.shape[0]
    ci, co = w9.shape[0] // 9, w9.shape[1]
    kernel = functools.partial(_conv2_res_kernel, ho=ho, wo=wo, cp=ci)
    blk = (_nbytes(c_pad.shape[1:], c_pad.dtype) + _nbytes(w9.shape, w9.dtype)
           + _nbytes(res.shape[1:], res.dtype) + _nbytes((ho, wo, co), out_dtype)
           + _nbytes((ho * wo, 9 * ci), c_pad.dtype)
           + _nbytes((ho * wo, co), jnp.float32))
    flops = 2 * n * ho * wo * 9 * ci * co
    bytes_acc = (c_pad.size * c_pad.dtype.itemsize + w9.size * w9.dtype.itemsize
                 + res.size * res.dtype.itemsize
                 + n * ho * wo * co * jnp.dtype(out_dtype).itemsize)
    return pl.pallas_call(
        kernel,
        out_shape=jax.ShapeDtypeStruct((n, ho, wo, co), out_dtype),
        grid=(n,),
        in_specs=[_img_spec(c_pad.shape),
                  pl.BlockSpec(w9.shape, lambda i: (0, 0)),
                  _img_spec(res.shape)],
        out_specs=pl.BlockSpec((1, ho, wo, co), lambda i: (i, 0, 0, 0)),
        compiler_params=_mosaic(("parallel",), blk),
        cost_estimate=pl.CostEstimate(flops=flops, transcendentals=0,
                                      bytes_accessed=bytes_acc),
    )(c_pad, w9, res)


def conv2_proj_residual(c_pad, w9, sc_src, wsc, *, ho, wo, off,
                        out_dtype=jnp.bfloat16):
    n = c_pad.shape[0]
    ci, co = w9.shape[0] // 9, w9.shape[1]
    kernel = functools.partial(_conv2_proj_kernel, ho=ho, wo=wo, cp=ci, off=off)
    blk = (_nbytes(c_pad.shape[1:], c_pad.dtype) + _nbytes(w9.shape, w9.dtype)
           + _nbytes(sc_src.shape[1:], sc_src.dtype) + _nbytes(wsc.shape, wsc.dtype)
           + _nbytes((ho, wo, co), out_dtype)
           + _nbytes((ho * wo, 9 * ci), c_pad.dtype)
           + _nbytes((ho * wo, co), jnp.float32))
    flops = 2 * n * ho * wo * (9 * ci + wsc.shape[0]) * co
    bytes_acc = (c_pad.size * c_pad.dtype.itemsize + w9.size * w9.dtype.itemsize
                 + sc_src.size * sc_src.dtype.itemsize + wsc.size * wsc.dtype.itemsize
                 + n * ho * wo * co * jnp.dtype(out_dtype).itemsize)
    return pl.pallas_call(
        kernel,
        out_shape=jax.ShapeDtypeStruct((n, ho, wo, co), out_dtype),
        grid=(n,),
        in_specs=[_img_spec(c_pad.shape),
                  pl.BlockSpec(w9.shape, lambda i: (0, 0)),
                  _img_spec(sc_src.shape),
                  pl.BlockSpec(wsc.shape, lambda i: (0, 0))],
        out_specs=pl.BlockSpec((1, ho, wo, co), lambda i: (i, 0, 0, 0)),
        compiler_params=_mosaic(("parallel",), blk),
        cost_estimate=pl.CostEstimate(flops=flops, transcendentals=0,
                                      bytes_accessed=bytes_acc),
    )(c_pad, w9, sc_src, wsc)


# ---------------------------------------------------------------------------
# JAX glue: parameters, BN affine folding, full forward
# ---------------------------------------------------------------------------
def init_preact_params(key, in_planes, planes, stride):
    ks = jax.random.split(key, 6)

    def conv_init(k, shape):  # (Cout, Cin, kh, kw)
        fan_in = shape[1] * shape[2] * shape[3]
        return jax.random.normal(k, shape, jnp.float32) * (2.0 / fan_in) ** 0.5

    p = {
        'bn1_g': 1.0 + 0.1 * jax.random.normal(ks[0], (in_planes,), jnp.float32),
        'bn1_b': 0.1 * jax.random.normal(ks[1], (in_planes,), jnp.float32),
        'conv1_w': conv_init(ks[2], (planes, in_planes, 3, 3)),
        'conv1_mw': jnp.ones((planes, in_planes, 3, 3), jnp.float32),
        'bn2_g': 1.0 + 0.1 * jax.random.normal(ks[3], (planes,), jnp.float32),
        'bn2_b': 0.1 * jax.random.normal(ks[4], (planes,), jnp.float32),
        'conv2_w': conv_init(ks[5], (planes, planes, 3, 3)),
        'conv2_mw': jnp.ones((planes, planes, 3, 3), jnp.float32),
    }
    if stride != 1 or in_planes != planes:  # expansion == 1
        ksc = jax.random.fold_in(key, 7)
        p['sc_w'] = conv_init(ksc, (planes, in_planes, 1, 1))
        p['sc_mw'] = jnp.ones((planes, in_planes, 1, 1), jnp.float32)
    return p


def prepare_params(p):
    """Fuse weight*mask, lay out as a single (9*Cin_p, Cout_p) im2col weight,
    pad channels to LANE and cast matmul operands to bf16 (done once)."""
    planes, cin = p['conv1_w'].shape[0], p['conv1_w'].shape[1]
    cp, pp = _round_up(cin, LANE), _round_up(planes, LANE)

    def w3x3(w, ci_p, co_p):
        w = jnp.transpose(w, (2, 3, 1, 0))                       # (3,3,Cin,Cout)
        w = jnp.pad(w, ((0, 0), (0, 0), (0, ci_p - w.shape[2]), (0, co_p - w.shape[3])))
        # rows ordered (dy, dx, cin) to match the in-kernel window concat
        return w.reshape(9 * ci_p, co_p).astype(jnp.bfloat16)

    def pad_vec(v, c_pad):
        return jnp.pad(v, (0, c_pad - v.shape[0])).astype(jnp.float32)

    prep = {
        'w1': w3x3(p['conv1_w'] * p['conv1_mw'], cp, pp),
        'w2': w3x3(p['conv2_w'] * p['conv2_mw'], pp, pp),
        'g1': pad_vec(p['bn1_g'], cp), 'b1': pad_vec(p['bn1_b'], cp),
        'g2': pad_vec(p['bn2_g'], pp), 'b2': pad_vec(p['bn2_b'], pp),
    }
    if 'sc_w' in p:
        wsc = (p['sc_w'] * p['sc_mw'])[:, :, 0, 0].T             # (Cin, Cout)
        wsc = jnp.pad(wsc, ((0, cp - cin), (0, pp - planes)))
        prep['wsc'] = wsc.astype(jnp.bfloat16)
    return prep


def _bn_affine(st, m, gamma, beta):
    """Fold training-mode BN (biased variance) into per-channel scale/shift."""
    mean = st[0] / m
    var = st[1] / m - mean * mean
    scale = gamma * jax.lax.rsqrt(var + EPS)
    shift = beta - mean * scale
    return scale.reshape(1, -1), shift.reshape(1, -1)


def preact_block_forward(x_nchw, prep, *, in_planes, planes, stride):
    n, cin, h, w = x_nchw.shape
    assert cin == in_planes
    cp = prep['w1'].shape[0] // 9
    pp = prep['w1'].shape[1]
    s = stride
    ho = (h + 2 - 3) // s + 1
    wo = (w + 2 - 3) // s + 1

    # NCHW -> NHWC, channel-pad to lane width, bf16 (kernel operand dtype).
    x_nhwc = jnp.transpose(x_nchw, (0, 2, 3, 1))
    x_nhwc = jnp.pad(x_nhwc, ((0, 0), (0, 0), (0, 0), (0, cp - cin))).astype(jnp.bfloat16)
    x_rows = x_nhwc.reshape(n * h * w, cp)

    # ---- BN1 (global training-mode stats) + ReLU, fused with conv1 halo pad -
    st1 = channel_stats(x_rows)
    scale1, shift1 = _bn_affine(st1, n * h * w, prep['g1'], prep['b1'])
    a_pad = bn_relu_pad(x_nhwc, scale1, shift1)          # (N, H+2, W+2, Cp) bf16

    if s == 1:
        a_in = a_pad
        sc_src, sc_off = a_pad, 1
    else:
        # TODO(synk): parity de-interleave still costs one XLA HBM pass; an
        # in-kernel sublane-strided window read would remove it.
        hp, wp = h + 2, w + 2
        hp2, wp2 = hp + (hp & 1), wp + (wp & 1)
        a_pad2 = jnp.pad(a_pad, ((0, 0), (0, hp2 - hp), (0, wp2 - wp), (0, 0)))
        a_in = a_pad2.reshape(n, hp2 // 2, 2, wp2 // 2, 2, cp).transpose(0, 2, 4, 1, 3, 5)
        sc_src, sc_off = a_in[:, 1, 1], 0     # a[n, 2i, 2j, :] == a_in[n,1,1,i,j,:]

    # ---- conv1 (3x3 masked, stride s) with fused per-image BN2 statistics ---
    b, st2 = conv1_stats(a_in, prep['w1'], stride=s, ho=ho, wo=wo)

    # ---- BN2 + ReLU, fused with conv2 halo pad -------------------------------
    scale2, shift2 = _bn_affine(st2.sum(axis=0), n * ho * wo, prep['g2'], prep['b2'])
    c_pad = bn_relu_pad(b, scale2, shift2)               # (N, Ho+2, Wo+2, Pp) bf16

    # ---- conv2 (3x3 masked) + shortcut, fused, bf16 output -------------------
    if 'wsc' in prep:
        out = conv2_proj_residual(c_pad, prep['w2'], sc_src, prep['wsc'],
                                  ho=ho, wo=wo, off=sc_off)
    else:
        res = x_nhwc.reshape(n, h * w, cp)               # identity shortcut = x
        out = conv2_residual(c_pad, prep['w2'], res, ho=ho, wo=wo)

    out = out[:, :, :, :planes]
    return jnp.transpose(out, (0, 3, 1, 2)).astype(jnp.float32)   # back to NCHW


# ---------------------------------------------------------------------------
# Pure-JAX reference (f32 lax.conv + explicit training-mode BN) for validation
# ---------------------------------------------------------------------------
def _reference_forward(x, p, stride):
    def conv(z, w, s=1, pad=0):
        return jax.lax.conv_general_dilated(
            z, w, (s, s), [(pad, pad), (pad, pad)],
            dimension_numbers=('NCHW', 'OIHW', 'NCHW'))

    def bn(y, g, b):
        mean = y.mean(axis=(0, 2, 3), keepdims=True)
        var = jnp.square(y - mean).mean(axis=(0, 2, 3), keepdims=True)
        return ((y - mean) * jax.lax.rsqrt(var + EPS)
                * g[None, :, None, None] + b[None, :, None, None])

    a = jax.nn.relu(bn(x, p['bn1_g'], p['bn1_b']))
    if 'sc_w' in p:
        shortcut = conv(a, p['sc_w'] * p['sc_mw'], stride, 0)
    else:
        shortcut = x
    out = conv(a, p['conv1_w'] * p['conv1_mw'], stride, 1)
    out = conv(jax.nn.relu(bn(out, p['bn2_g'], p['bn2_b'])),
               p['conv2_w'] * p['conv2_mw'], 1, 1)
    return out + shortcut


if __name__ == "__main__":
    key = jax.random.PRNGKey(0)
    configs = [
        (4, 4, 2),   # stride 2 -> projection (MaskedConv2d 1x1) shortcut path
        (4, 4, 1),   # stride 1, in==planes -> identity shortcut path
    ]
    for in_planes, planes, stride in configs:
        kx, kp = jax.random.split(jax.random.fold_in(key, stride))
        x = jax.random.normal(kx, (2, in_planes, 16, 16), jnp.float32)   # NCHW
        params = init_preact_params(kp, in_planes, planes, stride)
        prep = prepare_params(params)

        fwd = jax.jit(functools.partial(preact_block_forward, in_planes=in_planes,
                                        planes=planes, stride=stride))
        out = jax.block_until_ready(fwd(x, prep))

        ref = _reference_forward(x, params, stride)
        assert out.shape == ref.shape, (out.shape, ref.shape)
        err = float(jnp.max(jnp.abs(out - ref)))
        # bf16 matmul operands / bf16 inter-kernel activations (f32 accumulation
        # and BN math) => relaxed tolerance vs. the all-f32 reference.
        assert jnp.allclose(out, ref, atol=5e-2, rtol=5e-2), err
    print("KERNEL_OK")
</pallas_src>

<mosaic_0001>
module attributes {stable_mosaic.version = 11 : i64} {
  func.func @_stats_kernel(%arg0: i32, %arg1: memref<512x128xbf16, #tpu.memory_space<vmem>>, %arg2: memref<2x128xf32, #tpu.memory_space<vmem>>) attributes {dimension_semantics = [#tpu.dimension_semantics<arbitrary>], iteration_bounds = array<i64: 1>, scalar_prefetch = 0 : i64, scratch_operands = 0 : i64, tpu.core_type = #tpu.core_type<tc>, window_params = [{transform_indices = @transform_0, window_bounds = array<i64: 512, 128>}, {pipeline_mode = #tpu.pipeline_mode<synchronous>, transform_indices = @transform_1, window_bounds = array<i64: 2, 128>}]} {
    %c0_i32 = arith.constant 0 : i32
    %0 = arith.cmpi eq, %arg0, %c0_i32 : i32
    %1 = arith.extui %0 : i1 to i32
    %c0_i32_0 = arith.constant 0 : i32
    %2 = arith.cmpi ne, %1, %c0_i32_0 : i32
    scf.if %2 {
      %cst_9 = arith.constant 0.000000e+00 : f32
      %24 = vector.broadcast %cst_9 : f32 to vector<2x128xf32>
      %c0_10 = arith.constant 0 : index
      %c0_11 = arith.constant 0 : index
      %25 = vector.load %arg2[%c0_10, %c0_11] : memref<2x128xf32, #tpu.memory_space<vmem>>, vector<2x128xf32>
      tpu.vector_store %arg2[%c0_10, %c0_11], %24 {strides = array<i32>} : memref<2x128xf32, #tpu.memory_space<vmem>>, vector<2x128xf32>,
    } else {
    }
    %c0 = arith.constant 0 : index
    %c0_1 = arith.constant 0 : index
    %3 = vector.load %arg1[%c0, %c0_1] : memref<512x128xbf16, #tpu.memory_space<vmem>>, vector<512x128xbf16>
    %4 = arith.extf %3 : vector<512x128xbf16> to vector<512x128xf32>
    %c512_i32 = arith.constant 512 : i32
    %5 = arith.muli %arg0, %c512_i32 : i32
    %6 = tpu.iota {dimensions = array<i32: 0>} : vector<512x1xi32>
    %7 = vector.broadcast %5 : i32 to vector<512x1xi32>
    %8 = arith.addi %7, %6 : vector<512x1xi32>
    %c512_i32_2 = arith.constant 512 : i32
    %9 = vector.broadcast %c512_i32_2 : i32 to vector<512x1xi32>
    %10 = arith.cmpi slt, %8, %9 : vector<512x1xi32>
    %cst = arith.constant 0.000000e+00 : f32
    %11 = vector.shape_cast %10 : vector<512x1xi1> to vector<512x1xi1>
    %12 = vector.broadcast %11 : vector<512x1xi1> to vector<512x128xi1>
    %13 = vector.broadcast %cst : f32 to vector<512x128xf32>
    %14 = arith.select %12, %4, %13 : vector<512x128xi1>, vector<512x128xf32>
    %c0_3 = arith.constant 0 : index
    %c0_4 = arith.constant 0 : index
    %15 = vector.load %arg2[%c0_3, %c0_4] : memref<2x128xf32, #tpu.memory_space<vmem>>, vector<2x128xf32>
    %cst_5 = arith.constant dense<0.000000e+00> : vector<128xf32>
    %16 = vector.multi_reduction <add>, %14, %cst_5 [0] : vector<512x128xf32> to vector<128xf32>
    %17 = vector.shape_cast %16 : vector<128xf32> to vector<1x128xf32>
    %18 = arith.mulf %14, %14 : vector<512x128xf32>
    %cst_6 = arith.constant dense<0.000000e+00> : vector<128xf32>
    %19 = vector.multi_reduction <add>, %18, %cst_6 [0] : vector<512x128xf32> to vector<128xf32>
    %20 = vector.shape_cast %19 : vector<128xf32> to vector<1x128xf32>
    %21 = tpu.concatenate %17, %20 in 0 : vector<1x128xf32>, vector<1x128xf32> -> vector<2x128xf32>
    %22 = arith.addf %15, %21 : vector<2x128xf32>
    %c0_7 = arith.constant 0 : index
    %c0_8 = arith.constant 0 : index
    %23 = vector.load %arg2[%c0_7, %c0_8] : memref<2x128xf32, #tpu.memory_space<vmem>>, vector<2x128xf32>
    tpu.vector_store %arg2[%c0_7, %c0_8], %22 {strides = array<i32>} : memref<2x128xf32, #tpu.memory_space<vmem>>, vector<2x128xf32>,
    return
  }
  func.func @transform_0(%arg0: i32) -> (i32, i32) {
    %c0_i32 = arith.constant 0 : i32
    %c0_i32_0 = arith.constant 0 : i32
    return %arg0, %c0_i32 : i32, i32
  }
  func.func @transform_1(%arg0: i32) -> (i32, i32) {
    %c0_i32 = arith.constant 0 : i32
    %c0_i32_0 = arith.constant 0 : i32
    %c0_i32_1 = arith.constant 0 : i32
    return %c0_i32, %c0_i32_0 : i32, i32
  }
}

module attributes {stable_mosaic.version = 11 : i64} {
  func.func @_bn_relu_pad_kernel(%arg0: i32, %arg1: memref<1x16x16x128xbf16, #tpu.memory_space<vmem>>, %arg2: memref<1x128xf32, #tpu.memory_space<vmem>>, %arg3: memref<1x128xf32, #tpu.memory_space<vmem>>, %arg4: memref<1x18x18x128xbf16, #tpu.memory_space<vmem>>) attributes {dimension_semantics = [#tpu.dimension_semantics<parallel>], iteration_bounds = array<i64: 2>, scalar_prefetch = 0 : i64, scratch_operands = 0 : i64, tpu.core_type = #tpu.core_type<tc>, window_params = [{transform_indices = @transform_0, window_bounds = array<i64: 1, 16, 16, 128>}, {pipeline_mode = #tpu.pipeline_mode<synchronous>, transform_indices = @transform_1, window_bounds = array<i64: 1, 128>}, {pipeline_mode = #tpu.pipeline_mode<synchronous>, transform_indices = @transform_2, window_bounds = array<i64: 1, 128>}, {transform_indices = @transform_3, window_bounds = array<i64: 1, 18, 18, 128>}]} {
    %c0 = arith.constant 0 : index
    %c0_0 = arith.constant 0 : index
    %c0_1 = arith.constant 0 : index
    %c0_2 = arith.constant 0 : index
    %0 = vector.load %arg1[%c0, %c0_0, %c0_1, %c0_2] : memref<1x16x16x128xbf16, #tpu.memory_space<vmem>>, vector<1x16x16x128xbf16>
    %1 = vector.shape_cast %0 : vector<1x16x16x128xbf16> to vector<16x16x128xbf16>
    %2 = arith.extf %1 : vector<16x16x128xbf16> to vector<16x16x128xf32>
    %c0_3 = arith.constant 0 : index
    %c0_4 = arith.constant 0 : index
    %3 = vector.load %arg2[%c0_3, %c0_4] : memref<1x128xf32, #tpu.memory_space<vmem>>, vector<1x128xf32>
    %4 = vector.shape_cast %3 : vector<1x128xf32> to vector<1x1x128xf32>
    %5 = vector.broadcast %4 : vector<1x1x128xf32> to vector<16x16x128xf32>
    %6 = arith.mulf %2, %5 : vector<16x16x128xf32>
    %c0_5 = arith.constant 0 : index
    %c0_6 = arith.constant 0 : index
    %7 = vector.load %arg3[%c0_5, %c0_6] : memref<1x128xf32, #tpu.memory_space<vmem>>, vector<1x128xf32>
    %8 = vector.shape_cast %7 : vector<1x128xf32> to vector<1x1x128xf32>
    %9 = vector.broadcast %8 : vector<1x1x128xf32> to vector<16x16x128xf32>
    %10 = arith.addf %6, %9 : vector<16x16x128xf32>
    %cst = arith.constant 0.000000e+00 : f32
    %11 = vector.broadcast %cst : f32 to vector<16x16x128xf32>
    %12 = arith.maximumf %10, %11 : vector<16x16x128xf32>
    %13 = arith.truncf %12 : vector<16x16x128xf32> to vector<16x16x128xbf16>
    %cst_7 = arith.constant 0.000000e+00 : bf16
    %14 = vector.broadcast %cst_7 : bf16 to vector<1x18x18x128xbf16>
    %c0_8 = arith.constant 0 : index
    %c0_9 = arith.constant 0 : index
    %c0_10 = arith.constant 0 : index
    %c0_11 = arith.constant 0 : index
    %15 = vector.load %arg4[%c0_8, %c0_9, %c0_10, %c0_11] : memref<1x18x18x128xbf16, #tpu.memory_space<vmem>>, vector<1x18x18x128xbf16>
    tpu.vector_store %arg4[%c0_8, %c0_9, %c0_10, %c0_11], %14 {strides = array<i32>} : memref<1x18x18x128xbf16, #tpu.memory_space<vmem>>, vector<1x18x18x128xbf16>,
    %c0_12 = arith.constant 0 : index
    %c1 = arith.constant 1 : index
    %c1_13 = arith.constant 1 : index
    %c0_14 = arith.constant 0 : index
    %16 = vector.load %arg4[%c0_12, %c1, %c1_13, %c0_14] : memref<1x18x18x128xbf16, #tpu.memory_space<vmem>>, vector<1x16x16x128xbf16>
    %17 = vector.shape_cast %16 : vector<1x16x16x128xbf16> to vector<16x16x128xbf16>
    %18 = vector.shape_cast %13 : vector<16x16x128xbf16> to vector<1x16x16x128xbf16>
    tpu.vector_store %arg4[%c0_12, %c1, %c1_13, %c0_14], %18 {strides = array<i32>} : memref<1x18x18x128xbf16, #tpu.memory_space<vmem>>, vector<1x16x16x128xbf16>,
    return
  }
  func.func @transform_0(%arg0: i32) -> (i32, i32, i32, i32) {
    %c0_i32 = arith.constant 0 : i32
    %c0_i32_0 = arith.constant 0 : i32
    %c0_i32_1 = arith.constant 0 : i32
    %c0_i32_2 = arith.constant 0 : i32
    return %arg0, %c0_i32, %c0_i32_0, %c0_i32_1 : i32, i32, i32, i32
  }
  func.func @transform_1(%arg0: i32) -> (i32, i32) {
    %c0_i32 = arith.constant 0 : i32
    %c0_i32_0 = arith.constant 0 : i32
    %c0_i32_1 = arith.constant 0 : i32
    return %c0_i32, %c0_i32_0 : i32, i32
  }
  func.func @transform_2(%arg0: i32) -> (i32, i32) {
    %c0_i32 = arith.constant 0 : i32
    %c0_i32_0 = arith.constant 0 : i32
    %c0_i32_1 = arith.constant 0 : i32
    return %c0_i32, %c0_i32_0 : i32, i32
  }
  func.func @transform_3(%arg0: i32) -> (i32, i32, i32, i32) {
    %c0_i32 = arith.constant 0 : i32
    %c0_i32_0 = arith.constant 0 : i32
    %c0_i32_1 = arith.constant 0 : i32
    %c0_i32_2 = arith.constant 0 : i32
    return %arg0, %c0_i32, %c0_i32_0, %c0_i32_1 : i32, i32, i32, i32
  }
}

module attributes {stable_mosaic.version = 11 : i64} {
  func.func @_conv1_kernel(%arg0: i32, %arg1: memref<1x2x2x9x9x128xbf16, #tpu.memory_space<vmem>>, %arg2: memref<1152x128xbf16, #tpu.memory_space<vmem>>, %arg3: memref<1x8x8x128xbf16, #tpu.memory_space<vmem>>, %arg4: memref<1x2x128xf32, #tpu.memory_space<vmem>>) attributes {dimension_semantics = [#tpu.dimension_semantics<parallel>], iteration_bounds = array<i64: 2>, scalar_prefetch = 0 : i64, scratch_operands = 0 : i64, tpu.core_type = #tpu.core_type<tc>, window_params = [{transform_indices = @transform_0, window_bounds = array<i64: 1, 2, 2, 9, 9, 128>}, {pipeline_mode = #tpu.pipeline_mode<synchronous>, transform_indices = @transform_1, window_bounds = array<i64: 1152, 128>}, {transform_indices = @transform_2, window_bounds = array<i64: 1, 8, 8, 128>}, {transform_indices = @transform_3, window_bounds = array<i64: 1, 2, 128>}]} {
    %c0 = arith.constant 0 : index
    %c0_0 = arith.constant 0 : index
    %c0_1 = arith.constant 0 : index
    %c0_2 = arith.constant 0 : index
    %c0_3 = arith.constant 0 : index
    %c0_4 = arith.constant 0 : index
    %0 = vector.load %arg1[%c0, %c0_0, %c0_1, %c0_2, %c0_3, %c0_4] : memref<1x2x2x9x9x128xbf16, #tpu.memory_space<vmem>>, vector<1x1x1x8x8x128xbf16>
    %1 = vector.shape_cast %0 : vector<1x1x1x8x8x128xbf16> to vector<8x8x128xbf16>
    %2 = vector.shape_cast %1 : vector<8x8x128xbf16> to vector<64x128xbf16>
    %c0_5 = arith.constant 0 : index
    %c0_6 = arith.constant 0 : index
    %c1 = arith.constant 1 : index
    %c0_7 = arith.constant 0 : index
    %c0_8 = arith.constant 0 : index
    %c0_9 = arith.constant 0 : index
    %3 = vector.load %arg1[%c0_5, %c0_6, %c1, %c0_7, %c0_8, %c0_9] : memref<1x2x2x9x9x128xbf16, #tpu.memory_space<vmem>>, vector<1x1x1x8x8x128xbf16>
    %4 = vector.shape_cast %3 : vector<1x1x1x8x8x128xbf16> to vector<8x8x128xbf16>
    %5 = vector.shape_cast %4 : vector<8x8x128xbf16> to vector<64x128xbf16>
    %c0_10 = arith.constant 0 : index
    %c0_11 = arith.constant 0 : index
    %c0_12 = arith.constant 0 : index
    %c0_13 = arith.constant 0 : index
    %c1_14 = arith.constant 1 : index
    %c0_15 = arith.constant 0 : index
    %6 = vector.load %arg1[%c0_10, %c0_11, %c0_12, %c0_13, %c1_14, %c0_15] : memref<1x2x2x9x9x128xbf16, #tpu.memory_space<vmem>>, vector<1x1x1x8x8x128xbf16>
    %7 = vector.shape_cast %6 : vector<1x1x1x8x8x128xbf16> to vector<8x8x128xbf16>
    %8 = vector.shape_cast %7 : vector<8x8x128xbf16> to vector<64x128xbf16>
    %c0_16 = arith.constant 0 : index
    %c1_17 = arith.constant 1 : index
    %c0_18 = arith.constant 0 : index
    %c0_19 = arith.constant 0 : index
    %c0_20 = arith.constant 0 : index
    %c0_21 = arith.constant 0 : index
    %9 = vector.load %arg1[%c0_16, %c1_17, %c0_18, %c0_19, %c0_20, %c0_21] : memref<1x2x2x9x9x128xbf16, #tpu.memory_space<vmem>>, vector<1x1x1x8x8x128xbf16>
    %10 = vector.shape_cast %9 : vector<1x1x1x8x8x128xbf16> to vector<8x8x128xbf16>
    %11 = vector.shape_cast %10 : vector<8x8x128xbf16> to vector<64x128xbf16>
    %c0_22 = arith.constant 0 : index
    %c1_23 = arith.constant 1 : index
    %c1_24 = arith.constant 1 : index
    %c0_25 = arith.constant 0 : index
    %c0_26 = arith.constant 0 : index
    %c0_27 = arith.constant 0 : index
    %12 = vector.load %arg1[%c0_22, %c1_23, %c1_24, %c0_25, %c0_26, %c0_27] : memref<1x2x2x9x9x128xbf16, #tpu.memory_space<vmem>>, vector<1x1x1x8x8x128xbf16>
    %13 = vector.shape_cast %12 : vector<1x1x1x8x8x128xbf16> to vector<8x8x128xbf16>
    %14 = vector.shape_cast %13 : vector<8x8x128xbf16> to vector<64x128xbf16>
    %c0_28 = arith.constant 0 : index
    %c1_29 = arith.constant 1 : index
    %c0_30 = arith.constant 0 : index
    %c0_31 = arith.constant 0 : index
    %c1_32 = arith.constant 1 : index
    %c0_33 = arith.constant 0 : index
    %15 = vector.load %arg1[%c0_28, %c1_29, %c0_30, %c0_31, %c1_32, %c0_33] : memref<1x2x2x9x9x128xbf16, #tpu.memory_space<vmem>>, vector<1x1x1x8x8x128xbf16>
    %16 = vector.shape_cast %15 : vector<1x1x1x8x8x128xbf16> to vector<8x8x128xbf16>
    %17 = vector.shape_cast %16 : vector<8x8x128xbf16> to vector<64x128xbf16>
    %c0_34 = arith.constant 0 : index
    %c0_35 = arith.constant 0 : index
    %c0_36 = arith.constant 0 : index
    %c1_37 = arith.constant 1 : index
    %c0_38 = arith.constant 0 : index
    %c0_39 = arith.constant 0 : index
    %18 = vector.load %arg1[%c0_34, %c0_35, %c0_36, %c1_37, %c0_38, %c0_39] : memref<1x2x2x9x9x128xbf16, #tpu.memory_space<vmem>>, vector<1x1x1x8x8x128xbf16>
    %19 = vector.shape_cast %18 : vector<1x1x1x8x8x128xbf16> to vector<8x8x128xbf16>
    %20 = vector.shape_cast %19 : vector<8x8x128xbf16> to vector<64x128xbf16>
    %c0_40 = arith.constant 0 : index
    %c0_41 = arith.constant 0 : index
    %c1_42 = arith.constant 1 : index
    %c1_43 = arith.constant 1 : index
    %c0_44 = arith.constant 0 : index
    %c0_45 = arith.constant 0 : index
    %21 = vector.load %arg1[%c0_40, %c0_41, %c1_42, %c1_43, %c0_44, %c0_45] : memref<1x2x2x9x9x128xbf16, #tpu.memory_space<vmem>>, vector<1x1x1x8x8x128xbf16>
    %22 = vector.shape_cast %21 : vector<1x1x1x8x8x128xbf16> to vector<8x8x128xbf16>
    %23 = vector.shape_cast %22 : vector<8x8x128xbf16> to vector<64x128xbf16>
    %c0_46 = arith.constant 0 : index
    %c0_47 = arith.constant 0 : index
    %c0_48 = arith.constant 0 : index
    %c1_49 = arith.constant 1 : index
    %c1_50 = arith.constant 1 : index
    %c0_51 = arith.constant 0 : index
    %24 = vector.load %arg1[%c0_46, %c0_47, %c0_48, %c1_49, %c1_50, %c0_51] : memref<1x2x2x9x9x128xbf16, #tpu.memory_space<vmem>>, vector<1x1x1x8x8x128xbf16>
    %25 = vector.shape_cast %24 : vector<1x1x1x8x8x128xbf16> to vector<8x8x128xbf16>
    %26 = vector.shape_cast %25 : vector<8x8x128xbf16> to vector<64x128xbf16>
    %27 = tpu.concatenate %2, %5, %8, %11, %14, %17, %20, %23, %26 in 1 : vector<64x128xbf16>, vector<64x128xbf16>, vector<64x128xbf16>, vector<64x128xbf16>, vector<64x128xbf16>, vector<64x128xbf16>, vector<64x128xbf16>, vector<64x128xbf16>, vector<64x128xbf16> -> vector<64x1152xbf16>
    %c0_52 = arith.constant 0 : index
    %c0_53 = arith.constant 0 : index
    %28 = vector.load %arg2[%c0_52, %c0_53] : memref<1152x128xbf16, #tpu.memory_space<vmem>>, vector<1152x128xbf16>
    %cst = arith.constant dense<0.000000e+00> : vector<64x128xf32>
    %29 = tpu.matmul %27, %28, %cst {dimension_numbers = #tpu.dot_dimension_numbers<[1], [0], [0], [1], [0, 0, 1, 1], [], []>} : vector<64x1152xbf16>, vector<1152x128xbf16>, vector<64x128xf32> -> vector<64x128xf32>
    %30 = arith.truncf %29 : vector<64x128xf32> to vector<64x128xbf16>
    %31 = vector.shape_cast %30 : vector<64x128xbf16> to vector<8x8x128xbf16>
    %c0_54 = arith.constant 0 : index
    %c0_55 = arith.constant 0 : index
    %c0_56 = arith.constant 0 : index
    %c0_57 = arith.constant 0 : index
    %32 = vector.load %arg3[%c0_54, %c0_55, %c0_56, %c0_57] : memref<1x8x8x128xbf16, #tpu.memory_space<vmem>>, vector<1x8x8x128xbf16>
    %33 = vector.shape_cast %32 : vector<1x8x8x128xbf16> to vector<8x8x128xbf16>
    %34 = vector.shape_cast %31 : vector<8x8x128xbf16> to vector<1x8x8x128xbf16>
    tpu.vector_store %arg3[%c0_54, %c0_55, %c0_56, %c0_57], %34 {strides = array<i32>} : memref<1x8x8x128xbf16, #tpu.memory_space<vmem>>, vector<1x8x8x128xbf16>,
    %35 = arith.extf %30 : vector<64x128xbf16> to vector<64x128xf32>
    %cst_58 = arith.constant dense<0.000000e+00> : vector<128xf32>
    %36 = vector.multi_reduction <add>, %35, %cst_58 [0] : vector<64x128xf32> to vector<128xf32>
    %37 = vector.shape_cast %36 : vector<128xf32> to vector<1x128xf32>
    %38 = arith.mulf %35, %35 : vector<64x128xf32>
    %cst_59 = arith.constant dense<0.000000e+00> : vector<128xf32>
    %39 = vector.multi_reduction <add>, %38, %cst_59 [0] : vector<64x128xf32> to vector<128xf32>
    %40 = vector.shape_cast %39 : vector<128xf32> to vector<1x128xf32>
    %41 = tpu.concatenate %37, %40 in 0 : vector<1x128xf32>, vector<1x128xf32> -> vector<2x128xf32>
    %c0_60 = arith.constant 0 : index
    %c0_61 = arith.constant 0 : index
    %c0_62 = arith.constant 0 : index
    %42 = vector.load %arg4[%c0_60, %c0_61, %c0_62] : memref<1x2x128xf32, #tpu.memory_space<vmem>>, vector<1x2x128xf32>
    %43 = vector.shape_cast %42 : vector<1x2x128xf32> to vector<2x128xf32>
    %44 = vector.shape_cast %41 : vector<2x128xf32> to vector<1x2x128xf32>
    tpu.vector_store %arg4[%c0_60, %c0_61, %c0_62], %44 {strides = array<i32>} : memref<1x2x128xf32, #tpu.memory_space<vmem>>, vector<1x2x128xf32>,
    return
  }
  func.func @transform_0(%arg0: i32) -> (i32, i32, i32, i32, i32, i32) {
    %c0_i32 = arith.constant 0 : i32
    %c0_i32_0 = arith.constant 0 : i32
    %c0_i32_1 = arith.constant 0 : i32
    %c0_i32_2 = arith.constant 0 : i32
    %c0_i32_3 = arith.constant 0 : i32
    %c0_i32_4 = arith.constant 0 : i32
    return %arg0, %c0_i32, %c0_i32_0, %c0_i32_1, %c0_i32_2, %c0_i32_3 : i32, i32, i32, i32, i32, i32
  }
  func.func @transform_1(%arg0: i32) -> (i32, i32) {
    %c0_i32 = arith.constant 0 : i32
    %c0_i32_0 = arith.constant 0 : i32
    %c0_i32_1 = arith.constant 0 : i32
    return %c0_i32, %c0_i32_0 : i32, i32
  }
  func.func @transform_2(%arg0: i32) -> (i32, i32, i32, i32) {
    %c0_i32 = arith.constant 0 : i32
    %c0_i32_0 = arith.constant 0 : i32
    %c0_i32_1 = arith.constant 0 : i32
    %c0_i32_2 = arith.constant 0 : i32
    return %arg0, %c0_i32, %c0_i32_0, %c0_i32_1 : i32, i32, i32, i32
  }
  func.func @transform_3(%arg0: i32) -> (i32, i32, i32) {
    %c0_i32 = arith.constant 0 : i32
    %c0_i32_0 = arith.constant 0 : i32
    %c0_i32_1 = arith.constant 0 : i32
    return %arg0, %c0_i32, %c0_i32_0 : i32, i32, i32
  }
}

module attributes {stable_mosaic.version = 11 : i64} {
  func.func @_bn_relu_pad_kernel(%arg0: i32, %arg1: memref<1x8x8x128xbf16, #tpu.memory_space<vmem>>, %arg2: memref<1x128xf32, #tpu.memory_space<vmem>>, %arg3: memref<1x128xf32, #tpu.memory_space<vmem>>, %arg4: memref<1x10x10x128xbf16, #tpu.memory_space<vmem>>) attributes {dimension_semantics = [#tpu.dimension_semantics<parallel>], iteration_bounds = array<i64: 2>, scalar_prefetch = 0 : i64, scratch_operands = 0 : i64, tpu.core_type = #tpu.core_type<tc>, window_params = [{transform_indices = @transform_0, window_bounds = array<i64: 1, 8, 8, 128>}, {pipeline_mode = #tpu.pipeline_mode<synchronous>, transform_indices = @transform_1, window_bounds = array<i64: 1, 128>}, {pipeline_mode = #tpu.pipeline_mode<synchronous>, transform_indices = @transform_2, window_bounds = array<i64: 1, 128>}, {transform_indices = @transform_3, window_bounds = array<i64: 1, 10, 10, 128>}]} {
    %c0 = arith.constant 0 : index
    %c0_0 = arith.constant 0 : index
    %c0_1 = arith.constant 0 : index
    %c0_2 = arith.constant 0 : index
    %0 = vector.load %arg1[%c0, %c0_0, %c0_1, %c0_2] : memref<1x8x8x128xbf16, #tpu.memory_space<vmem>>, vector<1x8x8x128xbf16>
    %1 = vector.shape_cast %0 : vector<1x8x8x128xbf16> to vector<8x8x128xbf16>
    %2 = arith.extf %1 : vector<8x8x128xbf16> to vector<8x8x128xf32>
    %c0_3 = arith.constant 0 : index
    %c0_4 = arith.constant 0 : index
    %3 = vector.load %arg2[%c0_3, %c0_4] : memref<1x128xf32, #tpu.memory_space<vmem>>, vector<1x128xf32>
    %4 = vector.shape_cast %3 : vector<1x128xf32> to vector<1x1x128xf32>
    %5 = vector.broadcast %4 : vector<1x1x128xf32> to vector<8x8x128xf32>
    %6 = arith.mulf %2, %5 : vector<8x8x128xf32>
    %c0_5 = arith.constant 0 : index
    %c0_6 = arith.constant 0 : index
    %7 = vector.load %arg3[%c0_5, %c0_6] : memref<1x128xf32, #tpu.memory_space<vmem>>, vector<1x128xf32>
    %8 = vector.shape_cast %7 : vector<1x128xf32> to vector<1x1x128xf32>
    %9 = vector.broadcast %8 : vector<1x1x128xf32> to vector<8x8x128xf32>
    %10 = arith.addf %6, %9 : vector<8x8x128xf32>
    %cst = arith.constant 0.000000e+00 : f32
    %11 = vector.broadcast %cst : f32 to vector<8x8x128xf32>
    %12 = arith.maximumf %10, %11 : vector<8x8x128xf32>
    %13 = arith.truncf %12 : vector<8x8x128xf32> to vector<8x8x128xbf16>
    %cst_7 = arith.constant 0.000000e+00 : bf16
    %14 = vector.broadcast %cst_7 : bf16 to vector<1x10x10x128xbf16>
    %c0_8 = arith.constant 0 : index
    %c0_9 = arith.constant 0 : index
    %c0_10 = arith.constant 0 : index
    %c0_11 = arith.constant 0 : index
    %15 = vector.load %arg4[%c0_8, %c0_9, %c0_10, %c0_11] : memref<1x10x10x128xbf16, #tpu.memory_space<vmem>>, vector<1x10x10x128xbf16>
    tpu.vector_store %arg4[%c0_8, %c0_9, %c0_10, %c0_11], %14 {strides = array<i32>} : memref<1x10x10x128xbf16, #tpu.memory_space<vmem>>, vector<1x10x10x128xbf16>,
    %c0_12 = arith.constant 0 : index
    %c1 = arith.constant 1 : index
    %c1_13 = arith.constant 1 : index
    %c0_14 = arith.constant 0 : index
    %16 = vector.load %arg4[%c0_12, %c1, %c1_13, %c0_14] : memref<1x10x10x128xbf16, #tpu.memory_space<vmem>>, vector<1x8x8x128xbf16>
    %17 = vector.shape_cast %16 : vector<1x8x8x128xbf16> to vector<8x8x128xbf16>
    %18 = vector.shape_cast %13 : vector<8x8x128xbf16> to vector<1x8x8x128xbf16>
    tpu.vector_store %arg4[%c0_12, %c1, %c1_13, %c0_14], %18 {strides = array<i32>} : memref<1x10x10x128xbf16, #tpu.memory_space<vmem>>, vector<1x8x8x128xbf16>,
    return
  }
  func.func @transform_0(%arg0: i32) -> (i32, i32, i32, i32) {
    %c0_i32 = arith.constant 0 : i32
    %c0_i32_0 = arith.constant 0 : i32
    %c0_i32_1 = arith.constant 0 : i32
    %c0_i32_2 = arith.constant 0 : i32
    return %arg0, %c0_i32, %c0_i32_0, %c0_i32_1 : i32, i32, i32, i32
  }
  func.func @transform_1(%arg0: i32) -> (i32, i32) {
    %c0_i32 = arith.constant 0 : i32
    %c0_i32_0 = arith.constant 0 : i32
    %c0_i32_1 = arith.constant 0 : i32
    return %c0_i32, %c0_i32_0 : i32, i32
  }
  func.func @transform_2(%arg0: i32) -> (i32, i32) {
    %c0_i32 = arith.constant 0 : i32
    %c0_i32_0 = arith.constant 0 : i32
    %c0_i32_1 = arith.constant 0 : i32
    return %c0_i32, %c0_i32_0 : i32, i32
  }
  func.func @transform_3(%arg0: i32) -> (i32, i32, i32, i32) {
    %c0_i32 = arith.constant 0 : i32
    %c0_i32_0 = arith.constant 0 : i32
    %c0_i32_1 = arith.constant 0 : i32
    %c0_i32_2 = arith.constant 0 : i32
    return %arg0, %c0_i32, %c0_i32_0, %c0_i32_1 : i32, i32, i32, i32
  }
}

module attributes {stable_mosaic.version = 11 : i64} {
  func.func @_conv2_proj_kernel(%arg0: i32, %arg1: memref<1x10x10x128xbf16, #tpu.memory_space<vmem>>, %arg2: memref<1152x128xbf16, #tpu.memory_space<vmem>>, %arg3: memref<1x9x9x128xbf16, #tpu.memory_space<vmem>>, %arg4: memref<128x128xbf16, #tpu.memory_space<vmem>>, %arg5: memref<1x8x8x128xbf16, #tpu.memory_space<vmem>>) attributes {dimension_semantics = [#tpu.dimension_semantics<parallel>], iteration_bounds = array<i64: 2>, scalar_prefetch = 0 : i64, scratch_operands = 0 : i64, tpu.core_type = #tpu.core_type<tc>, window_params = [{transform_indices = @transform_0, window_bounds = array<i64: 1, 10, 10, 128>}, {pipeline_mode = #tpu.pipeline_mode<synchronous>, transform_indices = @transform_1, window_bounds = array<i64: 1152, 128>}, {transform_indices = @transform_2, window_bounds = array<i64: 1, 9, 9, 128>}, {pipeline_mode = #tpu.pipeline_mode<synchronous>, transform_indices = @transform_3, window_bounds = array<i64: 128, 128>}, {transform_indices = @transform_4, window_bounds = array<i64: 1, 8, 8, 128>}]} {
    %c0 = arith.constant 0 : index
    %c0_0 = arith.constant 0 : index
    %c0_1 = arith.constant 0 : index
    %c0_2 = arith.constant 0 : index
    %0 = vector.load %arg1[%c0, %c0_0, %c0_1, %c0_2] : memref<1x10x10x128xbf16, #tpu.memory_space<vmem>>, vector<1x8x8x128xbf16>
    %1 = vector.shape_cast %0 : vector<1x8x8x128xbf16> to vector<8x8x128xbf16>
    %2 = vector.shape_cast %1 : vector<8x8x128xbf16> to vector<64x128xbf16>
    %c0_3 = arith.constant 0 : index
    %c0_4 = arith.constant 0 : index
    %c1 = arith.constant 1 : index
    %c0_5 = arith.constant 0 : index
    %3 = vector.load %arg1[%c0_3, %c0_4, %c1, %c0_5] : memref<1x10x10x128xbf16, #tpu.memory_space<vmem>>, vector<1x8x8x128xbf16>
    %4 = vector.shape_cast %3 : vector<1x8x8x128xbf16> to vector<8x8x128xbf16>
    %5 = vector.shape_cast %4 : vector<8x8x128xbf16> to vector<64x128xbf16>
    %c0_6 = arith.constant 0 : index
    %c0_7 = arith.constant 0 : index
    %c2 = arith.constant 2 : index
    %c0_8 = arith.constant 0 : index
    %6 = vector.load %arg1[%c0_6, %c0_7, %c2, %c0_8] : memref<1x10x10x128xbf16, #tpu.memory_space<vmem>>, vector<1x8x8x128xbf16>
    %7 = vector.shape_cast %6 : vector<1x8x8x128xbf16> to vector<8x8x128xbf16>
    %8 = vector.shape_cast %7 : vector<8x8x128xbf16> to vector<64x128xbf16>
    %c0_9 = arith.constant 0 : index
    %c1_10 = arith.constant 1 : index
    %c0_11 = arith.constant 0 : index
    %c0_12 = arith.constant 0 : index
    %9 = vector.load %arg1[%c0_9, %c1_10, %c0_11, %c0_12] : memref<1x10x10x128xbf16, #tpu.memory_space<vmem>>, vector<1x8x8x128xbf16>
    %10 = vector.shape_cast %9 : vector<1x8x8x128xbf16> to vector<8x8x128xbf16>
    %11 = vector.shape_cast %10 : vector<8x8x128xbf16> to vector<64x128xbf16>
    %c0_13 = arith.constant 0 : index
    %c1_14 = arith.constant 1 : index
    %c1_15 = arith.constant 1 : index
    %c0_16 = arith.constant 0 : index
    %12 = vector.load %arg1[%c0_13, %c1_14, %c1_15, %c0_16] : memref<1x10x10x128xbf16, #tpu.memory_space<vmem>>, vector<1x8x8x128xbf16>
    %13 = vector.shape_cast %12 : vector<1x8x8x128xbf16> to vector<8x8x128xbf16>
    %14 = vector.shape_cast %13 : vector<8x8x128xbf16> to vector<64x128xbf16>
    %c0_17 = arith.constant 0 : index
    %c1_18 = arith.constant 1 : index
    %c2_19 = arith.constant 2 : index
    %c0_20 = arith.constant 0 : index
    %15 = vector.load %arg1[%c0_17, %c1_18, %c2_19, %c0_20] : memref<1x10x10x128xbf16, #tpu.memory_space<vmem>>, vector<1x8x8x128xbf16>
    %16 = vector.shape_cast %15 : vector<1x8x8x128xbf16> to vector<8x8x128xbf16>
    %17 = vector.shape_cast %16 : vector<8x8x128xbf16> to vector<64x128xbf16>
    %c0_21 = arith.constant 0 : index
    %c2_22 = arith.constant 2 : index
    %c0_23 = arith.constant 0 : index
    %c0_24 = arith.constant 0 : index
    %18 = vector.load %arg1[%c0_21, %c2_22, %c0_23, %c0_24] : memref<1x10x10x128xbf16, #tpu.memory_space<vmem>>, vector<1x8x8x128xbf16>
    %19 = vector.shape_cast %18 : vector<1x8x8x128xbf16> to vector<8x8x128xbf16>
    %20 = vector.shape_cast %19 : vector<8x8x128xbf16> to vector<64x128xbf16>
    %c0_25 = arith.constant 0 : index
    %c2_26 = arith.constant 2 : index
    %c1_27 = arith.constant 1 : index
    %c0_28 = arith.constant 0 : index
    %21 = vector.load %arg1[%c0_25, %c2_26, %c1_27, %c0_28] : memref<1x10x10x128xbf16, #tpu.memory_space<vmem>>, vector<1x8x8x128xbf16>
    %22 = vector.shape_cast %21 : vector<1x8x8x128xbf16> to vector<8x8x128xbf16>
    %23 = vector.shape_cast %22 : vector<8x8x128xbf16> to vector<64x128xbf16>
    %c0_29 = arith.constant 0 : index
    %c2_30 = arith.constant 2 : index
    %c2_31 = arith.constant 2 : index
    %c0_32 = arith.constant 0 : index
    %24 = vector.load %arg1[%c0_29, %c2_30, %c2_31, %c0_32] : memref<1x10x10x128xbf16, #tpu.memory_space<vmem>>, vector<1x8x8x128xbf16>
    %25 = vector.shape_cast %24 : vector<1x8x8x128xbf16> to vector<8x8x128xbf16>
    %26 = vector.shape_cast %25 : vector<8x8x128xbf16> to vector<64x128xbf16>
    %27 = tpu.concatenate %2, %5, %8, %11, %14, %17, %20, %23, %26 in 1 : vector<64x128xbf16>, vector<64x128xbf16>, vector<64x128xbf16>, vector<64x128xbf16>, vector<64x128xbf16>, vector<64x128xbf16>, vector<64x128xbf16>, vector<64x128xbf16>, vector<64x128xbf16> -> vector<64x1152xbf16>
    %c0_33 = arith.constant 0 : index
    %c0_34 = arith.constant 0 : index
    %28 = vector.load %arg2[%c0_33, %c0_34] : memref<1152x128xbf16, #tpu.memory_space<vmem>>, vector<1152x128xbf16>
    %cst = arith.constant dense<0.000000e+00> : vector<64x128xf32>
    %29 = tpu.matmul %27, %28, %cst {dimension_numbers = #tpu.dot_dimension_numbers<[1], [0], [0], [1], [0, 0, 1, 1], [], []>} : vector<64x1152xbf16>, vector<1152x128xbf16>, vector<64x128xf32> -> vector<64x128xf32>
    %c0_35 = arith.constant 0 : index
    %c0_36 = arith.constant 0 : index
    %c0_37 = arith.constant 0 : index
    %c0_38 = arith.constant 0 : index
    %30 = vector.load %arg3[%c0_35, %c0_36, %c0_37, %c0_38] : memref<1x9x9x128xbf16, #tpu.memory_space<vmem>>, vector<1x8x8x128xbf16>
    %31 = vector.shape_cast %30 : vector<1x8x8x128xbf16> to vector<8x8x128xbf16>
    %32 = vector.shape_cast %31 : vector<8x8x128xbf16> to vector<64x128xbf16>
    %c0_39 = arith.constant 0 : index
    %c0_40 = arith.constant 0 : index
    %33 = vector.load %arg4[%c0_39, %c0_40] : memref<128x128xbf16, #tpu.memory_space<vmem>>, vector<128x128xbf16>
    %cst_41 = arith.constant dense<0.000000e+00> : vector<64x128xf32>
    %34 = tpu.matmul %32, %33, %cst_41 {dimension_numbers = #tpu.dot_dimension_numbers<[1], [0], [0], [1], [0, 0, 1, 1], [], []>} : vector<64x128xbf16>, vector<128x128xbf16>, vector<64x128xf32> -> vector<64x128xf32>
    %35 = arith.addf %29, %34 : vector<64x128xf32>
    %36 = vector.shape_cast %35 : vector<64x128xf32> to vector<8x8x128xf32>
    %37 = arith.truncf %36 : vector<8x8x128xf32> to vector<8x8x128xbf16>
    %c0_42 = arith.constant 0 : index
    %c0_43 = arith.constant 0 : index
    %c0_44 = arith.constant 0 : index
    %c0_45 = arith.constant 0 : index
    %38 = vector.load %arg5[%c0_42, %c0_43, %c0_44, %c0_45] : memref<1x8x8x128xbf16, #tpu.memory_space<vmem>>, vector<1x8x8x128xbf16>
    %39 = vector.shape_cast %38 : vector<1x8x8x128xbf16> to vector<8x8x128xbf16>
    %40 = vector.shape_cast %37 : vector<8x8x128xbf16> to vector<1x8x8x128xbf16>
    tpu.vector_store %arg5[%c0_42, %c0_43, %c0_44, %c0_45], %40 {strides = array<i32>} : memref<1x8x8x128xbf16, #tpu.memory_space<vmem>>, vector<1x8x8x128xbf16>,
    return
  }
  func.func @transform_0(%arg0: i32) -> (i32, i32, i32, i32) {
    %c0_i32 = arith.constant 0 : i32
    %c0_i32_0 = arith.constant 0 : i32
    %c0_i32_1 = arith.constant 0 : i32
    %c0_i32_2 = arith.constant 0 : i32
    return %arg0, %c0_i32, %c0_i32_0, %c0_i32_1 : i32, i32, i32, i32
  }
  func.func @transform_1(%arg0: i32) -> (i32, i32) {
    %c0_i32 = arith.constant 0 : i32
    %c0_i32_0 = arith.constant 0 : i32
    %c0_i32_1 = arith.constant 0 : i32
    return %c0_i32, %c0_i32_0 : i32, i32
  }
  func.func @transform_2(%arg0: i32) -> (i32, i32, i32, i32) {
    %c0_i32 = arith.constant 0 : i32
    %c0_i32_0 = arith.constant 0 : i32
    %c0_i32_1 = arith.constant 0 : i32
    %c0_i32_2 = arith.constant 0 : i32
    return %arg0, %c0_i32, %c0_i32_0, %c0_i32_1 : i32, i32, i32, i32
  }
  func.func @transform_3(%arg0: i32) -> (i32, i32) {
    %c0_i32 = arith.constant 0 : i32
    %c0_i32_0 = arith.constant 0 : i32
    %c0_i32_1 = arith.constant 0 : i32
    return %c0_i32, %c0_i32_0 : i32, i32
  }
  func.func @transform_4(%arg0: i32) -> (i32, i32, i32, i32) {
    %c0_i32 = arith.constant 0 : i32
    %c0_i32_0 = arith.constant 0 : i32
    %c0_i32_1 = arith.constant 0 : i32
    %c0_i32_2 = arith.constant 0 : i32
    return %arg0, %c0_i32, %c0_i32_0, %c0_i32_1 : i32, i32, i32, i32
  }
}

</mosaic_0001>

<llo_original>
// kernel: preact_block_forward.5
$region0: #{preact_block_forward.5}
  #allocation0 [shape = 'u32[]', space=smem, size = 0x4, offset = 0x4, fixed_abs, tag = 'smem constant byte address 0x4 - core index']
  #allocation1 [shape = 'u32[144,128]{1,0:T(1,128)}', space=vmem, size = 0x12000, scoped, tag = 'internal scratch']
  %s0 = inlined_call_operand.vmem [shape: bf16[512,128], index: 0, kind: input, shape index: {}]
  %s1 = inlined_call_operand.vmem [shape: f32[2,128], index: 1, kind: output, shape index: {}]
  %s2 = sld [smem:[#allocation0]]
  $region18: #{preact_block_forward.5} parent=0
    _
  %s4 = ssub.s32 1, %s2
  %s5 = scalar_select 0, %s4, %s2
  // Predicated region
  $region2: #{preact_block_forward.5} parent=0 // pred_check
    _
  $region3: #{preact_block_forward.5} parent=0 // pred_check_branch
    %7 = sbr.rel (0) target = $region5
  $region4: #{preact_block_forward.5} parent=0 // pred_region
    _
  $region5: #{preact_block_forward.5} parent=0 // pred_fallthru
    _
  %p8 = scmp.eq.s32.totalorder 0, 0
  // Predicated region
  $region6: #{preact_block_forward.5} parent=0 // pred_check
    %p9 = pneg %p8
  $region7: #{preact_block_forward.5} parent=0 // pred_check_branch
    %11 = sbr.rel (%p9) target = $region9
  $region8: #{preact_block_forward.5} parent=0 // pred_region
    %12 = vst [vmem:[%s1] sm:$0x3] 0.0
  $region9: #{preact_block_forward.5} parent=0 // pred_fallthru
    _
  %v13 = vld [vmem:[%s0] sm:$0xf]
  %v14 = vld [vmem:[%s0 + $0x4] sm:$0xf]
  %v15 = vld [vmem:[%s0 + $0x8] sm:$0xf]
  %v16 = vld [vmem:[%s0 + $0xc] sm:$0xf]
  %v17 = vld [vmem:[%s0 + $0x10] sm:$0xf]
  %v18 = vld [vmem:[%s0 + $0x14] sm:$0xf]
  %v19 = vld [vmem:[%s0 + $0x18] sm:$0xf]
  %v20 = vld [vmem:[%s0 + $0x1c] sm:$0xf]
  %v21 = vld [vmem:[%s0 + $0x20] sm:$0xf]
  %v22 = vld [vmem:[%s0 + $0x24] sm:$0xf]
  %v23 = vld [vmem:[%s0 + $0x28] sm:$0xf]
  %v24 = vld [vmem:[%s0 + $0x2c] sm:$0xf]
  %v25 = vld [vmem:[%s0 + $0x30] sm:$0xf]
  %v26 = vld [vmem:[%s0 + $0x34] sm:$0xf]
  %v27 = vld [vmem:[%s0 + $0x38] sm:$0xf]
  %v28 = vld [vmem:[%s0 + $0x3c] sm:$0xf]
  %v29 = vld [vmem:[%s0 + $0x40] sm:$0xf]
  %v30 = vld [vmem:[%s0 + $0x44] sm:$0xf]
  %v31 = vld [vmem:[%s0 + $0x48] sm:$0xf]
  %v32 = vld [vmem:[%s0 + $0x4c] sm:$0xf]
  %v33 = vld [vmem:[%s0 + $0x50] sm:$0xf]
  %v34 = vld [vmem:[%s0 + $0x54] sm:$0xf]
  %v35 = vld [vmem:[%s0 + $0x58] sm:$0xf]
  %v36 = vld [vmem:[%s0 + $0x5c] sm:$0xf]
  %v37 = vld [vmem:[%s0 + $0x60] sm:$0xf]
  %v38 = vld [vmem:[%s0 + $0x64] sm:$0xf]
  %v39 = vld [vmem:[%s0 + $0x68] sm:$0xf]
  %v40 = vld [vmem:[%s0 + $0x6c] sm:$0xf]
  %v41 = vld [vmem:[%s0 + $0x70] sm:$0xf]
  %v42 = vld [vmem:[%s0 + $0x74] sm:$0xf]
  %v43 = vld [vmem:[%s0 + $0x78] sm:$0xf]
  %v44 = vld [vmem:[%s0 + $0x7c] sm:$0xf]
  %v45 = vld [vmem:[%s0 + $0x80] sm:$0xf]
  %v46 = vld [vmem:[%s0 + $0x84] sm:$0xf]
  %v47 = vld [vmem:[%s0 + $0x88] sm:$0xf]
  %v48 = vld [vmem:[%s0 + $0x8c] sm:$0xf]
  %v49 = vld [vmem:[%s0 + $0x90] sm:$0xf]
  %v50 = vld [vmem:[%s0 + $0x94] sm:$0xf]
  %v51 = vld [vmem:[%s0 + $0x98] sm:$0xf]
  %v52 = vld [vmem:[%s0 + $0x9c] sm:$0xf]
  %v53 = vld [vmem:[%s0 + $0xa0] sm:$0xf]
  %v54 = vld [vmem:[%s0 + $0xa4] sm:$0xf]
  %v55 = vld [vmem:[%s0 + $0xa8] sm:$0xf]
  %v56 = vld [vmem:[%s0 + $0xac] sm:$0xf]
  %v57 = vld [vmem:[%s0 + $0xb0] sm:$0xf]
  %v58 = vld [vmem:[%s0 + $0xb4] sm:$0xf]
  %v59 = vld [vmem:[%s0 + $0xb8] sm:$0xf]
  %v60 = vld [vmem:[%s0 + $0xbc] sm:$0xf]
  %v61 = vld [vmem:[%s0 + $0xc0] sm:$0xf]
  %v62 = vld [vmem:[%s0 + $0xc4] sm:$0xf]
  %v63 = vld [vmem:[%s0 + $0xc8] sm:$0xf]
  %v64 = vld [vmem:[%s0 + $0xcc] sm:$0xf]
  %v65 = vld [vmem:[%s0 + $0xd0] sm:$0xf]
  %v66 = vld [vmem:[%s0 + $0xd4] sm:$0xf]
  %v67 = vld [vmem:[%s0 + $0xd8] sm:$0xf]
  %v68 = vld [vmem:[%s0 + $0xdc] sm:$0xf]
  %v69 = vld [vmem:[%s0 + $0xe0] sm:$0xf]
  %v70 = vld [vmem:[%s0 + $0xe4] sm:$0xf]
  %v71 = vld [vmem:[%s0 + $0xe8] sm:$0xf]
  %v72 = vld [vmem:[%s0 + $0xec] sm:$0xf]
  %v73 = vld [vmem:[%s0 + $0xf0] sm:$0xf]
  %v74 = vld [vmem:[%s0 + $0xf4] sm:$0xf]
  %v75 = vld [vmem:[%s0 + $0xf8] sm:$0xf]
  %v76 = vld [vmem:[%s0 + $0xfc] sm:$0xf]
  %v77 = vunpack.c.l.bf16 %v13
  %v78 = vunpack.c.l.bf16 %v14
  %v79 = vunpack.c.l.bf16 %v15
  %v80 = vunpack.c.l.bf16 %v16
  %v81 = vunpack.c.l.bf16 %v17
  %v82 = vunpack.c.l.bf16 %v18
  %v83 = vunpack.c.l.bf16 %v19
  %v84 = vunpack.c.l.bf16 %v20
  %v85 = vunpack.c.l.bf16 %v21
  %v86 = vunpack.c.l.bf16 %v22
  %v87 = vunpack.c.l.bf16 %v23
  %v88 = vunpack.c.l.bf16 %v24
  %v89 = vunpack.c.l.bf16 %v25
  %v90 = vunpack.c.l.bf16 %v26
  %v91 = vunpack.c.l.bf16 %v27
  %v92 = vunpack.c.l.bf16 %v28
  %v93 = vunpack.c.l.bf16 %v29
  %v94 = vunpack.c.l.bf16 %v30
  %v95 = vunpack.c.l.bf16 %v31
  %v96 = vunpack.c.l.bf16 %v32
  %v97 = vunpack.c.l.bf16 %v33
  %v98 = vunpack.c.l.bf16 %v34
  %v99 = vunpack.c.l.bf16 %v35
  %v100 = vunpack.c.l.bf16 %v36
  %v101 = vunpack.c.l.bf16 %v37
  %v102 = vunpack.c.l.bf16 %v38
  %v103 = vunpack.c.l.bf16 %v39
  %v104 = vunpack.c.l.bf16 %v40
  %v105 = vunpack.c.l.bf16 %v41
  %v106 = vunpack.c.l.bf16 %v42
  %v107 = vunpack.c.l.bf16 %v43
  %v108 = vunpack.c.l.bf16 %v44
  %v109 = vunpack.c.l.bf16 %v45
  %v110 = vunpack.c.l.bf16 %v46
  %v111 = vunpack.c.l.bf16 %v47
  %v112 = vunpack.c.l.bf16 %v48
  %v113 = vunpack.c.l.bf16 %v49
  %v114 = vunpack.c.l.bf16 %v50
  %v115 = vunpack.c.l.bf16 %v51
  %v116 = vunpack.c.l.bf16 %v52
  %v117 = vunpack.c.l.bf16 %v53
  %v118 = vunpack.c.l.bf16 %v54
  %v119 = vunpack.c.l.bf16 %v55
  %v120 = vunpack.c.l.bf16 %v56
  %v121 = vunpack.c.l.bf16 %v57
  %v122 = vunpack.c.l.bf16 %v58
  %v123 = vunpack.c.l.bf16 %v59
  %v124 = vunpack.c.l.bf16 %v60
  %v125 = vunpack.c.l.bf16 %v61
  %v126 = vunpack.c.l.bf16 %v62
  %v127 = vunpack.c.l.bf16 %v63
  %v128 = vunpack.c.l.bf16 %v64
  %v129 = vunpack.c.l.bf16 %v65
  %v130 = vunpack.c.l.bf16 %v66
  %v131 = vunpack.c.l.bf16 %v67
  %v132 = vunpack.c.l.bf16 %v68
  %v133 = vunpack.c.l.bf16 %v69
  %v134 = vunpack.c.l.bf16 %v70
  %v135 = vunpack.c.l.bf16 %v71
  %v136 = vunpack.c.l.bf16 %v72
  %v137 = vunpack.c.l.bf16 %v73
  %v138 = vunpack.c.l.bf16 %v74
  %v139 = vunpack.c.l.bf16 %v75
  %v140 = vunpack.c.l.bf16 %v76
  %s141 = smul.u32 0, 512
  %v142 = vlaneseq
  %v143 = vshrl.u32 %v142, 7
  %v144 = vadd.s32 %v143, 8
  %v145 = vadd.s32 %v143, 16
  %v146 = vadd.s32 %v143, 24
  %v147 = vadd.s32 %v143, 32
  %v148 = vadd.s32 %v143, 40
  %v149 = vadd.s32 %v143, 48
  %v150 = vadd.s32 %v143, 56
  %v151 = vadd.s32 %v143, 64
  %v152 = vadd.s32 %v143, 72
  %v153 = vadd.s32 %v143, 80
  %v154 = vadd.s32 %v143, 88
  %v155 = vadd.s32 %v143, 96
  %v156 = vadd.s32 %v143, 104
  %v157 = vadd.s32 %v143, 112
  %v158 = vadd.s32 %v143, 120
  %v159 = vadd.s32 %v143, 128
  %v160 = vadd.s32 %v143, 136
  %v161 = vadd.s32 %v143, 144
  %v162 = vadd.s32 %v143, 152
  %v163 = vadd.s32 %v143, 160
  %v164 = vadd.s32 %v143, 168
  %v165 = vadd.s32 %v143, 176
  %v166 = vadd.s32 %v143, 184
  %v167 = vadd.s32 %v143, 192
  %v168 = vadd.s32 %v143, 200
  %v169 = vadd.s32 %v143, 208
  %v170 = vadd.s32 %v143, 216
  %v171 = vadd.s32 %v143, 224
  %v172 = vadd.s32 %v143, 232
  %v173 = vadd.s32 %v143, 240
  %v174 = vadd.s32 %v143, 248
  %v175 = vadd.s32 %v143, 256
  %v176 = vadd.s32 %v143, 264
  %v177 = vadd.s32 %v143, 272
  %v178 = vadd.s32 %v143, 280
  %v179 = vadd.s32 %v143, 288
  %v180 = vadd.s32 %v143, 296
  %v181 = vadd.s32 %v143, 304
  %v182 = vadd.s32 %v143, 312
  %v183 = vadd.s32 %v143, 320
  %v184 = vadd.s32 %v143, 328
  %v185 = vadd.s32 %v143, 336
  %v186 = vadd.s32 %v143, 344
  %v187 = vadd.s32 %v143, 352
  %v188 = vadd.s32 %v143, 360
  %v189 = vadd.s32 %v143, 368
  %v190 = vadd.s32 %v143, 376
  %v191 = vadd.s32 %v143, 384
  %v192 = vadd.s32 %v143, 392
  %v193 = vadd.s32 %v143, 400
  %v194 = vadd.s32 %v143, 408
  %v195 = vadd.s32 %v143, 416
  %v196 = vadd.s32 %v143, 424
  %v197 = vadd.s32 %v143, 432
  %v198 = vadd.s32 %v143, 440
  %v199 = vadd.s32 %v143, 448
  %v200 = vadd.s32 %v143, 456
  %v201 = vadd.s32 %v143, 464
  %v202 = vadd.s32 %v143, 472
  %v203 = vadd.s32 %v143, 480
  %v204 = vadd.s32 %v143, 488
  %v205 = vadd.s32 %v143, 496
  %v206 = vadd.s32 %v143, 504
  %v207 = vstv %s141
  %v208 = vadd.s32 %v207, %v143
  %v209 = vadd.s32 %v207, %v144
  %v210 = vadd.s32 %v207, %v145
  %v211 = vadd.s32 %v207, %v146
  %v212 = vadd.s32 %v207, %v147
  %v213 = vadd.s32 %v207, %v148
  %v214 = vadd.s32 %v207, %v149
  %v215 = vadd.s32 %v207, %v150
  %v216 = vadd.s32 %v207, %v151
  %v217 = vadd.s32 %v207, %v152
  %v218 = vadd.s32 %v207, %v153
  %v219 = vadd.s32 %v207, %v154
  %v220 = vadd.s32 %v207, %v155
  %v221 = vadd.s32 %v207, %v156
  %v222 = vadd.s32 %v207, %v157
  %v223 = vadd.s32 %v207, %v158
  %v224 = vadd.s32 %v207, %v159
  %v225 = vadd.s32 %v207, %v160
  %v226 = vadd.s32 %v207, %v161
  %v227 = vadd.s32 %v207, %v162
  %v228 = vadd.s32 %v207, %v163
  %v229 = vadd.s32 %v207, %v164
  %v230 = vadd.s32 %v207, %v165
  %v231 = vadd.s32 %v207, %v166
  %v232 = vadd.s32 %v207, %v167
  %v233 = vadd.s32 %v207, %v168
  %v234 = vadd.s32 %v207, %v169
  %v235 = vadd.s32 %v207, %v170
  %v236 = vadd.s32 %v207, %v171
  %v237 = vadd.s32 %v207, %v172
  %v238 = vadd.s32 %v207, %v173
  %v239 = vadd.s32 %v207, %v174
  %v240 = vadd.s32 %v207, %v175
  %v241 = vadd.s32 %v207, %v176
  %v242 = vadd.s32 %v207, %v177
  %v243 = vadd.s32 %v207, %v178
  %v244 = vadd.s32 %v207, %v179
  %v245 = vadd.s32 %v207, %v180
  %v246 = vadd.s32 %v207, %v181
  %v247 = vadd.s32 %v207, %v182
  %v248 = vadd.s32 %v207, %v183
  %v249 = vadd.s32 %v207, %v184
  %v250 = vadd.s32 %v207, %v185
  %v251 = vadd.s32 %v207, %v186
  %v252 = vadd.s32 %v207, %v187
  %v253 = vadd.s32 %v207, %v188
  %v254 = vadd.s32 %v207, %v189
  %v255 = vadd.s32 %v207, %v190
  %v256 = vadd.s32 %v207, %v191
  %v257 = vadd.s32 %v207, %v192
  %v258 = vadd.s32 %v207, %v193
  %v259 = vadd.s32 %v207, %v194
  %v260 = vadd.s32 %v207, %v195
  %v261 = vadd.s32 %v207, %v196
  %v262 = vadd.s32 %v207, %v197
  %v263 = vadd.s32 %v207, %v198
  %v264 = vadd.s32 %v207, %v199
  %v265 = vadd.s32 %v207, %v200
  %v266 = vadd.s32 %v207, %v201
  %v267 = vadd.s32 %v207, %v202
  %v268 = vadd.s32 %v207, %v203
  %v269 = vadd.s32 %v207, %v204
  %v270 = vadd.s32 %v207, %v205
  %v271 = vadd.s32 %v207, %v206
  %vm272 = vcmp.lt.s32.totalorder %v208, 512
  %vm273 = vcmp.lt.s32.totalorder %v209, 512
  %vm274 = vcmp.lt.s32.totalorder %v210, 512
  %vm275 = vcmp.lt.s32.totalorder %v211, 512
  %vm276 = vcmp.lt.s32.totalorder %v212, 512
  %vm277 = vcmp.lt.s32.totalorder %v213, 512
  %vm278 = vcmp.lt.s32.totalorder %v214, 512
  %vm279 = vcmp.lt.s32.totalorder %v215, 512
  %vm280 = vcmp.lt.s32.totalorder %v216, 512
  %vm281 = vcmp.lt.s32.totalorder %v217, 512
  %vm282 = vcmp.lt.s32.totalorder %v218, 512
  %vm283 = vcmp.lt.s32.totalorder %v219, 512
  %vm284 = vcmp.lt.s32.totalorder %v220, 512
  %vm285 = vcmp.lt.s32.totalorder %v221, 512
  %vm286 = vcmp.lt.s32.totalorder %v222, 512
  %vm287 = vcmp.lt.s32.totalorder %v223, 512
  %vm288 = vcmp.lt.s32.totalorder %v224, 512
  %vm289 = vcmp.lt.s32.totalorder %v225, 512
  %vm290 = vcmp.lt.s32.totalorder %v226, 512
  %vm291 = vcmp.lt.s32.totalorder %v227, 512
  %vm292 = vcmp.lt.s32.totalorder %v228, 512
  %vm293 = vcmp.lt.s32.totalorder %v229, 512
  %vm294 = vcmp.lt.s32.totalorder %v230, 512
  %vm295 = vcmp.lt.s32.totalorder %v231, 512
  %vm296 = vcmp.lt.s32.totalorder %v232, 512
  %vm297 = vcmp.lt.s32.totalorder %v233, 512
  %vm298 = vcmp.lt.s32.totalorder %v234, 512
  %vm299 = vcmp.lt.s32.totalorder %v235, 512
  %vm300 = vcmp.lt.s32.totalorder %v236, 512
  %vm301 = vcmp.lt.s32.totalorder %v237, 512
  %vm302 = vcmp.lt.s32.totalorder %v238, 512
  %vm303 = vcmp.lt.s32.totalorder %v239, 512
  %vm304 = vcmp.lt.s32.totalorder %v240, 512
  %vm305 = vcmp.lt.s32.totalorder %v241, 512
  %vm306 = vcmp.lt.s32.totalorder %v242, 512
  %vm307 = vcmp.lt.s32.totalorder %v243, 512
  %vm308 = vcmp.lt.s32.totalorder %v244, 512
  %vm309 = vcmp.lt.s32.totalorder %v245, 512
  %vm310 = vcmp.lt.s32.totalorder %v246, 512
  %vm311 = vcmp.lt.s32.totalorder %v247, 512
  %vm312 = vcmp.lt.s32.totalorder %v248, 512
  %vm313 = vcmp.lt.s32.totalorder %v249, 512
  %vm314 = vcmp.lt.s32.totalorder %v250, 512
  %vm315 = vcmp.lt.s32.totalorder %v251, 512
  %vm316 = vcmp.lt.s32.totalorder %v252, 512
  %vm317 = vcmp.lt.s32.totalorder %v253, 512
  %vm318 = vcmp.lt.s32.totalorder %v254, 512
  %vm319 = vcmp.lt.s32.totalorder %v255, 512
  %vm320 = vcmp.lt.s32.totalorder %v256, 512
  %vm321 = vcmp.lt.s32.totalorder %v257, 512
  %vm322 = vcmp.lt.s32.totalorder %v258, 512
  %vm323 = vcmp.lt.s32.totalorder %v259, 512
  %vm324 = vcmp.lt.s32.totalorder %v260, 512
  %vm325 = vcmp.lt.s32.totalorder %v261, 512
  %vm326 = vcmp.lt.s32.totalorder %v262, 512
  %vm327 = vcmp.lt.s32.totalorder %v263, 512
  %vm328 = vcmp.lt.s32.totalorder %v264, 512
  %vm329 = vcmp.lt.s32.totalorder %v265, 512
  %vm330 = vcmp.lt.s32.totalorder %v266, 512
  %vm331 = vcmp.lt.s32.totalorder %v267, 512
  %vm332 = vcmp.lt.s32.totalorder %v268, 512
  %vm333 = vcmp.lt.s32.totalorder %v269, 512
  %vm334 = vcmp.lt.s32.totalorder %v270, 512
  %vm335 = vcmp.lt.s32.totalorder %v271, 512
  %v336 = vsel %vm272, 1, 0
  %v337 = vsel %vm273, 1, 0
  %v338 = vsel %vm274, 1, 0
  %v339 = vsel %vm275, 1, 0
  %v340 = vsel %vm276, 1, 0
  %v341 = vsel %vm277, 1, 0
  %v342 = vsel %vm278, 1, 0
  %v343 = vsel %vm279, 1, 0
  %v344 = vsel %vm280, 1, 0
  %v345 = vsel %vm281, 1, 0
  %v346 = vsel %vm282, 1, 0
  %v347 = vsel %vm283, 1, 0
  %v348 = vsel %vm284, 1, 0
  %v349 = vsel %vm285, 1, 0
  %v350 = vsel %vm286, 1, 0
  %v351 = vsel %vm287, 1, 0
  %v352 = vsel %vm288, 1, 0
  %v353 = vsel %vm289, 1, 0
  %v354 = vsel %vm290, 1, 0
  %v355 = vsel %vm291, 1, 0
  %v356 = vsel %vm292, 1, 0
  %v357 = vsel %vm293, 1, 0
  %v358 = vsel %vm294, 1, 0
  %v359 = vsel %vm295, 1, 0
  %v360 = vsel %vm296, 1, 0
  %v361 = vsel %vm297, 1, 0
  %v362 = vsel %vm298, 1, 0
  %v363 = vsel %vm299, 1, 0
  %v364 = vsel %vm300, 1, 0
  %v365 = vsel %vm301, 1, 0
  %v366 = vsel %vm302, 1, 0
  %v367 = vsel %vm303, 1, 0
  %v368 = vsel %vm304, 1, 0
  %v369 = vsel %vm305, 1, 0
  %v370 = vsel %vm306, 1, 0
  %v371 = vsel %vm307, 1, 0
  %v372 = vsel %vm308, 1, 0
  %v373 = vsel %vm309, 1, 0
  %v374 = vsel %vm310, 1, 0
  %v375 = vsel %vm311, 1, 0
  %v376 = vsel %vm312, 1, 0
  %v377 = vsel %vm313, 1, 0
  %v378 = vsel %vm314, 1, 0
  %v379 = vsel %vm315, 1, 0
  %v380 = vsel %vm316, 1, 0
  %v381 = vsel %vm317, 1, 0
  %v382 = vsel %vm318, 1, 0
  %v383 = vsel %vm319, 1, 0
  %v384 = vsel %vm320, 1, 0
  %v385 = vsel %vm321, 1, 0
  %v386 = vsel %vm322, 1, 0
  %v387 = vsel %vm323, 1, 0
  %v388 = vsel %vm324, 1, 0
  %v389 = vsel %vm325, 1, 0
  %v390 = vsel %vm326, 1, 0
  %v391 = vsel %vm327, 1, 0
  %v392 = vsel %vm328, 1, 0
  %v393 = vsel %vm329, 1, 0
  %v394 = vsel %vm330, 1, 0
  %v395 = vsel %vm331, 1, 0
  %v396 = vsel %vm332, 1, 0
  %v397 = vsel %vm333, 1, 0
  %v398 = vsel %vm334, 1, 0
  %v399 = vsel %vm335, 1, 0
  %vm400 = vcmp.eq.s32.totalorder %v336, 1
  %vm401 = vcmp.eq.s32.totalorder %v337, 1
  %vm402 = vcmp.eq.s32.totalorder %v338, 1
  %vm403 = vcmp.eq.s32.totalorder %v339, 1
  %vm404 = vcmp.eq.s32.totalorder %v340, 1
  %vm405 = vcmp.eq.s32.totalorder %v341, 1
  %vm406 = vcmp.eq.s32.totalorder %v342, 1
  %vm407 = vcmp.eq.s32.totalorder %v343, 1
  %vm408 = vcmp.eq.s32.totalorder %v344, 1
  %vm409 = vcmp.eq.s32.totalorder %v345, 1
  %vm410 = vcmp.eq.s32.totalorder %v346, 1
  %vm411 = vcmp.eq.s32.totalorder %v347, 1
  %vm412 = vcmp.eq.s32.totalorder %v348, 1
  %vm413 = vcmp.eq.s32.totalorder %v349, 1
  %vm414 = vcmp.eq.s32.totalorder %v350, 1
  %vm415 = vcmp.eq.s32.totalorder %v351, 1
  %vm416 = vcmp.eq.s32.totalorder %v352, 1
  %vm417 = vcmp.eq.s32.totalorder %v353, 1
  %vm418 = vcmp.eq.s32.totalorder %v354, 1
  %vm419 = vcmp.eq.s32.totalorder %v355, 1
  %vm420 = vcmp.eq.s32.totalorder %v356, 1
  %vm421 = vcmp.eq.s32.totalorder %v357, 1
  %vm422 = vcmp.eq.s32.totalorder %v358, 1
  %vm423 = vcmp.eq.s32.totalorder %v359, 1
  %vm424 = vcmp.eq.s32.totalorder %v360, 1
  %vm425 = vcmp.eq.s32.totalorder %v361, 1
  %vm426 = vcmp.eq.s32.totalorder %v362, 1
  %vm427 = vcmp.eq.s32.totalorder %v363, 1
  %vm428 = vcmp.eq.s32.totalorder %v364, 1
  %vm429 = vcmp.eq.s32.totalorder %v365, 1
  %vm430 = vcmp.eq.s32.totalorder %v366, 1
  %vm431 = vcmp.eq.s32.totalorder %v367, 1
  %vm432 = vcmp.eq.s32.totalorder %v368, 1
  %vm433 = vcmp.eq.s32.totalorder %v369, 1
  %vm434 = vcmp.eq.s32.totalorder %v370, 1
  %vm435 = vcmp.eq.s32.totalorder %v371, 1
  %vm436 = vcmp.eq.s32.totalorder %v372, 1
  %vm437 = vcmp.eq.s32.totalorder %v373, 1
  %vm438 = vcmp.eq.s32.totalorder %v374, 1
  %vm439 = vcmp.eq.s32.totalorder %v375, 1
  %vm440 = vcmp.eq.s32.totalorder %v376, 1
  %vm441 = vcmp.eq.s32.totalorder %v377, 1
  %vm442 = vcmp.eq.s32.totalorder %v378, 1
  %vm443 = vcmp.eq.s32.totalorder %v379, 1
  %vm444 = vcmp.eq.s32.totalorder %v380, 1
  %vm445 = vcmp.eq.s32.totalorder %v381, 1
  %vm446 = vcmp.eq.s32.totalorder %v382, 1
  %vm447 = vcmp.eq.s32.totalorder %v383, 1
  %vm448 = vcmp.eq.s32.totalorder %v384, 1
  %vm449 = vcmp.eq.s32.totalorder %v385, 1
  %vm450 = vcmp.eq.s32.totalorder %v386, 1
  %vm451 = vcmp.eq.s32.totalorder %v387, 1
  %vm452 = vcmp.eq.s32.totalorder %v388, 1
  %vm453 = vcmp.eq.s32.totalorder %v389, 1
  %vm454 = vcmp.eq.s32.totalorder %v390, 1
  %vm455 = vcmp.eq.s32.totalorder %v391, 1
  %vm456 = vcmp.eq.s32.totalorder %v392, 1
  %vm457 = vcmp.eq.s32.totalorder %v393, 1
  %vm458 = vcmp.eq.s32.totalorder %v394, 1
  %vm459 = vcmp.eq.s32.totalorder %v395, 1
  %vm460 = vcmp.eq.s32.totalorder %v396, 1
  %vm461 = vcmp.eq.s32.totalorder %v397, 1
  %vm462 = vcmp.eq.s32.totalorder %v398, 1
  %vm463 = vcmp.eq.s32.totalorder %v399, 1
  %v464 = vsel %vm400, %v77, 0.0
  %v465 = vsel %vm401, %v78, 0.0
  %v466 = vsel %vm402, %v79, 0.0
  %v467 = vsel %vm403, %v80, 0.0
  %v468 = vsel %vm404, %v81, 0.0
  %v469 = vsel %vm405, %v82, 0.0
  %v470 = vsel %vm406, %v83, 0.0
  %v471 = vsel %vm407, %v84, 0.0
  %v472 = vsel %vm408, %v85, 0.0
  %v473 = vsel %vm409, %v86, 0.0
  %v474 = vsel %vm410, %v87, 0.0
  %v475 = vsel %vm411, %v88, 0.0
  %v476 = vsel %vm412, %v89, 0.0
  %v477 = vsel %vm413, %v90, 0.0
  %v478 = vsel %vm414, %v91, 0.0
  %v479 = vsel %vm415, %v92, 0.0
  %v480 = vsel %vm416, %v93, 0.0
  %v481 = vsel %vm417, %v94, 0.0
  %v482 = vsel %vm418, %v95, 0.0
  %v483 = vsel %vm419, %v96, 0.0
  %v484 = vsel %vm420, %v97, 0.0
  %v485 = vsel %vm421, %v98, 0.0
  %v486 = vsel %vm422, %v99, 0.0
  %v487 = vsel %vm423, %v100, 0.0
  %v488 = vsel %vm424, %v101, 0.0
  %v489 = vsel %vm425, %v102, 0.0
  %v490 = vsel %vm426, %v103, 0.0
  %v491 = vsel %vm427, %v104, 0.0
  %v492 = vsel %vm428, %v105, 0.0
  %v493 = vsel %vm429, %v106, 0.0
  %v494 = vsel %vm430, %v107, 0.0
  %v495 = vsel %vm431, %v108, 0.0
  %v496 = vsel %vm432, %v109, 0.0
  %v497 = vsel %vm433, %v110, 0.0
  %v498 = vsel %vm434, %v111, 0.0
  %v499 = vsel %vm435, %v112, 0.0
  %v500 = vsel %vm436, %v113, 0.0
  %v501 = vsel %vm437, %v114, 0.0
  %v502 = vsel %vm438, %v115, 0.0
  %v503 = vsel %vm439, %v116, 0.0
  %v504 = vsel %vm440, %v117, 0.0
  %v505 = vsel %vm441, %v118, 0.0
  %v506 = vsel %vm442, %v119, 0.0
  %v507 = vsel %vm443, %v120, 0.0
  %v508 = vsel %vm444, %v121, 0.0
  %v509 = vsel %vm445, %v122, 0.0
  %v510 = vsel %vm446, %v123, 0.0
  %v511 = vsel %vm447, %v124, 0.0
  %v512 = vsel %vm448, %v125, 0.0
  %v513 = vsel %vm449, %v126, 0.0
  %v514 = vsel %vm450, %v127, 0.0
  %v515 = vsel %vm451, %v128, 0.0
  %v516 = vsel %vm452, %v129, 0.0
  %v517 = vsel %vm453, %v130, 0.0
  %v518 = vsel %vm454, %v131, 0.0
  %v519 = vsel %vm455, %v132, 0.0
  %v520 = vsel %vm456, %v133, 0.0
  %v521 = vsel %vm457, %v134, 0.0
  %v522 = vsel %vm458, %v135, 0.0
  %v523 = vsel %vm459, %v136, 0.0
  %v524 = vsel %vm460, %v137, 0.0
  %v525 = vsel %vm461, %v138, 0.0
  %v526 = vsel %vm462, %v139, 0.0
  %v527 = vsel %vm463, %v140, 0.0
  %v528 = vld [vmem:[%s1] sm:$0x3]
  %v529 = vadd.f32 %v464, %v465
  %v530 = vadd.f32 %v529, %v466
  %v531 = vadd.f32 %v530, %v467
  %v532 = vadd.f32 %v531, %v468
  %v533 = vadd.f32 %v532, %v469
  %v534 = vadd.f32 %v533, %v470
  %v535 = vadd.f32 %v534, %v471
  %v536 = vadd.f32 %v535, %v472
  %v537 = vadd.f32 %v536, %v473
  %v538 = vadd.f32 %v537, %v474
  %v539 = vadd.f32 %v538, %v475
  %v540 = vadd.f32 %v539, %v476
  %v541 = vadd.f32 %v540, %v477
  %v542 = vadd.f32 %v541, %v478
  %v543 = vadd.f32 %v542, %v479
  %v544 = vadd.f32 %v543, %v480
  %v545 = vadd.f32 %v544, %v481
  %v546 = vadd.f32 %v545, %v482
  %v547 = vadd.f32 %v546, %v483
  %v548 = vadd.f32 %v547, %v484
  %v549 = vadd.f32 %v548, %v485
  %v550 = vadd.f32 %v549, %v486
  %v551 = vadd.f32 %v550, %v487
  %v552 = vadd.f32 %v551, %v488
  %v553 = vadd.f32 %v552, %v489
  %v554 = vadd.f32 %v553, %v490
  %v555 = vadd.f32 %v554, %v491
  %v556 = vadd.f32 %v555, %v492
  %v557 = vadd.f32 %v556, %v493
  %v558 = vadd.f32 %v557, %v494
  %v559 = vadd.f32 %v558, %v495
  %v560 = vadd.f32 %v559, %v496
  %v561 = vadd.f32 %v560, %v497
  %v562 = vadd.f32 %v561, %v498
  %v563 = vadd.f32 %v562, %v499
  %v564 = vadd.f32 %v563, %v500
  %v565 = vadd.f32 %v564, %v501
  %v566 = vadd.f32 %v565, %v502
  %v567 = vadd.f32 %v566, %v503
  %v568 = vadd.f32 %v567, %v504
  %v569 = vadd.f32 %v568, %v505
  %v570 = vadd.f32 %v569, %v506
  %v571 = vadd.f32 %v570, %v507
  %v572 = vadd.f32 %v571, %v508
  %v573 = vadd.f32 %v572, %v509
  %v574 = vadd.f32 %v573, %v510
  %v575 = vadd.f32 %v574, %v511
  %v576 = vadd.f32 %v575, %v512
  %v577 = vadd.f32 %v576, %v513
  %v578 = vadd.f32 %v577, %v514
  %v579 = vadd.f32 %v578, %v515
  %v580 = vadd.f32 %v579, %v516
  %v581 = vadd.f32 %v580, %v517
  %v582 = vadd.f32 %v581, %v518
  %v583 = vadd.f32 %v582, %v519
  %v584 = vadd.f32 %v583, %v520
  %v585 = vadd.f32 %v584, %v521
  %v586 = vadd.f32 %v585, %v522
  %v587 = vadd.f32 %v586, %v523
  %v588 = vadd.f32 %v587, %v524
  %v589 = vadd.f32 %v588, %v525
  %v590 = vadd.f32 %v589, %v526
  %v591 = vadd.f32 %v590, %v527
  %v592 = vrot.slane %v591, 4
  %v593 = vadd.f32 %v591, %v592
  %v594 = vrot.slane %v593, 2
  %v595 = vadd.f32 %v593, %v594
  %v596 = vrot.slane %v595, 1
  %v597 = vadd.f32 %v595, %v596
  %v598 = vmul.f32 %v464, %v464
  %v599 = vmul.f32 %v465, %v465
  %v600 = vmul.f32 %v466, %v466
  %v601 = vmul.f32 %v467, %v467
  %v602 = vmul.f32 %v468, %v468
  %v603 = vmul.f32 %v469, %v469
  %v604 = vmul.f32 %v470, %v470
  %v605 = vmul.f32 %v471, %v471
  %v606 = vmul.f32 %v472, %v472
  %v607 = vmul.f32 %v473, %v473
  %v608 = vmul.f32 %v474, %v474
  %v609 = vmul.f32 %v475, %v475
  %v610 = vmul.f32 %v476, %v476
  %v611 = vmul.f32 %v477, %v477
  %v612 = vmul.f32 %v478, %v478
  %v613 = vmul.f32 %v479, %v479
  %v614 = vmul.f32 %v480, %v480
  %v615 = vmul.f32 %v481, %v481
  %v616 = vmul.f32 %v482, %v482
  %v617 = vmul.f32 %v483, %v483
  %v618 = vmul.f32 %v484, %v484
  %v619 = vmul.f32 %v485, %v485
  %v620 = vmul.f32 %v486, %v486
  %v621 = vmul.f32 %v487, %v487
  %v622 = vmul.f32 %v488, %v488
  %v623 = vmul.f32 %v489, %v489
  %v624 = vmul.f32 %v490, %v490
  %v625 = vmul.f32 %v491, %v491
  %v626 = vmul.f32 %v492, %v492
  %v627 = vmul.f32 %v493, %v493
  %v628 = vmul.f32 %v494, %v494
  %v629 = vmul.f32 %v495, %v495
  %v630 = vmul.f32 %v496, %v496
  %v631 = vmul.f32 %v497, %v497
  %v632 = vmul.f32 %v498, %v498
  %v633 = vmul.f32 %v499, %v499
  %v634 = vmul.f32 %v500, %v500
  %v635 = vmul.f32 %v501, %v501
  %v636 = vmul.f32 %v502, %v502
  %v637 = vmul.f32 %v503, %v503
  %v638 = vmul.f32 %v504, %v504
  %v639 = vmul.f32 %v505, %v505
  %v640 = vmul.f32 %v506, %v506
  %v641 = vmul.f32 %v507, %v507
  %v642 = vmul.f32 %v508, %v508
  %v643 = vmul.f32 %v509, %v509
  %v644 = vmul.f32 %v510, %v510
  %v645 = vmul.f32 %v511, %v511
  %v646 = vmul.f32 %v512, %v512
  %v647 = vmul.f32 %v513, %v513
  %v648 = vmul.f32 %v514, %v514
  %v649 = vmul.f32 %v515, %v515
  %v650 = vmul.f32 %v516, %v516
  %v651 = vmul.f32 %v517, %v517
  %v652 = vmul.f32 %v518, %v518
  %v653 = vmul.f32 %v519, %v519
  %v654 = vmul.f32 %v520, %v520
  %v655 = vmul.f32 %v521, %v521
  %v656 = vmul.f32 %v522, %v522
  %v657 = vmul.f32 %v523, %v523
  %v658 = vmul.f32 %v524, %v524
  %v659 = vmul.f32 %v525, %v525
  %v660 = vmul.f32 %v526, %v526
  %v661 = vmul.f32 %v527, %v527
  %v662 = vadd.f32 %v598, %v599
  %v663 = vadd.f32 %v662, %v600
  %v664 = vadd.f32 %v663, %v601
  %v665 = vadd.f32 %v664, %v602
  %v666 = vadd.f32 %v665, %v603
  %v667 = vadd.f32 %v666, %v604
  %v668 = vadd.f32 %v667, %v605
  %v669 = vadd.f32 %v668, %v606
  %v670 = vadd.f32 %v669, %v607
  %v671 = vadd.f32 %v670, %v608
  %v672 = vadd.f32 %v671, %v609
  %v673 = vadd.f32 %v672, %v610
  %v674 = vadd.f32 %v673, %v611
  %v675 = vadd.f32 %v674, %v612
  %v676 = vadd.f32 %v675, %v613
  %v677 = vadd.f32 %v676, %v614
  %v678 = vadd.f32 %v677, %v615
  %v679 = vadd.f32 %v678, %v616
  %v680 = vadd.f32 %v679, %v617
  %v681 = vadd.f32 %v680, %v618
  %v682 = vadd.f32 %v681, %v619
  %v683 = vadd.f32 %v682, %v620
  %v684 = vadd.f32 %v683, %v621
  %v685 = vadd.f32 %v684, %v622
  %v686 = vadd.f32 %v685, %v623
  %v687 = vadd.f32 %v686, %v624
  %v688 = vadd.f32 %v687, %v625
  %v689 = vadd.f32 %v688, %v626
  %v690 = vadd.f32 %v689, %v627
  %v691 = vadd.f32 %v690, %v628
  %v692 = vadd.f32 %v691, %v629
  %v693 = vadd.f32 %v692, %v630
  %v694 = vadd.f32 %v693, %v631
  %v695 = vadd.f32 %v694, %v632
  %v696 = vadd.f32 %v695, %v633
  %v697 = vadd.f32 %v696, %v634
  %v698 = vadd.f32 %v697, %v635
  %v699 = vadd.f32 %v698, %v636
  %v700 = vadd.f32 %v699, %v637
  %v701 = vadd.f32 %v700, %v638
  %v702 = vadd.f32 %v701, %v639
  %v703 = vadd.f32 %v702, %v640
  %v704 = vadd.f32 %v703, %v641
  %v705 = vadd.f32 %v704, %v642
  %v706 = vadd.f32 %v705, %v643
  %v707 = vadd.f32 %v706, %v644
  %v708 = vadd.f32 %v707, %v645
  %v709 = vadd.f32 %v708, %v646
  %v710 = vadd.f32 %v709, %v647
  %v711 = vadd.f32 %v710, %v648
  %v712 = vadd.f32 %v711, %v649
  %v713 = vadd.f32 %v712, %v650
  %v714 = vadd.f32 %v713, %v651
  %v715 = vadd.f32 %v714, %v652
  %v716 = vadd.f32 %v715, %v653
  %v717 = vadd.f32 %v716, %v654
  %v718 = vadd.f32 %v717, %v655
  %v719 = vadd.f32 %v718, %v656
  %v720 = vadd.f32 %v719, %v657
  %v721 = vadd.f32 %v720, %v658
  %v722 = vadd.f32 %v721, %v659
  %v723 = vadd.f32 %v722, %v660
  %v724 = vadd.f32 %v723, %v661
  %v725 = vrot.slane %v724, 4
  %v726 = vadd.f32 %v724, %v725
  %v727 = vrot.slane %v726, 2
  %v728 = vadd.f32 %v726, %v727
  %v729 = vrot.slane %v728, 1
  %v730 = vadd.f32 %v728, %v729
  %vm731 = vcmask 1040384
  %v732 = vsel %vm731, %v597, %v730
  %v733 = vadd.f32 %v528, %v732
  %734 = vst [vmem:[%s1] sm:$0x3] %v733
  // Predicated region
  $region10: #{preact_block_forward.5} parent=0 // pred_check
    _
  $region11: #{preact_block_forward.5} parent=0 // pred_check_branch
    %736 = sbr.rel (0) target = $region13
  $region12: #{preact_block_forward.5} parent=0 // pred_region
    _
  $region13: #{preact_block_forward.5} parent=0 // pred_fallthru
    _
  // Predicated region
  $region14: #{preact_block_forward.5} parent=0 // pred_check
    _
  $region15: #{preact_block_forward.5} parent=0 // pred_check_branch
    %738 = sbr.rel (0) target = $region17
  $region16: #{preact_block_forward.5} parent=0 // pred_region
    _
  $region17: #{preact_block_forward.5} parent=0 // pred_fallthru
    _

// kernel: preact_block_forward.6
$region0: #{preact_block_forward.6}
  #allocation0 [shape = 'u32[]', space=smem, size = 0x4, offset = 0x4, fixed_abs, tag = 'smem constant byte address 0x4 - core index']
  #allocation1 [shape = 'u32[144,128]{1,0:T(1,128)}', space=vmem, size = 0x12000, scoped, tag = 'internal scratch']
  %s0 = inlined_call_operand.vmem [shape: bf16[2,16,16,128], index: 0, kind: input, shape index: {}]
  %s1 = inlined_call_operand.vmem [shape: f32[1,128], index: 1, kind: input, shape index: {}]
  %s2 = inlined_call_operand.vmem [shape: f32[1,128], index: 2, kind: input, shape index: {}]
  %s3 = inlined_call_operand.vmem [shape: bf16[2,18,18,128], index: 3, kind: output, shape index: {}]
  %s4 = sld [smem:[#allocation0]]
  $region45: #{preact_block_forward.6} parent=0
    _
  %s6 = ssub.s32 1, %s4
  %s7 = scalar_select 0, %s6, %s4
  loop: start=0, step=1, limit=4
  $region2: #{preact_block_forward.6} parent=0 // loop_pre_header
    _
  $region3: #{preact_block_forward.6} parent=0 // loop_header
    %s9 = sphi 0, %s13
    %p10 = scmp.ge.s32.totalorder %s9, 4
    %s19 = sphi 0, %s21
    %s22 = sphi 0, %s19
    %s23 = sphi 0, %s22
    %s39 = sphi 0, %s23
    %s43 = sphi 0, %s43
    %s45 = sphi 0, %s43
    %s46 = sphi 0, %s45
    %s60 = sphi 0, %s46
    %s64 = sphi 0, %s64
    %s66 = sphi 0, %s64
    %s67 = sphi 0, %s66
    %s81 = sphi 0, %s67
    %s87 = sphi 0, %s89
    %s90 = sphi 0, %s87
    %s91 = sphi 0, %s90
    %s107 = sphi 0, %s91
  $region4: #{preact_block_forward.6} parent=0 // loop_header_branch
    %12 = sbr.rel (%p10) target = $region8
  $region5: #{preact_block_forward.6} parent=0 // loop_body
    %s14 = ssub.s32 %s9, 1
    %s15 = ssub.s32 %s9, 2
    %s16 = sadd.s32 %s9, 1
    %s17 = ssub.s32 %s9, %s16
    %p18 = scmp.eq.s32.totalorder %s17, 0
    %s20 = sadd.s32 %s19, 1
    %s21 = scalar_select %p18, %s19, %s20
    %p24 = pneg %p18
    %p25 = scmp.eq.s32.totalorder %s9, 1
    %p26 = por %p24, %p25
    %p27 = scmp.ne.s32.totalorder %s19, %s22
    %p28 = scmp.eq.s32.totalorder %s9, 0
    %p29 = por %p27, %p28
    %p30 = scmp.ne.s32.totalorder %s19, %s22
    %p31 = scmp.eq.s32.totalorder %s14, 1
    %p32 = por %p30, %p31
    %p33 = scmp.ne.s32.totalorder %s22, %s23
    %p34 = scmp.eq.s32.totalorder %s14, 0
    %p35 = por %p33, %p34
    %p36 = scmp.ne.s32.totalorder %s22, %s23
    %p37 = scmp.eq.s32.totalorder %s15, 1
    %p38 = por %p36, %p37
    %p40 = scmp.ne.s32.totalorder %s23, %s39
    %p41 = scmp.eq.s32.totalorder %s15, 0
    %p42 = por %p40, %p41
    %s44 = sadd.s32 %s43, 1
    %p47 = scmp.eq.s32.totalorder %s9, 1
    %p48 = scmp.ne.s32.totalorder %s43, %s45
    %p49 = scmp.eq.s32.totalorder %s9, 0
    %p50 = por %p48, %p49
    %p51 = scmp.ne.s32.totalorder %s43, %s45
    %p52 = scmp.eq.s32.totalorder %s14, 1
    %p53 = por %p51, %p52
    %p54 = scmp.ne.s32.totalorder %s45, %s46
    %p55 = scmp.eq.s32.totalorder %s14, 0
    %p56 = por %p54, %p55
    %p57 = scmp.ne.s32.totalorder %s45, %s46
    %p58 = scmp.eq.s32.totalorder %s15, 1
    %p59 = por %p57, %p58
    %p61 = scmp.ne.s32.totalorder %s46, %s60
    %p62 = scmp.eq.s32.totalorder %s15, 0
    %p63 = por %p61, %p62
    %s65 = sadd.s32 %s64, 1
    %p68 = scmp.eq.s32.totalorder %s9, 1
    %p69 = scmp.ne.s32.totalorder %s64, %s66
    %p70 = scmp.eq.s32.totalorder %s9, 0
    %p71 = por %p69, %p70
    %p72 = scmp.ne.s32.totalorder %s64, %s66
    %p73 = scmp.eq.s32.totalorder %s14, 1
    %p74 = por %p72, %p73
    %p75 = scmp.ne.s32.totalorder %s66, %s67
    %p76 = scmp.eq.s32.totalorder %s14, 0
    %p77 = por %p75, %p76
    %p78 = scmp.ne.s32.totalorder %s66, %s67
    %p79 = scmp.eq.s32.totalorder %s15, 1
    %p80 = por %p78, %p79
    %p82 = scmp.ne.s32.totalorder %s67, %s81
    %p83 = scmp.eq.s32.totalorder %s15, 0
    %p84 = por %p82, %p83
    %s85 = ssub.s32 %s9, %s16
    %p86 = scmp.eq.s32.totalorder %s85, 0
    %s88 = sadd.s32 %s87, 1
    %s89 = scalar_select %p86, %s87, %s88
    %p92 = pneg %p86
    %p93 = scmp.eq.s32.totalorder %s9, 1
    %p94 = por %p92, %p93
    %p95 = scmp.ne.s32.totalorder %s87, %s90
    %p96 = scmp.eq.s32.totalorder %s9, 0
    %p97 = por %p95, %p96
    %p98 = scmp.ne.s32.totalorder %s87, %s90
    %p99 = scmp.eq.s32.totalorder %s14, 1
    %p100 = por %p98, %p99
    %p101 = scmp.ne.s32.totalorder %s90, %s91
    %p102 = scmp.eq.s32.totalorder %s14, 0
    %p103 = por %p101, %p102
    %p104 = scmp.ne.s32.totalorder %s90, %s91
    %p105 = scmp.eq.s32.totalorder %s15, 1
    %p106 = por %p104, %p105
    %p108 = scmp.ne.s32.totalorder %s91, %s107
    %p109 = scmp.eq.s32.totalorder %s15, 0
    %p110 = por %p108, %p109
    %p111 = scmp.le.s32.totalorder 1, %s9
    %p112 = scmp.lt.s32.totalorder %s9, 3
    %p113 = pnand %p111, %p112
    %p114 = pneg %p113
    // Predicated region
    $region9: #{preact_block_forward.6} parent=5 // pred_check
      _
    $region10: #{preact_block_forward.6} parent=5 // pred_check_branch
      %116 = sbr.rel (%p113) target = $region12
    $region11: #{preact_block_forward.6} parent=5 // pred_region
      %s117 = ssub.s32 %s9, 1
      // Predicated region
      $region13: #{preact_block_forward.6} parent=11 // pred_check
        %p118 = pneg %p56
      $region14: #{preact_block_forward.6} parent=11 // pred_check_branch
        %120 = sbr.rel (%p118) target = $region16
      $region15: #{preact_block_forward.6} parent=11 // pred_region
        _
      $region16: #{preact_block_forward.6} parent=11 // pred_fallthru
        _
      // Predicated region
      $region17: #{preact_block_forward.6} parent=11 // pred_check
        %p121 = pneg %p77
      $region18: #{preact_block_forward.6} parent=11 // pred_check_branch
        %123 = sbr.rel (%p121) target = $region20
      $region19: #{preact_block_forward.6} parent=11 // pred_region
        _
      $region20: #{preact_block_forward.6} parent=11 // pred_fallthru
        _
    $region12: #{preact_block_forward.6} parent=5 // pred_fallthru
      _
    %p124 = scmp.lt.s32.totalorder %s9, 2
    // Predicated region
    $region21: #{preact_block_forward.6} parent=5 // pred_check
      %p125 = pneg %p124
    $region22: #{preact_block_forward.6} parent=5 // pred_check_branch
      %127 = sbr.rel (%p125) target = $region24
    $region23: #{preact_block_forward.6} parent=5 // pred_region
      // Predicated region
      $region25: #{preact_block_forward.6} parent=23 // pred_check
        %p128 = pneg %p29
      $region26: #{preact_block_forward.6} parent=23 // pred_check_branch
        %130 = sbr.rel (%p128) target = $region28
      $region27: #{preact_block_forward.6} parent=23 // pred_region
        %p131 = scmp.lt.s32.totalorder %s9, 1
        %s132 = scalar_select %p131, %s9, 1
        %s133 = smul.addr %s132, 32
        %s134 = smul.addr %s133, 4
        %s135 = scalar_lea.vmem %s0, %s134
      $region28: #{preact_block_forward.6} parent=23 // pred_fallthru
        _
    $region24: #{preact_block_forward.6} parent=5 // pred_fallthru
      _
    %p136 = scmp.le.s32.totalorder 1, %s9
    %p137 = scmp.lt.s32.totalorder %s9, 3
    %p138 = pnand %p136, %p137
    %p139 = pneg %p138
    // Predicated region
    $region29: #{preact_block_forward.6} parent=5 // pred_check
      _
    $region30: #{preact_block_forward.6} parent=5 // pred_check_branch
      %141 = sbr.rel (%p138) target = $region32
    $region31: #{preact_block_forward.6} parent=5 // pred_region
      %s142 = ssub.s32 %s9, 1
      %p143 = scmp.lt.s32.totalorder %s14, 1
      %s144 = scalar_select %p143, %s14, 1
      %s145 = smul.addr %s144, 32
      %s146 = smul.addr %s145, 4
      %s147 = scalar_lea.vmem %s0, %s146
      %p148 = pneg %p35
      %p149 = pneg %p32
      %p150 = pneg %p56
      %p151 = pneg %p53
      %p152 = pneg %p77
      %p153 = pneg %p74
      %p154 = pneg %p103
      %p155 = pneg %p100
      %p156 = scmp.lt.s32.totalorder %s14, 1
      %s157 = scalar_select %p156, %s14, 1
      %s158 = smul.addr %s157, 54
      %s159 = smul.addr %s158, 4
      %s160 = scalar_lea.vmem %s3, %s159
      %p161 = scmp.lt.s32.totalorder %s14, 1
      %s162 = scalar_select %p161, %s14, 1
      %s163 = smul.addr %s162, 32
      %s164 = smul.addr %s163, 4
      %s165 = scalar_lea.vmem %s0, %s164
      %p166 = scmp.lt.s32.totalorder %s14, 1
      %s167 = scalar_select %p166, %s14, 1
      %s168 = smul.addr %s167, 54
      %s169 = smul.addr %s168, 4
      %s170 = scalar_lea.vmem %s3, %s169
      %v172 = vld [vmem:[%s165] sm:$0xf]
      %v173 = vld [vmem:[%s165 + $0x4] sm:$0xf]
      %v174 = vld [vmem:[%s165 + $0x8] sm:$0xf]
      %v175 = vld [vmem:[%s165 + $0xc] sm:$0xf]
      %v176 = vld [vmem:[%s165 + $0x10] sm:$0xf]
      %v177 = vld [vmem:[%s165 + $0x14] sm:$0xf]
      %v178 = vld [vmem:[%s165 + $0x18] sm:$0xf]
      %v179 = vld [vmem:[%s165 + $0x1c] sm:$0xf]
      %v180 = vld [vmem:[%s165 + $0x20] sm:$0xf]
      %v181 = vld [vmem:[%s165 + $0x24] sm:$0xf]
      %v182 = vld [vmem:[%s165 + $0x28] sm:$0xf]
      %v183 = vld [vmem:[%s165 + $0x2c] sm:$0xf]
      %v184 = vld [vmem:[%s165 + $0x30] sm:$0xf]
      %v185 = vld [vmem:[%s165 + $0x34] sm:$0xf]
      %v186 = vld [vmem:[%s165 + $0x38] sm:$0xf]
      %v187 = vld [vmem:[%s165 + $0x3c] sm:$0xf]
      %v188 = vld [vmem:[%s165 + $0x40] sm:$0xf]
      %v189 = vld [vmem:[%s165 + $0x44] sm:$0xf]
      %v190 = vld [vmem:[%s165 + $0x48] sm:$0xf]
      %v191 = vld [vmem:[%s165 + $0x4c] sm:$0xf]
      %v192 = vld [vmem:[%s165 + $0x50] sm:$0xf]
      %v193 = vld [vmem:[%s165 + $0x54] sm:$0xf]
      %v194 = vld [vmem:[%s165 + $0x58] sm:$0xf]
      %v195 = vld [vmem:[%s165 + $0x5c] sm:$0xf]
      %v196 = vld [vmem:[%s165 + $0x60] sm:$0xf]
      %v197 = vld [vmem:[%s165 + $0x64] sm:$0xf]
      %v198 = vld [vmem:[%s165 + $0x68] sm:$0xf]
      %v199 = vld [vmem:[%s165 + $0x6c] sm:$0xf]
      %v200 = vld [vmem:[%s165 + $0x70] sm:$0xf]
      %v201 = vld [vmem:[%s165 + $0x74] sm:$0xf]
      %v202 = vld [vmem:[%s165 + $0x78] sm:$0xf]
      %v203 = vld [vmem:[%s165 + $0x7c] sm:$0xf]
      %v204 = vunpack.c.l.bf16 %v172
      %v205 = vunpack.c.l.bf16 %v173
      %v206 = vunpack.c.l.bf16 %v174
      %v207 = vunpack.c.l.bf16 %v175
      %v208 = vunpack.c.l.bf16 %v176
      %v209 = vunpack.c.l.bf16 %v177
      %v210 = vunpack.c.l.bf16 %v178
      %v211 = vunpack.c.l.bf16 %v179
      %v212 = vunpack.c.l.bf16 %v180
      %v213 = vunpack.c.l.bf16 %v181
      %v214 = vunpack.c.l.bf16 %v182
      %v215 = vunpack.c.l.bf16 %v183
      %v216 = vunpack.c.l.bf16 %v184
      %v217 = vunpack.c.l.bf16 %v185
      %v218 = vunpack.c.l.bf16 %v186
      %v219 = vunpack.c.l.bf16 %v187
      %v220 = vunpack.c.l.bf16 %v188
      %v221 = vunpack.c.l.bf16 %v189
      %v222 = vunpack.c.l.bf16 %v190
      %v223 = vunpack.c.l.bf16 %v191
      %v224 = vunpack.c.l.bf16 %v192
      %v225 = vunpack.c.l.bf16 %v193
      %v226 = vunpack.c.l.bf16 %v194
      %v227 = vunpack.c.l.bf16 %v195
      %v228 = vunpack.c.l.bf16 %v196
      %v229 = vunpack.c.l.bf16 %v197
      %v230 = vunpack.c.l.bf16 %v198
      %v231 = vunpack.c.l.bf16 %v199
      %v232 = vunpack.c.l.bf16 %v200
      %v233 = vunpack.c.l.bf16 %v201
      %v234 = vunpack.c.l.bf16 %v202
      %v235 = vunpack.c.l.bf16 %v203
      %v236 = vld [vmem:[%s1] sm:$0x1]
      %v238 = vlaneseq
      %v239 = vshrl.u32 %v238, 7
      %v240 = vsub.s32 0, %v239
      %v241 = vrot.slane %v236, %v240
      %v243 = vmul.f32 %v204, %v241
      %v244 = vmul.f32 %v205, %v241
      %v245 = vmul.f32 %v206, %v241
      %v246 = vmul.f32 %v207, %v241
      %v247 = vmul.f32 %v208, %v241
      %v248 = vmul.f32 %v209, %v241
      %v249 = vmul.f32 %v210, %v241
      %v250 = vmul.f32 %v211, %v241
      %v251 = vmul.f32 %v212, %v241
      %v252 = vmul.f32 %v213, %v241
      %v253 = vmul.f32 %v214, %v241
      %v254 = vmul.f32 %v215, %v241
      %v255 = vmul.f32 %v216, %v241
      %v256 = vmul.f32 %v217, %v241
      %v257 = vmul.f32 %v218, %v241
      %v258 = vmul.f32 %v219, %v241
      %v259 = vmul.f32 %v220, %v241
      %v260 = vmul.f32 %v221, %v241
      %v261 = vmul.f32 %v222, %v241
      %v262 = vmul.f32 %v223, %v241
      %v263 = vmul.f32 %v224, %v241
      %v264 = vmul.f32 %v225, %v241
      %v265 = vmul.f32 %v226, %v241
      %v266 = vmul.f32 %v227, %v241
      %v267 = vmul.f32 %v228, %v241
      %v268 = vmul.f32 %v229, %v241
      %v269 = vmul.f32 %v230, %v241
      %v270 = vmul.f32 %v231, %v241
      %v271 = vmul.f32 %v232, %v241
      %v272 = vmul.f32 %v233, %v241
      %v273 = vmul.f32 %v234, %v241
      %v274 = vmul.f32 %v235, %v241
      %v275 = vld [vmem:[%s2] sm:$0x1]
      %v277 = vlaneseq
      %v278 = vshrl.u32 %v277, 7
      %v279 = vsub.s32 0, %v278
      %v280 = vrot.slane %v275, %v279
      %v282 = vadd.f32 %v243, %v280
      %v283 = vadd.f32 %v244, %v280
      %v284 = vadd.f32 %v245, %v280
      %v285 = vadd.f32 %v246, %v280
      %v286 = vadd.f32 %v247, %v280
      %v287 = vadd.f32 %v248, %v280
      %v288 = vadd.f32 %v249, %v280
      %v289 = vadd.f32 %v250, %v280
      %v290 = vadd.f32 %v251, %v280
      %v291 = vadd.f32 %v252, %v280
      %v292 = vadd.f32 %v253, %v280
      %v293 = vadd.f32 %v254, %v280
      %v294 = vadd.f32 %v255, %v280
      %v295 = vadd.f32 %v256, %v280
      %v296 = vadd.f32 %v257, %v280
      %v297 = vadd.f32 %v258, %v280
      %v298 = vadd.f32 %v259, %v280
      %v299 = vadd.f32 %v260, %v280
      %v300 = vadd.f32 %v261, %v280
      %v301 = vadd.f32 %v262, %v280
      %v302 = vadd.f32 %v263, %v280
      %v303 = vadd.f32 %v264, %v280
      %v304 = vadd.f32 %v265, %v280
      %v305 = vadd.f32 %v266, %v280
      %v306 = vadd.f32 %v267, %v280
      %v307 = vadd.f32 %v268, %v280
      %v308 = vadd.f32 %v269, %v280
      %v309 = vadd.f32 %v270, %v280
      %v310 = vadd.f32 %v271, %v280
      %v311 = vadd.f32 %v272, %v280
      %v312 = vadd.f32 %v273, %v280
      %v313 = vadd.f32 %v274, %v280
      %v314 = vmax.f32 %v282, 0.0
      %v315 = vmax.f32 %v283, 0.0
      %v316 = vmax.f32 %v284, 0.0
      %v317 = vmax.f32 %v285, 0.0
      %v318 = vmax.f32 %v286, 0.0
      %v319 = vmax.f32 %v287, 0.0
      %v320 = vmax.f32 %v288, 0.0
      %v321 = vmax.f32 %v289, 0.0
      %v322 = vmax.f32 %v290, 0.0
      %v323 = vmax.f32 %v291, 0.0
      %v324 = vmax.f32 %v292, 0.0
      %v325 = vmax.f32 %v293, 0.0
      %v326 = vmax.f32 %v294, 0.0
      %v327 = vmax.f32 %v295, 0.0
      %v328 = vmax.f32 %v296, 0.0
      %v329 = vmax.f32 %v297, 0.0
      %v330 = vmax.f32 %v298, 0.0
      %v331 = vmax.f32 %v299, 0.0
      %v332 = vmax.f32 %v300, 0.0
      %v333 = vmax.f32 %v301, 0.0
      %v334 = vmax.f32 %v302, 0.0
      %v335 = vmax.f32 %v303, 0.0
      %v336 = vmax.f32 %v304, 0.0
      %v337 = vmax.f32 %v305, 0.0
      %v338 = vmax.f32 %v306, 0.0
      %v339 = vmax.f32 %v307, 0.0
      %v340 = vmax.f32 %v308, 0.0
      %v341 = vmax.f32 %v309, 0.0
      %v342 = vmax.f32 %v310, 0.0
      %v343 = vmax.f32 %v311, 0.0
      %v344 = vmax.f32 %v312, 0.0
      %v345 = vmax.f32 %v313, 0.0
      %v346 = vpack.c.bf16 %v315, %v314
      %v347 = vpack.c.bf16 %v317, %v316
      %v348 = vpack.c.bf16 %v319, %v318
      %v349 = vpack.c.bf16 %v321, %v320
      %v350 = vpack.c.bf16 %v323, %v322
      %v351 = vpack.c.bf16 %v325, %v324
      %v352 = vpack.c.bf16 %v327, %v326
      %v353 = vpack.c.bf16 %v329, %v328
      %v354 = vpack.c.bf16 %v331, %v330
      %v355 = vpack.c.bf16 %v333, %v332
      %v356 = vpack.c.bf16 %v335, %v334
      %v357 = vpack.c.bf16 %v337, %v336
      %v358 = vpack.c.bf16 %v339, %v338
      %v359 = vpack.c.bf16 %v341, %v340
      %v360 = vpack.c.bf16 %v343, %v342
      %v361 = vpack.c.bf16 %v345, %v344
      %362 = vst [vmem:[%s170] sm:$0xf] 0
      %363 = vst [vmem:[%s170 + $0x4] sm:$0xf] 0
      %364 = vst [vmem:[%s170 + $0x8] sm:$0x1] 0
      %365 = vst [vmem:[%s170 + $0xc] sm:$0xf] 0
      %366 = vst [vmem:[%s170 + $0x10] sm:$0xf] 0
      %367 = vst [vmem:[%s170 + $0x14] sm:$0x1] 0
      %368 = vst [vmem:[%s170 + $0x18] sm:$0xf] 0
      %369 = vst [vmem:[%s170 + $0x1c] sm:$0xf] 0
      %370 = vst [vmem:[%s170 + $0x20] sm:$0x1] 0
      %371 = vst [vmem:[%s170 + $0x24] sm:$0xf] 0
      %372 = vst [vmem:[%s170 + $0x28] sm:$0xf] 0
      %373 = vst [vmem:[%s170 + $0x2c] sm:$0x1] 0
      %374 = vst [vmem:[%s170 + $0x30] sm:$0xf] 0
      %375 = vst [vmem:[%s170 + $0x34] sm:$0xf] 0
      %376 = vst [vmem:[%s170 + $0x38] sm:$0x1] 0
      %377 = vst [vmem:[%s170 + $0x3c] sm:$0xf] 0
      %378 = vst [vmem:[%s170 + $0x40] sm:$0xf] 0
      %379 = vst [vmem:[%s170 + $0x44] sm:$0x1] 0
      %380 = vst [vmem:[%s170 + $0x48] sm:$0xf] 0
      %381 = vst [vmem:[%s170 + $0x4c] sm:$0xf] 0
      %382 = vst [vmem:[%s170 + $0x50] sm:$0x1] 0
      %383 = vst [vmem:[%s170 + $0x54] sm:$0xf] 0
      %384 = vst [vmem:[%s170 + $0x58] sm:$0xf] 0
      %385 = vst [vmem:[%s170 + $0x5c] sm:$0x1] 0
      %386 = vst [vmem:[%s170 + $0x60] sm:$0xf] 0
      %387 = vst [vmem:[%s170 + $0x64] sm:$0xf] 0
      %388 = vst [vmem:[%s170 + $0x68] sm:$0x1] 0
      %389 = vst [vmem:[%s170 + $0x6c] sm:$0xf] 0
      %390 = vst [vmem:[%s170 + $0x70] sm:$0xf] 0
      %391 = vst [vmem:[%s170 + $0x74] sm:$0x1] 0
      %392 = vst [vmem:[%s170 + $0x78] sm:$0xf] 0
      %393 = vst [vmem:[%s170 + $0x7c] sm:$0xf] 0
      %394 = vst [vmem:[%s170 + $0x80] sm:$0x1] 0
      %395 = vst [vmem:[%s170 + $0x84] sm:$0xf] 0
      %396 = vst [vmem:[%s170 + $0x88] sm:$0xf] 0
      %397 = vst [vmem:[%s170 + $0x8c] sm:$0x1] 0
      %398 = vst [vmem:[%s170 + $0x90] sm:$0xf] 0
      %399 = vst [vmem:[%s170 + $0x94] sm:$0xf] 0
      %400 = vst [vmem:[%s170 + $0x98] sm:$0x1] 0
      %401 = vst [vmem:[%s170 + $0x9c] sm:$0xf] 0
      %402 = vst [vmem:[%s170 + $0xa0] sm:$0xf] 0
      %403 = vst [vmem:[%s170 + $0xa4] sm:$0x1] 0
      %404 = vst [vmem:[%s170 + $0xa8] sm:$0xf] 0
      %405 = vst [vmem:[%s170 + $0xac] sm:$0xf] 0
      %406 = vst [vmem:[%s170 + $0xb0] sm:$0x1] 0
      %407 = vst [vmem:[%s170 + $0xb4] sm:$0xf] 0
      %408 = vst [vmem:[%s170 + $0xb8] sm:$0xf] 0
      %409 = vst [vmem:[%s170 + $0xbc] sm:$0x1] 0
      %410 = vst [vmem:[%s170 + $0xc0] sm:$0xf] 0
      %411 = vst [vmem:[%s170 + $0xc4] sm:$0xf] 0
      %412 = vst [vmem:[%s170 + $0xc8] sm:$0x1] 0
      %413 = vst [vmem:[%s170 + $0xcc] sm:$0xf] 0
      %414 = vst [vmem:[%s170 + $0xd0] sm:$0xf] 0
      %415 = vst [vmem:[%s170 + $0xd4] sm:$0x1] 0
      %v432 = vunpack.c.l.b16 %v346
      %v433 = vunpack.c.h.b16 %v346
      %v434 = vunpack.c.l.b16 %v347
      %v435 = vunpack.c.h.b16 %v347
      %v436 = vunpack.c.l.b16 %v348
      %v437 = vunpack.c.h.b16 %v348
      %v438 = vunpack.c.l.b16 %v349
      %v439 = vunpack.c.h.b16 %v349
      %v440 = vunpack.c.l.b16 %v350
      %v441 = vunpack.c.h.b16 %v350
      %v442 = vunpack.c.l.b16 %v351
      %v443 = vunpack.c.h.b16 %v351
      %v444 = vunpack.c.l.b16 %v352
      %v445 = vunpack.c.h.b16 %v352
      %v446 = vunpack.c.l.b16 %v353
      %v447 = vunpack.c.h.b16 %v353
      %v448 = vunpack.c.l.b16 %v354
      %v449 = vunpack.c.h.b16 %v354
      %v450 = vunpack.c.l.b16 %v355
      %v451 = vunpack.c.h.b16 %v355
      %v452 = vunpack.c.l.b16 %v356
      %v453 = vunpack.c.h.b16 %v356
      %v454 = vunpack.c.l.b16 %v357
      %v455 = vunpack.c.h.b16 %v357
      %v456 = vunpack.c.l.b16 %v358
      %v457 = vunpack.c.h.b16 %v358
      %v458 = vunpack.c.l.b16 %v359
      %v459 = vunpack.c.h.b16 %v359
      %v460 = vunpack.c.l.b16 %v360
      %v461 = vunpack.c.h.b16 %v360
      %v462 = vunpack.c.l.b16 %v361
      %v463 = vunpack.c.h.b16 %v361
      %v464 = vpack.c.b16 %v432, %v432
      %v465 = vpack.c.b16 %v433, %v433
      %v466 = vpack.c.b16 %v434, %v434
      %v467 = vpack.c.b16 %v435, %v435
      %v468 = vpack.c.b16 %v436, %v436
      %v469 = vpack.c.b16 %v437, %v437
      %v470 = vpack.c.b16 %v438, %v438
      %v471 = vpack.c.b16 %v439, %v439
      %v472 = vpack.c.b16 %v440, %v440
      %v473 = vpack.c.b16 %v441, %v441
      %v474 = vpack.c.b16 %v442, %v442
      %v475 = vpack.c.b16 %v443, %v443
      %v476 = vpack.c.b16 %v444, %v444
      %v477 = vpack.c.b16 %v445, %v445
      %v478 = vpack.c.b16 %v446, %v446
      %v479 = vpack.c.b16 %v447, %v447
      %v480 = vpack.c.b16 %v448, %v448
      %v481 = vpack.c.b16 %v449, %v449
      %v482 = vpack.c.b16 %v450, %v450
      %v483 = vpack.c.b16 %v451, %v451
      %v484 = vpack.c.b16 %v452, %v452
      %v485 = vpack.c.b16 %v453, %v453
      %v486 = vpack.c.b16 %v454, %v454
      %v487 = vpack.c.b16 %v455, %v455
      %v488 = vpack.c.b16 %v456, %v456
      %v489 = vpack.c.b16 %v457, %v457
      %v490 = vpack.c.b16 %v458, %v458
      %v491 = vpack.c.b16 %v459, %v459
      %v492 = vpack.c.b16 %v460, %v460
      %v493 = vpack.c.b16 %v461, %v461
      %v494 = vpack.c.b16 %v462, %v462
      %v495 = vpack.c.b16 %v463, %v463
      %vm496 = vsmask.f32 256
      %vm497 = vsmask.f32 4368
      %vm498 = vmor %vm496, %vm497
      %v500 = vshrl.u32 %v464, 16
      %v502 = vrot.slane %v500, 7
      %v503 = vshll.u32 %v464, 16
      %v505 = vor.u32 %v502, %v503
      %v506 = vrot.slane %v502, 4
      %v508 = vshrl.u32 %v465, 16
      %v510 = vrot.slane %v508, 7
      %v511 = vshll.u32 %v465, 16
      %v513 = vor.u32 %v510, %v511
      %v514 = vsel %vm498, %v506, %v513
      %v515 = vrot.slane %v510, 4
      %v517 = vshrl.u32 %v466, 16
      %v519 = vrot.slane %v517, 7
      %v520 = vshll.u32 %v466, 16
      %v522 = vor.u32 %v519, %v520
      %v523 = vrot.slane %v519, 4
      %v525 = vshrl.u32 %v467, 16
      %v527 = vrot.slane %v525, 7
      %v528 = vshll.u32 %v467, 16
      %v530 = vor.u32 %v527, %v528
      %v531 = vsel %vm498, %v523, %v530
      %v532 = vrot.slane %v527, 4
      %v534 = vshrl.u32 %v468, 16
      %v536 = vrot.slane %v534, 7
      %v537 = vshll.u32 %v468, 16
      %v539 = vor.u32 %v536, %v537
      %v540 = vrot.slane %v536, 4
      %v542 = vshrl.u32 %v469, 16
      %v544 = vrot.slane %v542, 7
      %v545 = vshll.u32 %v469, 16
      %v547 = vor.u32 %v544, %v545
      %v548 = vsel %vm498, %v540, %v547
      %v549 = vrot.slane %v544, 4
      %v551 = vshrl.u32 %v470, 16
      %v553 = vrot.slane %v551, 7
      %v554 = vshll.u32 %v470, 16
      %v556 = vor.u32 %v553, %v554
      %v557 = vrot.slane %v553, 4
      %v559 = vshrl.u32 %v471, 16
      %v561 = vrot.slane %v559, 7
      %v562 = vshll.u32 %v471, 16
      %v564 = vor.u32 %v561, %v562
      %v565 = vsel %vm498, %v557, %v564
      %v566 = vrot.slane %v561, 4
      %v568 = vshrl.u32 %v472, 16
      %v570 = vrot.slane %v568, 7
      %v571 = vshll.u32 %v472, 16
      %v573 = vor.u32 %v570, %v571
      %v574 = vrot.slane %v570, 4
      %v576 = vshrl.u32 %v473, 16
      %v578 = vrot.slane %v576, 7
      %v579 = vshll.u32 %v473, 16
      %v581 = vor.u32 %v578, %v579
      %v582 = vsel %vm498, %v574, %v581
      %v583 = vrot.slane %v578, 4
      %v585 = vshrl.u32 %v474, 16
      %v587 = vrot.slane %v585, 7
      %v588 = vshll.u32 %v474, 16
      %v590 = vor.u32 %v587, %v588
      %v591 = vrot.slane %v587, 4
      %v593 = vshrl.u32 %v475, 16
      %v595 = vrot.slane %v593, 7
      %v596 = vshll.u32 %v475, 16
      %v598 = vor.u32 %v595, %v596
      %v599 = vsel %vm498, %v591, %v598
      %v600 = vrot.slane %v595, 4
      %v602 = vshrl.u32 %v476, 16
      %v604 = vrot.slane %v602, 7
      %v605 = vshll.u32 %v476, 16
      %v607 = vor.u32 %v604, %v605
      %v608 = vrot.slane %v604, 4
      %v610 = vshrl.u32 %v477, 16
      %v612 = vrot.slane %v610, 7
      %v613 = vshll.u32 %v477, 16
      %v615 = vor.u32 %v612, %v613
      %v616 = vsel %vm498, %v608, %v615
      %v617 = vrot.slane %v612, 4
      %v619 = vshrl.u32 %v478, 16
      %v621 = vrot.slane %v619, 7
      %v622 = vshll.u32 %v478, 16
      %v624 = vor.u32 %v621, %v622
      %v625 = vrot.slane %v621, 4
      %v627 = vshrl.u32 %v479, 16
      %v629 = vrot.slane %v627, 7
      %v630 = vshll.u32 %v479, 16
      %v632 = vor.u32 %v629, %v630
      %v633 = vsel %vm498, %v625, %v632
      %v634 = vrot.slane %v629, 4
      %v636 = vshrl.u32 %v480, 16
      %v638 = vrot.slane %v636, 7
      %v639 = vshll.u32 %v480, 16
      %v641 = vor.u32 %v638, %v639
      %v642 = vrot.slane %v638, 4
      %v644 = vshrl.u32 %v481, 16
      %v646 = vrot.slane %v644, 7
      %v647 = vshll.u32 %v481, 16
      %v649 = vor.u32 %v646, %v647
      %v650 = vsel %vm498, %v642, %v649
      %v651 = vrot.slane %v646, 4
      %v653 = vshrl.u32 %v482, 16
      %v655 = vrot.slane %v653, 7
      %v656 = vshll.u32 %v482, 16
      %v658 = vor.u32 %v655, %v656
      %v659 = vrot.slane %v655, 4
      %v661 = vshrl.u32 %v483, 16
      %v663 = vrot.slane %v661, 7
      %v664 = vshll.u32 %v483, 16
      %v666 = vor.u32 %v663, %v664
      %v667 = vsel %vm498, %v659, %v666
      %v668 = vrot.slane %v663, 4
      %v670 = vshrl.u32 %v484, 16
      %v672 = vrot.slane %v670, 7
      %v673 = vshll.u32 %v484, 16
      %v675 = vor.u32 %v672, %v673
      %v676 = vrot.slane %v672, 4
      %v678 = vshrl.u32 %v485, 16
      %v680 = vrot.slane %v678, 7
      %v681 = vshll.u32 %v485, 16
      %v683 = vor.u32 %v680, %v681
      %v684 = vsel %vm498, %v676, %v683
      %v685 = vrot.slane %v680, 4
      %v687 = vshrl.u32 %v486, 16
      %v689 = vrot.slane %v687, 7
      %v690 = vshll.u32 %v486, 16
      %v692 = vor.u32 %v689, %v690
      %v693 = vrot.slane %v689, 4
      %v695 = vshrl.u32 %v487, 16
      %v697 = vrot.slane %v695, 7
      %v698 = vshll.u32 %v487, 16
      %v700 = vor.u32 %v697, %v698
      %v701 = vsel %vm498, %v693, %v700
      %v702 = vrot.slane %v697, 4
      %v704 = vshrl.u32 %v488, 16
      %v706 = vrot.slane %v704, 7
      %v707 = vshll.u32 %v488, 16
      %v709 = vor.u32 %v706, %v707
      %v710 = vrot.slane %v706, 4
      %v712 = vshrl.u32 %v489, 16
      %v714 = vrot.slane %v712, 7
      %v715 = vshll.u32 %v489, 16
      %v717 = vor.u32 %v714, %v715
      %v718 = vsel %vm498, %v710, %v717
      %v719 = vrot.slane %v714, 4
      %v721 = vshrl.u32 %v490, 16
      %v723 = vrot.slane %v721, 7
      %v724 = vshll.u32 %v490, 16
      %v726 = vor.u32 %v723, %v724
      %v727 = vrot.slane %v723, 4
      %v729 = vshrl.u32 %v491, 16
      %v731 = vrot.slane %v729, 7
      %v732 = vshll.u32 %v491, 16
      %v734 = vor.u32 %v731, %v732
      %v735 = vsel %vm498, %v727, %v734
      %v736 = vrot.slane %v731, 4
      %v738 = vshrl.u32 %v492, 16
      %v740 = vrot.slane %v738, 7
      %v741 = vshll.u32 %v492, 16
      %v743 = vor.u32 %v740, %v741
      %v744 = vrot.slane %v740, 4
      %v746 = vshrl.u32 %v493, 16
      %v748 = vrot.slane %v746, 7
      %v749 = vshll.u32 %v493, 16
      %v751 = vor.u32 %v748, %v749
      %v752 = vsel %vm498, %v744, %v751
      %v753 = vrot.slane %v748, 4
      %v755 = vshrl.u32 %v494, 16
      %v757 = vrot.slane %v755, 7
      %v758 = vshll.u32 %v494, 16
      %v760 = vor.u32 %v757, %v758
      %v761 = vrot.slane %v757, 4
      %v763 = vshrl.u32 %v495, 16
      %v765 = vrot.slane %v763, 7
      %v766 = vshll.u32 %v495, 16
      %v768 = vor.u32 %v765, %v766
      %v769 = vsel %vm498, %v761, %v768
      %v770 = vrot.slane %v765, 4
      %s819 = scalar_lea.vmem %s170, 12
      %vm820 = vcmask 1043456
      %vm821 = vsmask.f32 7938
      %vm822 = vmand %vm820, %vm821
      %v823 = vld [vmem:[%s819] sm:$0xf]
      %v824 = vsel %vm822, %v505, %v823
      %825 = vst [vmem:[%s819] sm:$0xf] %v824
      %826 = vst [vmem:[%s819 + $0x4] sm:$0xf] %v514
      %vm827 = vcmask 1040384
      %vm828 = vmand %vm827, %vm496
      %v829 = vld [vmem:[%s819 + $0x8] sm:$0x1]
      %v830 = vsel %vm828, %v515, %v829
      %831 = vst [vmem:[%s819 + $0x8] sm:$0x1] %v830
      %v832 = vld [vmem:[%s819 + $0xc] sm:$0xf]
      %v833 = vsel %vm822, %v522, %v832
      %834 = vst [vmem:[%s819 + $0xc] sm:$0xf] %v833
      %835 = vst [vmem:[%s819 + $0x10] sm:$0xf] %v531
      %v836 = vld [vmem:[%s819 + $0x14] sm:$0x1]
      %v837 = vsel %vm828, %v532, %v836
      %838 = vst [vmem:[%s819 + $0x14] sm:$0x1] %v837
      %v839 = vld [vmem:[%s819 + $0x18] sm:$0xf]
      %v840 = vsel %vm822, %v539, %v839
      %841 = vst [vmem:[%s819 + $0x18] sm:$0xf] %v840
      %842 = vst [vmem:[%s819 + $0x1c] sm:$0xf] %v548
      %v843 = vld [vmem:[%s819 + $0x20] sm:$0x1]
      %v844 = vsel %vm828, %v549, %v843
      %845 = vst [vmem:[%s819 + $0x20] sm:$0x1] %v844
      %v846 = vld [vmem:[%s819 + $0x24] sm:$0xf]
      %v847 = vsel %vm822, %v556, %v846
      %848 = vst [vmem:[%s819 + $0x24] sm:$0xf] %v847
      %849 = vst [vmem:[%s819 + $0x28] sm:$0xf] %v565
      %v850 = vld [vmem:[%s819 + $0x2c] sm:$0x1]
      %v851 = vsel %vm828, %v566, %v850
      %852 = vst [vmem:[%s819 + $0x2c] sm:$0x1] %v851
      %v853 = vld [vmem:[%s819 + $0x30] sm:$0xf]
      %v854 = vsel %vm822, %v573, %v853
      %855 = vst [vmem:[%s819 + $0x30] sm:$0xf] %v854
      %856 = vst [vmem:[%s819 + $0x34] sm:$0xf] %v582
      %v857 = vld [vmem:[%s819 + $0x38] sm:$0x1]
      %v858 = vsel %vm828, %v583, %v857
      %859 = vst [vmem:[%s819 + $0x38] sm:$0x1] %v858
      %v860 = vld [vmem:[%s819 + $0x3c] sm:$0xf]
      %v861 = vsel %vm822, %v590, %v860
      %862 = vst [vmem:[%s819 + $0x3c] sm:$0xf] %v861
      %863 = vst [vmem:[%s819 + $0x40] sm:$0xf] %v599
      %v864 = vld [vmem:[%s819 + $0x44] sm:$0x1]
      %v865 = vsel %vm828, %v600, %v864
      %866 = vst [vmem:[%s819 + $0x44] sm:$0x1] %v865
      %v867 = vld [vmem:[%s819 + $0x48] sm:$0xf]
      %v868 = vsel %vm822, %v607, %v867
      %869 = vst [vmem:[%s819 + $0x48] sm:$0xf] %v868
      %870 = vst [vmem:[%s819 + $0x4c] sm:$0xf] %v616
      %v871 = vld [vmem:[%s819 + $0x50] sm:$0x1]
      %v872 = vsel %vm828, %v617, %v871
      %873 = vst [vmem:[%s819 + $0x50] sm:$0x1] %v872
      %v874 = vld [vmem:[%s819 + $0x54] sm:$0xf]
      %v875 = vsel %vm822, %v624, %v874
      %876 = vst [vmem:[%s819 + $0x54] sm:$0xf] %v875
      %877 = vst [vmem:[%s819 + $0x58] sm:$0xf] %v633
      %v878 = vld [vmem:[%s819 + $0x5c] sm:$0x1]
      %v879 = vsel %vm828, %v634, %v878
      %880 = vst [vmem:[%s819 + $0x5c] sm:$0x1] %v879
      %v881 = vld [vmem:[%s819 + $0x60] sm:$0xf]
      %v882 = vsel %vm822, %v641, %v881
      %883 = vst [vmem:[%s819 + $0x60] sm:$0xf] %v882
      %884 = vst [vmem:[%s819 + $0x64] sm:$0xf] %v650
      %v885 = vld [vmem:[%s819 + $0x68] sm:$0x1]
      %v886 = vsel %vm828, %v651, %v885
      %887 = vst [vmem:[%s819 + $0x68] sm:$0x1] %v886
      %v888 = vld [vmem:[%s819 + $0x6c] sm:$0xf]
      %v889 = vsel %vm822, %v658, %v888
      %890 = vst [vmem:[%s819 + $0x6c] sm:$0xf] %v889
      %891 = vst [vmem:[%s819 + $0x70] sm:$0xf] %v667
      %v892 = vld [vmem:[%s819 + $0x74] sm:$0x1]
      %v893 = vsel %vm828, %v668, %v892
      %894 = vst [vmem:[%s819 + $0x74] sm:$0x1] %v893
      %v895 = vld [vmem:[%s819 + $0x78] sm:$0xf]
      %v896 = vsel %vm822, %v675, %v895
      %897 = vst [vmem:[%s819 + $0x78] sm:$0xf] %v896
      %898 = vst [vmem:[%s819 + $0x7c] sm:$0xf] %v684
      %v899 = vld [vmem:[%s819 + $0x80] sm:$0x1]
      %v900 = vsel %vm828, %v685, %v899
      %901 = vst [vmem:[%s819 + $0x80] sm:$0x1] %v900
      %v902 = vld [vmem:[%s819 + $0x84] sm:$0xf]
      %v903 = vsel %vm822, %v692, %v902
      %904 = vst [vmem:[%s819 + $0x84] sm:$0xf] %v903
      %905 = vst [vmem:[%s819 + $0x88] sm:$0xf] %v701
      %v906 = vld [vmem:[%s819 + $0x8c] sm:$0x1]
      %v907 = vsel %vm828, %v702, %v906
      %908 = vst [vmem:[%s819 + $0x8c] sm:$0x1] %v907
      %v909 = vld [vmem:[%s819 + $0x90] sm:$0xf]
      %v910 = vsel %vm822, %v709, %v909
      %911 = vst [vmem:[%s819 + $0x90] sm:$0xf] %v910
      %912 = vst [vmem:[%s819 + $0x94] sm:$0xf] %v718
      %v913 = vld [vmem:[%s819 + $0x98] sm:$0x1]
      %v914 = vsel %vm828, %v719, %v913
      %915 = vst [vmem:[%s819 + $0x98] sm:$0x1] %v914
      %v916 = vld [vmem:[%s819 + $0x9c] sm:$0xf]
      %v917 = vsel %vm822, %v726, %v916
      %918 = vst [vmem:[%s819 + $0x9c] sm:$0xf] %v917
      %919 = vst [vmem:[%s819 + $0xa0] sm:$0xf] %v735
      %v920 = vld [vmem:[%s819 + $0xa4] sm:$0x1]
      %v921 = vsel %vm828, %v736, %v920
      %922 = vst [vmem:[%s819 + $0xa4] sm:$0x1] %v921
      %v923 = vld [vmem:[%s819 + $0xa8] sm:$0xf]
      %v924 = vsel %vm822, %v743, %v923
      %925 = vst [vmem:[%s819 + $0xa8] sm:$0xf] %v924
      %926 = vst [vmem:[%s819 + $0xac] sm:$0xf] %v752
      %v927 = vld [vmem:[%s819 + $0xb0] sm:$0x1]
      %v928 = vsel %vm828, %v753, %v927
      %929 = vst [vmem:[%s819 + $0xb0] sm:$0x1] %v928
      %v930 = vld [vmem:[%s819 + $0xb4] sm:$0xf]
      %v931 = vsel %vm822, %v760, %v930
      %932 = vst [vmem:[%s819 + $0xb4] sm:$0xf] %v931
      %933 = vst [vmem:[%s819 + $0xb8] sm:$0xf] %v769
      %v934 = vld [vmem:[%s819 + $0xbc] sm:$0x1]
      %v935 = vsel %vm828, %v770, %v934
      %936 = vst [vmem:[%s819 + $0xbc] sm:$0x1] %v935
      %p937 = scmp.lt.s32.totalorder %s14, 1
      %s938 = scalar_select %p937, %s14, 1
      %s939 = smul.addr %s938, 54
      %s940 = smul.addr %s939, 4
      %s941 = scalar_lea.vmem %s3, %s940
      // Predicated region
      $region33: #{preact_block_forward.6} parent=31 // pred_check
        %p942 = pneg %p100
      $region34: #{preact_block_forward.6} parent=31 // pred_check_branch
        %944 = sbr.rel (%p942) target = $region36
      $region35: #{preact_block_forward.6} parent=31 // pred_region
        _
      $region36: #{preact_block_forward.6} parent=31 // pred_fallthru
        _
    $region32: #{preact_block_forward.6} parent=5 // pred_fallthru
      _
    %p945 = scmp.le.s32.totalorder 2, %s9
    // Predicated region
    $region37: #{preact_block_forward.6} parent=5 // pred_check
      %p946 = pneg %p945
    $region38: #{preact_block_forward.6} parent=5 // pred_check_branch
      %948 = sbr.rel (%p946) target = $region40
    $region39: #{preact_block_forward.6} parent=5 // pred_region
      %s949 = ssub.s32 %s9, 2
      // Predicated region
      $region41: #{preact_block_forward.6} parent=39 // pred_check
        %p950 = pneg %p106
      $region42: #{preact_block_forward.6} parent=39 // pred_check_branch
        %952 = sbr.rel (%p950) target = $region44
      $region43: #{preact_block_forward.6} parent=39 // pred_region
        %p953 = scmp.lt.s32.totalorder %s15, 1
        %s954 = scalar_select %p953, %s15, 1
        %s955 = smul.addr %s954, 54
        %s956 = smul.addr %s955, 4
        %s957 = scalar_lea.vmem %s3, %s956
      $region44: #{preact_block_forward.6} parent=39 // pred_fallthru
        _
    $region40: #{preact_block_forward.6} parent=5 // pred_fallthru
      _
  $region6: #{preact_block_forward.6} parent=0 // loop_footer
    %s13 = sadd.s32 1, %s9
  $region7: #{preact_block_forward.6} parent=0 // loop_footer_branch
    %8 = sbr.rel target = $region3
  $region8: #{preact_block_forward.6} parent=0 // loop_exit
    _

// kernel: preact_block_forward.8
$region0: #{preact_block_forward.8}
  #allocation0 [shape = 'u32[]', space=smem, size = 0x4, offset = 0x4, fixed_abs, tag = 'smem constant byte address 0x4 - core index']
  #allocation1 [shape = 'u32[144,128]{1,0:T(1,128)}', space=vmem, size = 0x12000, scoped, tag = 'internal scratch']
  %s0 = inlined_call_operand.vmem [shape: bf16[2,8,8,128], index: 0, kind: input, shape index: {}]
  %s1 = inlined_call_operand.vmem [shape: f32[1,128], index: 1, kind: input, shape index: {}]
  %s2 = inlined_call_operand.vmem [shape: f32[1,128], index: 2, kind: input, shape index: {}]
  %s3 = inlined_call_operand.vmem [shape: bf16[2,10,10,128], index: 3, kind: output, shape index: {}]
  %s4 = sld [smem:[#allocation0]]
  $region45: #{preact_block_forward.8} parent=0
    _
  %s6 = ssub.s32 1, %s4
  %s7 = scalar_select 0, %s6, %s4
  loop: start=0, step=1, limit=4
  $region2: #{preact_block_forward.8} parent=0 // loop_pre_header
    _
  $region3: #{preact_block_forward.8} parent=0 // loop_header
    %s9 = sphi 0, %s13
    %p10 = scmp.ge.s32.totalorder %s9, 4
    %s19 = sphi 0, %s21
    %s22 = sphi 0, %s19
    %s23 = sphi 0, %s22
    %s39 = sphi 0, %s23
    %s43 = sphi 0, %s43
    %s45 = sphi 0, %s43
    %s46 = sphi 0, %s45
    %s60 = sphi 0, %s46
    %s64 = sphi 0, %s64
    %s66 = sphi 0, %s64
    %s67 = sphi 0, %s66
    %s81 = sphi 0, %s67
    %s87 = sphi 0, %s89
    %s90 = sphi 0, %s87
    %s91 = sphi 0, %s90
    %s107 = sphi 0, %s91
  $region4: #{preact_block_forward.8} parent=0 // loop_header_branch
    %12 = sbr.rel (%p10) target = $region8
  $region5: #{preact_block_forward.8} parent=0 // loop_body
    %s14 = ssub.s32 %s9, 1
    %s15 = ssub.s32 %s9, 2
    %s16 = sadd.s32 %s9, 1
    %s17 = ssub.s32 %s9, %s16
    %p18 = scmp.eq.s32.totalorder %s17, 0
    %s20 = sadd.s32 %s19, 1
    %s21 = scalar_select %p18, %s19, %s20
    %p24 = pneg %p18
    %p25 = scmp.eq.s32.totalorder %s9, 1
    %p26 = por %p24, %p25
    %p27 = scmp.ne.s32.totalorder %s19, %s22
    %p28 = scmp.eq.s32.totalorder %s9, 0
    %p29 = por %p27, %p28
    %p30 = scmp.ne.s32.totalorder %s19, %s22
    %p31 = scmp.eq.s32.totalorder %s14, 1
    %p32 = por %p30, %p31
    %p33 = scmp.ne.s32.totalorder %s22, %s23
    %p34 = scmp.eq.s32.totalorder %s14, 0
    %p35 = por %p33, %p34
    %p36 = scmp.ne.s32.totalorder %s22, %s23
    %p37 = scmp.eq.s32.totalorder %s15, 1
    %p38 = por %p36, %p37
    %p40 = scmp.ne.s32.totalorder %s23, %s39
    %p41 = scmp.eq.s32.totalorder %s15, 0
    %p42 = por %p40, %p41
    %s44 = sadd.s32 %s43, 1
    %p47 = scmp.eq.s32.totalorder %s9, 1
    %p48 = scmp.ne.s32.totalorder %s43, %s45
    %p49 = scmp.eq.s32.totalorder %s9, 0
    %p50 = por %p48, %p49
    %p51 = scmp.ne.s32.totalorder %s43, %s45
    %p52 = scmp.eq.s32.totalorder %s14, 1
    %p53 = por %p51, %p52
    %p54 = scmp.ne.s32.totalorder %s45, %s46
    %p55 = scmp.eq.s32.totalorder %s14, 0
    %p56 = por %p54, %p55
    %p57 = scmp.ne.s32.totalorder %s45, %s46
    %p58 = scmp.eq.s32.totalorder %s15, 1
    %p59 = por %p57, %p58
    %p61 = scmp.ne.s32.totalorder %s46, %s60
    %p62 = scmp.eq.s32.totalorder %s15, 0
    %p63 = por %p61, %p62
    %s65 = sadd.s32 %s64, 1
    %p68 = scmp.eq.s32.totalorder %s9, 1
    %p69 = scmp.ne.s32.totalorder %s64, %s66
    %p70 = scmp.eq.s32.totalorder %s9, 0
    %p71 = por %p69, %p70
    %p72 = scmp.ne.s32.totalorder %s64, %s66
    %p73 = scmp.eq.s32.totalorder %s14, 1
    %p74 = por %p72, %p73
    %p75 = scmp.ne.s32.totalorder %s66, %s67
    %p76 = scmp.eq.s32.totalorder %s14, 0
    %p77 = por %p75, %p76
    %p78 = scmp.ne.s32.totalorder %s66, %s67
    %p79 = scmp.eq.s32.totalorder %s15, 1
    %p80 = por %p78, %p79
    %p82 = scmp.ne.s32.totalorder %s67, %s81
    %p83 = scmp.eq.s32.totalorder %s15, 0
    %p84 = por %p82, %p83
    %s85 = ssub.s32 %s9, %s16
    %p86 = scmp.eq.s32.totalorder %s85, 0
    %s88 = sadd.s32 %s87, 1
    %s89 = scalar_select %p86, %s87, %s88
    %p92 = pneg %p86
    %p93 = scmp.eq.s32.totalorder %s9, 1
    %p94 = por %p92, %p93
    %p95 = scmp.ne.s32.totalorder %s87, %s90
    %p96 = scmp.eq.s32.totalorder %s9, 0
    %p97 = por %p95, %p96
    %p98 = scmp.ne.s32.totalorder %s87, %s90
    %p99 = scmp.eq.s32.totalorder %s14, 1
    %p100 = por %p98, %p99
    %p101 = scmp.ne.s32.totalorder %s90, %s91
    %p102 = scmp.eq.s32.totalorder %s14, 0
    %p103 = por %p101, %p102
    %p104 = scmp.ne.s32.totalorder %s90, %s91
    %p105 = scmp.eq.s32.totalorder %s15, 1
    %p106 = por %p104, %p105
    %p108 = scmp.ne.s32.totalorder %s91, %s107
    %p109 = scmp.eq.s32.totalorder %s15, 0
    %p110 = por %p108, %p109
    %p111 = scmp.le.s32.totalorder 1, %s9
    %p112 = scmp.lt.s32.totalorder %s9, 3
    %p113 = pnand %p111, %p112
    %p114 = pneg %p113
    // Predicated region
    $region9: #{preact_block_forward.8} parent=5 // pred_check
      _
    $region10: #{preact_block_forward.8} parent=5 // pred_check_branch
      %116 = sbr.rel (%p113) target = $region12
    $region11: #{preact_block_forward.8} parent=5 // pred_region
      %s117 = ssub.s32 %s9, 1
      // Predicated region
      $region13: #{preact_block_forward.8} parent=11 // pred_check
        %p118 = pneg %p56
      $region14: #{preact_block_forward.8} parent=11 // pred_check_branch
        %120 = sbr.rel (%p118) target = $region16
      $region15: #{preact_block_forward.8} parent=11 // pred_region
        _
      $region16: #{preact_block_forward.8} parent=11 // pred_fallthru
        _
      // Predicated region
      $region17: #{preact_block_forward.8} parent=11 // pred_check
        %p121 = pneg %p77
      $region18: #{preact_block_forward.8} parent=11 // pred_check_branch
        %123 = sbr.rel (%p121) target = $region20
      $region19: #{preact_block_forward.8} parent=11 // pred_region
        _
      $region20: #{preact_block_forward.8} parent=11 // pred_fallthru
        _
    $region12: #{preact_block_forward.8} parent=5 // pred_fallthru
      _
    %p124 = scmp.lt.s32.totalorder %s9, 2
    // Predicated region
    $region21: #{preact_block_forward.8} parent=5 // pred_check
      %p125 = pneg %p124
    $region22: #{preact_block_forward.8} parent=5 // pred_check_branch
      %127 = sbr.rel (%p125) target = $region24
    $region23: #{preact_block_forward.8} parent=5 // pred_region
      // Predicated region
      $region25: #{preact_block_forward.8} parent=23 // pred_check
        %p128 = pneg %p29
      $region26: #{preact_block_forward.8} parent=23 // pred_check_branch
        %130 = sbr.rel (%p128) target = $region28
      $region27: #{preact_block_forward.8} parent=23 // pred_region
        %p131 = scmp.lt.s32.totalorder %s9, 1
        %s132 = scalar_select %p131, %s9, 1
        %s133 = smul.addr %s132, 8
        %s134 = smul.addr %s133, 4
        %s135 = scalar_lea.vmem %s0, %s134
      $region28: #{preact_block_forward.8} parent=23 // pred_fallthru
        _
    $region24: #{preact_block_forward.8} parent=5 // pred_fallthru
      _
    %p136 = scmp.le.s32.totalorder 1, %s9
    %p137 = scmp.lt.s32.totalorder %s9, 3
    %p138 = pnand %p136, %p137
    %p139 = pneg %p138
    // Predicated region
    $region29: #{preact_block_forward.8} parent=5 // pred_check
      _
    $region30: #{preact_block_forward.8} parent=5 // pred_check_branch
      %141 = sbr.rel (%p138) target = $region32
    $region31: #{preact_block_forward.8} parent=5 // pred_region
      %s142 = ssub.s32 %s9, 1
      %p143 = scmp.lt.s32.totalorder %s14, 1
      %s144 = scalar_select %p143, %s14, 1
      %s145 = smul.addr %s144, 8
      %s146 = smul.addr %s145, 4
      %s147 = scalar_lea.vmem %s0, %s146
      %p148 = pneg %p35
      %p149 = pneg %p32
      %p150 = pneg %p56
      %p151 = pneg %p53
      %p152 = pneg %p77
      %p153 = pneg %p74
      %p154 = pneg %p103
      %p155 = pneg %p100
      %p156 = scmp.lt.s32.totalorder %s14, 1
      %s157 = scalar_select %p156, %s14, 1
      %s158 = smul.addr %s157, 20
      %s159 = smul.addr %s158, 4
      %s160 = scalar_lea.vmem %s3, %s159
      %p161 = scmp.lt.s32.totalorder %s14, 1
      %s162 = scalar_select %p161, %s14, 1
      %s163 = smul.addr %s162, 8
      %s164 = smul.addr %s163, 4
      %s165 = scalar_lea.vmem %s0, %s164
      %p166 = scmp.lt.s32.totalorder %s14, 1
      %s167 = scalar_select %p166, %s14, 1
      %s168 = smul.addr %s167, 20
      %s169 = smul.addr %s168, 4
      %s170 = scalar_lea.vmem %s3, %s169
      %v172 = vld [vmem:[%s165] sm:$0xf]
      %v173 = vld [vmem:[%s165 + $0x4] sm:$0xf]
      %v174 = vld [vmem:[%s165 + $0x8] sm:$0xf]
      %v175 = vld [vmem:[%s165 + $0xc] sm:$0xf]
      %v176 = vld [vmem:[%s165 + $0x10] sm:$0xf]
      %v177 = vld [vmem:[%s165 + $0x14] sm:$0xf]
      %v178 = vld [vmem:[%s165 + $0x18] sm:$0xf]
      %v179 = vld [vmem:[%s165 + $0x1c] sm:$0xf]
      %v180 = vunpack.c.l.bf16 %v172
      %v181 = vunpack.c.l.bf16 %v173
      %v182 = vunpack.c.l.bf16 %v174
      %v183 = vunpack.c.l.bf16 %v175
      %v184 = vunpack.c.l.bf16 %v176
      %v185 = vunpack.c.l.bf16 %v177
      %v186 = vunpack.c.l.bf16 %v178
      %v187 = vunpack.c.l.bf16 %v179
      %v188 = vld [vmem:[%s1] sm:$0x1]
      %v190 = vlaneseq
      %v191 = vshrl.u32 %v190, 7
      %v192 = vsub.s32 0, %v191
      %v193 = vrot.slane %v188, %v192
      %v195 = vmul.f32 %v180, %v193
      %v196 = vmul.f32 %v181, %v193
      %v197 = vmul.f32 %v182, %v193
      %v198 = vmul.f32 %v183, %v193
      %v199 = vmul.f32 %v184, %v193
      %v200 = vmul.f32 %v185, %v193
      %v201 = vmul.f32 %v186, %v193
      %v202 = vmul.f32 %v187, %v193
      %v203 = vld [vmem:[%s2] sm:$0x1]
      %v205 = vlaneseq
      %v206 = vshrl.u32 %v205, 7
      %v207 = vsub.s32 0, %v206
      %v208 = vrot.slane %v203, %v207
      %v210 = vadd.f32 %v195, %v208
      %v211 = vadd.f32 %v196, %v208
      %v212 = vadd.f32 %v197, %v208
      %v213 = vadd.f32 %v198, %v208
      %v214 = vadd.f32 %v199, %v208
      %v215 = vadd.f32 %v200, %v208
      %v216 = vadd.f32 %v201, %v208
      %v217 = vadd.f32 %v202, %v208
      %v218 = vmax.f32 %v210, 0.0
      %v219 = vmax.f32 %v211, 0.0
      %v220 = vmax.f32 %v212, 0.0
      %v221 = vmax.f32 %v213, 0.0
      %v222 = vmax.f32 %v214, 0.0
      %v223 = vmax.f32 %v215, 0.0
      %v224 = vmax.f32 %v216, 0.0
      %v225 = vmax.f32 %v217, 0.0
      %v226 = vpack.c.bf16 %v218, %v218
      %v227 = vpack.c.bf16 %v219, %v219
      %v228 = vpack.c.bf16 %v220, %v220
      %v229 = vpack.c.bf16 %v221, %v221
      %v230 = vpack.c.bf16 %v222, %v222
      %v231 = vpack.c.bf16 %v223, %v223
      %v232 = vpack.c.bf16 %v224, %v224
      %v233 = vpack.c.bf16 %v225, %v225
      %234 = vst [vmem:[%s170] sm:$0xf] 0
      %235 = vst [vmem:[%s170 + $0x4] sm:$0x1] 0
      %236 = vst [vmem:[%s170 + $0x8] sm:$0xf] 0
      %237 = vst [vmem:[%s170 + $0xc] sm:$0x1] 0
      %238 = vst [vmem:[%s170 + $0x10] sm:$0xf] 0
      %239 = vst [vmem:[%s170 + $0x14] sm:$0x1] 0
      %240 = vst [vmem:[%s170 + $0x18] sm:$0xf] 0
      %241 = vst [vmem:[%s170 + $0x1c] sm:$0x1] 0
      %242 = vst [vmem:[%s170 + $0x20] sm:$0xf] 0
      %243 = vst [vmem:[%s170 + $0x24] sm:$0x1] 0
      %244 = vst [vmem:[%s170 + $0x28] sm:$0xf] 0
      %245 = vst [vmem:[%s170 + $0x2c] sm:$0x1] 0
      %246 = vst [vmem:[%s170 + $0x30] sm:$0xf] 0
      %247 = vst [vmem:[%s170 + $0x34] sm:$0x1] 0
      %248 = vst [vmem:[%s170 + $0x38] sm:$0xf] 0
      %249 = vst [vmem:[%s170 + $0x3c] sm:$0x1] 0
      %250 = vst [vmem:[%s170 + $0x40] sm:$0xf] 0
      %251 = vst [vmem:[%s170 + $0x44] sm:$0x1] 0
      %252 = vst [vmem:[%s170 + $0x48] sm:$0xf] 0
      %253 = vst [vmem:[%s170 + $0x4c] sm:$0x1] 0
      %v262 = vunpack.c.l.b16 %v226
      %v263 = vunpack.c.l.b16 %v227
      %v264 = vunpack.c.l.b16 %v228
      %v265 = vunpack.c.l.b16 %v229
      %v266 = vunpack.c.l.b16 %v230
      %v267 = vunpack.c.l.b16 %v231
      %v268 = vunpack.c.l.b16 %v232
      %v269 = vunpack.c.l.b16 %v233
      %v270 = vpack.c.b16 %v262, %v262
      %v271 = vpack.c.b16 %v263, %v263
      %v272 = vpack.c.b16 %v264, %v264
      %v273 = vpack.c.b16 %v265, %v265
      %v274 = vpack.c.b16 %v266, %v266
      %v275 = vpack.c.b16 %v267, %v267
      %v276 = vpack.c.b16 %v268, %v268
      %v277 = vpack.c.b16 %v269, %v269
      %v279 = vshrl.u32 %v270, 16
      %v281 = vrot.slane %v279, 7
      %v282 = vshll.u32 %v270, 16
      %v284 = vor.u32 %v281, %v282
      %v285 = vrot.slane %v281, 4
      %v287 = vshrl.u32 %v271, 16
      %v289 = vrot.slane %v287, 7
      %v290 = vshll.u32 %v271, 16
      %v292 = vor.u32 %v289, %v290
      %v293 = vrot.slane %v289, 4
      %v295 = vshrl.u32 %v272, 16
      %v297 = vrot.slane %v295, 7
      %v298 = vshll.u32 %v272, 16
      %v300 = vor.u32 %v297, %v298
      %v301 = vrot.slane %v297, 4
      %v303 = vshrl.u32 %v273, 16
      %v305 = vrot.slane %v303, 7
      %v306 = vshll.u32 %v273, 16
      %v308 = vor.u32 %v305, %v306
      %v309 = vrot.slane %v305, 4
      %v311 = vshrl.u32 %v274, 16
      %v313 = vrot.slane %v311, 7
      %v314 = vshll.u32 %v274, 16
      %v316 = vor.u32 %v313, %v314
      %v317 = vrot.slane %v313, 4
      %v319 = vshrl.u32 %v275, 16
      %v321 = vrot.slane %v319, 7
      %v322 = vshll.u32 %v275, 16
      %v324 = vor.u32 %v321, %v322
      %v325 = vrot.slane %v321, 4
      %v327 = vshrl.u32 %v276, 16
      %v329 = vrot.slane %v327, 7
      %v330 = vshll.u32 %v276, 16
      %v332 = vor.u32 %v329, %v330
      %v333 = vrot.slane %v329, 4
      %v335 = vshrl.u32 %v277, 16
      %v337 = vrot.slane %v335, 7
      %v338 = vshll.u32 %v277, 16
      %v340 = vor.u32 %v337, %v338
      %v341 = vrot.slane %v337, 4
      %s358 = scalar_lea.vmem %s170, 8
      %vm359 = vcmask 1043456
      %vm360 = vsmask.f32 7938
      %vm361 = vmand %vm359, %vm360
      %v362 = vld [vmem:[%s358] sm:$0xf]
      %v363 = vsel %vm361, %v284, %v362
      %364 = vst [vmem:[%s358] sm:$0xf] %v363
      %vm365 = vcmask 1040384
      %vm366 = vsmask.f32 256
      %vm367 = vmand %vm365, %vm366
      %v368 = vld [vmem:[%s358 + $0x4] sm:$0x1]
      %v369 = vsel %vm367, %v285, %v368
      %370 = vst [vmem:[%s358 + $0x4] sm:$0x1] %v369
      %v371 = vld [vmem:[%s358 + $0x8] sm:$0xf]
      %v372 = vsel %vm361, %v292, %v371
      %373 = vst [vmem:[%s358 + $0x8] sm:$0xf] %v372
      %v374 = vld [vmem:[%s358 + $0xc] sm:$0x1]
      %v375 = vsel %vm367, %v293, %v374
      %376 = vst [vmem:[%s358 + $0xc] sm:$0x1] %v375
      %v377 = vld [vmem:[%s358 + $0x10] sm:$0xf]
      %v378 = vsel %vm361, %v300, %v377
      %379 = vst [vmem:[%s358 + $0x10] sm:$0xf] %v378
      %v380 = vld [vmem:[%s358 + $0x14] sm:$0x1]
      %v381 = vsel %vm367, %v301, %v380
      %382 = vst [vmem:[%s358 + $0x14] sm:$0x1] %v381
      %v383 = vld [vmem:[%s358 + $0x18] sm:$0xf]
      %v384 = vsel %vm361, %v308, %v383
      %385 = vst [vmem:[%s358 + $0x18] sm:$0xf] %v384
      %v386 = vld [vmem:[%s358 + $0x1c] sm:$0x1]
      %v387 = vsel %vm367, %v309, %v386
      %388 = vst [vmem:[%s358 + $0x1c] sm:$0x1] %v387
      %v389 = vld [vmem:[%s358 + $0x20] sm:$0xf]
      %v390 = vsel %vm361, %v316, %v389
      %391 = vst [vmem:[%s358 + $0x20] sm:$0xf] %v390
      %v392 = vld [vmem:[%s358 + $0x24] sm:$0x1]
      %v393 = vsel %vm367, %v317, %v392
      %394 = vst [vmem:[%s358 + $0x24] sm:$0x1] %v393
      %v395 = vld [vmem:[%s358 + $0x28] sm:$0xf]
      %v396 = vsel %vm361, %v324, %v395
      %397 = vst [vmem:[%s358 + $0x28] sm:$0xf] %v396
      %v398 = vld [vmem:[%s358 + $0x2c] sm:$0x1]
      %v399 = vsel %vm367, %v325, %v398
      %400 = vst [vmem:[%s358 + $0x2c] sm:$0x1] %v399
      %v401 = vld [vmem:[%s358 + $0x30] sm:$0xf]
      %v402 = vsel %vm361, %v332, %v401
      %403 = vst [vmem:[%s358 + $0x30] sm:$0xf] %v402
      %v404 = vld [vmem:[%s358 + $0x34] sm:$0x1]
      %v405 = vsel %vm367, %v333, %v404
      %406 = vst [vmem:[%s358 + $0x34] sm:$0x1] %v405
      %v407 = vld [vmem:[%s358 + $0x38] sm:$0xf]
      %v408 = vsel %vm361, %v340, %v407
      %409 = vst [vmem:[%s358 + $0x38] sm:$0xf] %v408
      %v410 = vld [vmem:[%s358 + $0x3c] sm:$0x1]
      %v411 = vsel %vm367, %v341, %v410
      %412 = vst [vmem:[%s358 + $0x3c] sm:$0x1] %v411
      %p413 = scmp.lt.s32.totalorder %s14, 1
      %s414 = scalar_select %p413, %s14, 1
      %s415 = smul.addr %s414, 20
      %s416 = smul.addr %s415, 4
      %s417 = scalar_lea.vmem %s3, %s416
      // Predicated region
      $region33: #{preact_block_forward.8} parent=31 // pred_check
        %p418 = pneg %p100
      $region34: #{preact_block_forward.8} parent=31 // pred_check_branch
        %420 = sbr.rel (%p418) target = $region36
      $region35: #{preact_block_forward.8} parent=31 // pred_region
        _
      $region36: #{preact_block_forward.8} parent=31 // pred_fallthru
        _
    $region32: #{preact_block_forward.8} parent=5 // pred_fallthru
      _
    %p421 = scmp.le.s32.totalorder 2, %s9
    // Predicated region
    $region37: #{preact_block_forward.8} parent=5 // pred_check
      %p422 = pneg %p421
    $region38: #{preact_block_forward.8} parent=5 // pred_check_branch
      %424 = sbr.rel (%p422) target = $region40
    $region39: #{preact_block_forward.8} parent=5 // pred_region
      %s425 = ssub.s32 %s9, 2
      // Predicated region
      $region41: #{preact_block_forward.8} parent=39 // pred_check
        %p426 = pneg %p106
      $region42: #{preact_block_forward.8} parent=39 // pred_check_branch
        %428 = sbr.rel (%p426) target = $region44
      $region43: #{preact_block_forward.8} parent=39 // pred_region
        %p429 = scmp.lt.s32.totalorder %s15, 1
        %s430 = scalar_select %p429, %s15, 1
        %s431 = smul.addr %s430, 20
        %s432 = smul.addr %s431, 4
        %s433 = scalar_lea.vmem %s3, %s432
      $region44: #{preact_block_forward.8} parent=39 // pred_fallthru
        _
    $region40: #{preact_block_forward.8} parent=5 // pred_fallthru
      _
  $region6: #{preact_block_forward.8} parent=0 // loop_footer
    %s13 = sadd.s32 1, %s9
  $region7: #{preact_block_forward.8} parent=0 // loop_footer_branch
    %8 = sbr.rel target = $region3
  $region8: #{preact_block_forward.8} parent=0 // loop_exit
    _

// kernel: preact_block_forward.7
$region0: #{preact_block_forward.7}
  #allocation0 [shape = 'u32[]', space=smem, size = 0x4, offset = 0x4, fixed_abs, tag = 'smem constant byte address 0x4 - core index']
  #allocation1 [shape = 'u32[144,128]{1,0:T(1,128)}', space=vmem, size = 0x12000, scoped, tag = 'internal scratch']
  %s0 = inlined_call_operand.vmem [shape: bf16[2,2,2,9,9,128], index: 0, kind: input, shape index: {}]
  %s1 = inlined_call_operand.vmem [shape: bf16[1152,128], index: 1, kind: input, shape index: {}]
  %s2 = inlined_call_operand.vmem [shape: bf16[2,8,8,128], index: 2, kind: output, shape index: {0}]
  %s3 = inlined_call_operand.vmem [shape: f32[2,2,128], index: 3, kind: output, shape index: {1}]
  %4 = xla_tuple %s2, %s3
  %s5 = sld [smem:[#allocation0]]
  $region49: #{preact_block_forward.7} parent=0
    _
  %s7 = ssub.s32 1, %s5
  %s8 = scalar_select 0, %s7, %s5
  loop: start=0, step=1, limit=4
  $region2: #{preact_block_forward.7} parent=0 // loop_pre_header
    _
  $region3: #{preact_block_forward.7} parent=0 // loop_header
    %s10 = sphi 0, %s14
    %p11 = scmp.ge.s32.totalorder %s10, 4
    %s20 = sphi 0, %s22
    %s23 = sphi 0, %s20
    %s24 = sphi 0, %s23
    %s40 = sphi 0, %s24
    %s44 = sphi 0, %s44
    %s46 = sphi 0, %s44
    %s47 = sphi 0, %s46
    %s61 = sphi 0, %s47
    %s67 = sphi 0, %s69
    %s70 = sphi 0, %s67
    %s71 = sphi 0, %s70
    %s87 = sphi 0, %s71
    %s93 = sphi 0, %s95
    %s96 = sphi 0, %s93
    %s97 = sphi 0, %s96
    %s113 = sphi 0, %s97
  $region4: #{preact_block_forward.7} parent=0 // loop_header_branch
    %13 = sbr.rel (%p11) target = $region8
  $region5: #{preact_block_forward.7} parent=0 // loop_body
    %s15 = ssub.s32 %s10, 1
    %s16 = ssub.s32 %s10, 2
    %s17 = sadd.s32 %s10, 1
    %s18 = ssub.s32 %s10, %s17
    %p19 = scmp.eq.s32.totalorder %s18, 0
    %s21 = sadd.s32 %s20, 1
    %s22 = scalar_select %p19, %s20, %s21
    %p25 = pneg %p19
    %p26 = scmp.eq.s32.totalorder %s10, 1
    %p27 = por %p25, %p26
    %p28 = scmp.ne.s32.totalorder %s20, %s23
    %p29 = scmp.eq.s32.totalorder %s10, 0
    %p30 = por %p28, %p29
    %p31 = scmp.ne.s32.totalorder %s20, %s23
    %p32 = scmp.eq.s32.totalorder %s15, 1
    %p33 = por %p31, %p32
    %p34 = scmp.ne.s32.totalorder %s23, %s24
    %p35 = scmp.eq.s32.totalorder %s15, 0
    %p36 = por %p34, %p35
    %p37 = scmp.ne.s32.totalorder %s23, %s24
    %p38 = scmp.eq.s32.totalorder %s16, 1
    %p39 = por %p37, %p38
    %p41 = scmp.ne.s32.totalorder %s24, %s40
    %p42 = scmp.eq.s32.totalorder %s16, 0
    %p43 = por %p41, %p42
    %s45 = sadd.s32 %s44, 1
    %p48 = scmp.eq.s32.totalorder %s10, 1
    %p49 = scmp.ne.s32.totalorder %s44, %s46
    %p50 = scmp.eq.s32.totalorder %s10, 0
    %p51 = por %p49, %p50
    %p52 = scmp.ne.s32.totalorder %s44, %s46
    %p53 = scmp.eq.s32.totalorder %s15, 1
    %p54 = por %p52, %p53
    %p55 = scmp.ne.s32.totalorder %s46, %s47
    %p56 = scmp.eq.s32.totalorder %s15, 0
    %p57 = por %p55, %p56
    %p58 = scmp.ne.s32.totalorder %s46, %s47
    %p59 = scmp.eq.s32.totalorder %s16, 1
    %p60 = por %p58, %p59
    %p62 = scmp.ne.s32.totalorder %s47, %s61
    %p63 = scmp.eq.s32.totalorder %s16, 0
    %p64 = por %p62, %p63
    %s65 = ssub.s32 %s10, %s17
    %p66 = scmp.eq.s32.totalorder %s65, 0
    %s68 = sadd.s32 %s67, 1
    %s69 = scalar_select %p66, %s67, %s68
    %p72 = pneg %p66
    %p73 = scmp.eq.s32.totalorder %s10, 1
    %p74 = por %p72, %p73
    %p75 = scmp.ne.s32.totalorder %s67, %s70
    %p76 = scmp.eq.s32.totalorder %s10, 0
    %p77 = por %p75, %p76
    %p78 = scmp.ne.s32.totalorder %s67, %s70
    %p79 = scmp.eq.s32.totalorder %s15, 1
    %p80 = por %p78, %p79
    %p81 = scmp.ne.s32.totalorder %s70, %s71
    %p82 = scmp.eq.s32.totalorder %s15, 0
    %p83 = por %p81, %p82
    %p84 = scmp.ne.s32.totalorder %s70, %s71
    %p85 = scmp.eq.s32.totalorder %s16, 1
    %p86 = por %p84, %p85
    %p88 = scmp.ne.s32.totalorder %s71, %s87
    %p89 = scmp.eq.s32.totalorder %s16, 0
    %p90 = por %p88, %p89
    %s91 = ssub.s32 %s10, %s17
    %p92 = scmp.eq.s32.totalorder %s91, 0
    %s94 = sadd.s32 %s93, 1
    %s95 = scalar_select %p92, %s93, %s94
    %p98 = pneg %p92
    %p99 = scmp.eq.s32.totalorder %s10, 1
    %p100 = por %p98, %p99
    %p101 = scmp.ne.s32.totalorder %s93, %s96
    %p102 = scmp.eq.s32.totalorder %s10, 0
    %p103 = por %p101, %p102
    %p104 = scmp.ne.s32.totalorder %s93, %s96
    %p105 = scmp.eq.s32.totalorder %s15, 1
    %p106 = por %p104, %p105
    %p107 = scmp.ne.s32.totalorder %s96, %s97
    %p108 = scmp.eq.s32.totalorder %s15, 0
    %p109 = por %p107, %p108
    %p110 = scmp.ne.s32.totalorder %s96, %s97
    %p111 = scmp.eq.s32.totalorder %s16, 1
    %p112 = por %p110, %p111
    %p114 = scmp.ne.s32.totalorder %s97, %s113
    %p115 = scmp.eq.s32.totalorder %s16, 0
    %p116 = por %p114, %p115
    %p117 = scmp.le.s32.totalorder 1, %s10
    %p118 = scmp.lt.s32.totalorder %s10, 3
    %p119 = pnand %p117, %p118
    %p120 = pneg %p119
    // Predicated region
    $region9: #{preact_block_forward.7} parent=5 // pred_check
      _
    $region10: #{preact_block_forward.7} parent=5 // pred_check_branch
      %122 = sbr.rel (%p119) target = $region12
    $region11: #{preact_block_forward.7} parent=5 // pred_region
      %s123 = ssub.s32 %s10, 1
      // Predicated region
      $region13: #{preact_block_forward.7} parent=11 // pred_check
        %p124 = pneg %p57
      $region14: #{preact_block_forward.7} parent=11 // pred_check_branch
        %126 = sbr.rel (%p124) target = $region16
      $region15: #{preact_block_forward.7} parent=11 // pred_region
        _
      $region16: #{preact_block_forward.7} parent=11 // pred_fallthru
        _
    $region12: #{preact_block_forward.7} parent=5 // pred_fallthru
      _
    %p127 = scmp.lt.s32.totalorder %s10, 2
    // Predicated region
    $region17: #{preact_block_forward.7} parent=5 // pred_check
      %p128 = pneg %p127
    $region18: #{preact_block_forward.7} parent=5 // pred_check_branch
      %130 = sbr.rel (%p128) target = $region20
    $region19: #{preact_block_forward.7} parent=5 // pred_region
      // Predicated region
      $region21: #{preact_block_forward.7} parent=19 // pred_check
        %p131 = pneg %p30
      $region22: #{preact_block_forward.7} parent=19 // pred_check_branch
        %133 = sbr.rel (%p131) target = $region24
      $region23: #{preact_block_forward.7} parent=19 // pred_region
        %p134 = scmp.lt.s32.totalorder %s10, 1
        %s135 = scalar_select %p134, %s10, 1
        %s136 = smul.addr %s135, 72
        %s137 = smul.addr %s136, 4
        %s138 = scalar_lea.vmem %s0, %s137
      $region24: #{preact_block_forward.7} parent=19 // pred_fallthru
        _
    $region20: #{preact_block_forward.7} parent=5 // pred_fallthru
      _
    %p139 = scmp.le.s32.totalorder 1, %s10
    %p140 = scmp.lt.s32.totalorder %s10, 3
    %p141 = pnand %p139, %p140
    %p142 = pneg %p141
    // Predicated region
    $region25: #{preact_block_forward.7} parent=5 // pred_check
      _
    $region26: #{preact_block_forward.7} parent=5 // pred_check_branch
      %144 = sbr.rel (%p141) target = $region28
    $region27: #{preact_block_forward.7} parent=5 // pred_region
      %s145 = ssub.s32 %s10, 1
      %p146 = scmp.lt.s32.totalorder %s15, 1
      %s147 = scalar_select %p146, %s15, 1
      %s148 = smul.addr %s147, 72
      %s149 = smul.addr %s148, 4
      %s150 = scalar_lea.vmem %s0, %s149
      %p151 = pneg %p36
      %p152 = pneg %p33
      %p153 = pneg %p57
      %p154 = pneg %p54
      %p155 = pneg %p83
      %p156 = pneg %p80
      %p157 = scmp.lt.s32.totalorder %s15, 1
      %s158 = scalar_select %p157, %s15, 1
      %s159 = smul.addr %s158, 8
      %s160 = smul.addr %s159, 4
      %s161 = scalar_lea.vmem %s2, %s160
      %p162 = pneg %p109
      %p163 = pneg %p106
      %p164 = scmp.lt.s32.totalorder %s15, 1
      %s165 = scalar_select %p164, %s15, 1
      %s166 = smul.addr %s165, 2
      %s167 = scalar_lea.vmem %s3, %s166
      %p168 = scmp.lt.s32.totalorder %s15, 1
      %s169 = scalar_select %p168, %s15, 1
      %s170 = smul.addr %s169, 72
      %s171 = smul.addr %s170, 4
      %s172 = scalar_lea.vmem %s0, %s171
      %p173 = scmp.lt.s32.totalorder %s15, 1
      %s174 = scalar_select %p173, %s15, 1
      %s175 = smul.addr %s174, 8
      %s176 = smul.addr %s175, 4
      %s177 = scalar_lea.vmem %s2, %s176
      %p178 = scmp.lt.s32.totalorder %s15, 1
      %s179 = scalar_select %p178, %s15, 1
      %s180 = smul.addr %s179, 2
      %s181 = scalar_lea.vmem %s3, %s180
      %v183 = vld [vmem:[%s172] sm:$0xf]
      %v184 = vld [vmem:[%s172 + $0x8] sm:$0xf]
      %v185 = vld [vmem:[%s172 + $0x10] sm:$0xf]
      %v186 = vld [vmem:[%s172 + $0x18] sm:$0xf]
      %v187 = vld [vmem:[%s172 + $0x20] sm:$0xf]
      %v188 = vld [vmem:[%s172 + $0x28] sm:$0xf]
      %v189 = vld [vmem:[%s172 + $0x30] sm:$0xf]
      %v190 = vld [vmem:[%s172 + $0x38] sm:$0xf]
      %s191 = scalar_lea.vmem %s172, 72
      %v192 = vld [vmem:[%s191] sm:$0xf]
      %v193 = vld [vmem:[%s191 + $0x8] sm:$0xf]
      %v194 = vld [vmem:[%s191 + $0x10] sm:$0xf]
      %v195 = vld [vmem:[%s191 + $0x18] sm:$0xf]
      %v196 = vld [vmem:[%s191 + $0x20] sm:$0xf]
      %v197 = vld [vmem:[%s191 + $0x28] sm:$0xf]
      %v198 = vld [vmem:[%s191 + $0x30] sm:$0xf]
      %v199 = vld [vmem:[%s191 + $0x38] sm:$0xf]
      %v200 = vld [vmem:[%s172 + $0x4] sm:$0x1]
      %v201 = vld [vmem:[%s172 + $0xc] sm:$0x1]
      %v202 = vld [vmem:[%s172 + $0x14] sm:$0x1]
      %v203 = vld [vmem:[%s172 + $0x1c] sm:$0x1]
      %v204 = vld [vmem:[%s172 + $0x24] sm:$0x1]
      %v205 = vld [vmem:[%s172 + $0x2c] sm:$0x1]
      %v206 = vld [vmem:[%s172 + $0x34] sm:$0x1]
      %v207 = vld [vmem:[%s172 + $0x3c] sm:$0x1]
      %vm208 = vsmask.f32 3328
      %vm209 = vsmask.f32 7440
      %vm210 = vmor %vm208, %vm209
      %v212 = vshrl.u32 %v183, 16
      %v214 = vrot.slane %v212, 4
      %v215 = vshll.u32 %v183, 16
      %v217 = vrot.slane %v215, 5
      %v218 = vor.u32 %v214, %v217
      %v219 = vrot.slane %v218, 4
      %v221 = vshll.u32 %v200, 16
      %v223 = vrot.slane %v221, 5
      %v224 = vsel %vm210, %v219, %v223
      %v226 = vshrl.u32 %v184, 16
      %v228 = vrot.slane %v226, 4
      %v229 = vshll.u32 %v184, 16
      %v231 = vrot.slane %v229, 5
      %v232 = vor.u32 %v228, %v231
      %v233 = vrot.slane %v232, 4
      %v235 = vshll.u32 %v201, 16
      %v237 = vrot.slane %v235, 5
      %v238 = vsel %vm210, %v233, %v237
      %v240 = vshrl.u32 %v185, 16
      %v242 = vrot.slane %v240, 4
      %v243 = vshll.u32 %v185, 16
      %v245 = vrot.slane %v243, 5
      %v246 = vor.u32 %v242, %v245
      %v247 = vrot.slane %v246, 4
      %v249 = vshll.u32 %v202, 16
      %v251 = vrot.slane %v249, 5
      %v252 = vsel %vm210, %v247, %v251
      %v254 = vshrl.u32 %v186, 16
      %v256 = vrot.slane %v254, 4
      %v257 = vshll.u32 %v186, 16
      %v259 = vrot.slane %v257, 5
      %v260 = vor.u32 %v256, %v259
      %v261 = vrot.slane %v260, 4
      %v263 = vshll.u32 %v203, 16
      %v265 = vrot.slane %v263, 5
      %v266 = vsel %vm210, %v261, %v265
      %v268 = vshrl.u32 %v187, 16
      %v270 = vrot.slane %v268, 4
      %v271 = vshll.u32 %v187, 16
      %v273 = vrot.slane %v271, 5
      %v274 = vor.u32 %v270, %v273
      %v275 = vrot.slane %v274, 4
      %v277 = vshll.u32 %v204, 16
      %v279 = vrot.slane %v277, 5
      %v280 = vsel %vm210, %v275, %v279
      %v282 = vshrl.u32 %v188, 16
      %v284 = vrot.slane %v282, 4
      %v285 = vshll.u32 %v188, 16
      %v287 = vrot.slane %v285, 5
      %v288 = vor.u32 %v284, %v287
      %v289 = vrot.slane %v288, 4
      %v291 = vshll.u32 %v205, 16
      %v293 = vrot.slane %v291, 5
      %v294 = vsel %vm210, %v289, %v293
      %v296 = vshrl.u32 %v189, 16
      %v298 = vrot.slane %v296, 4
      %v299 = vshll.u32 %v189, 16
      %v301 = vrot.slane %v299, 5
      %v302 = vor.u32 %v298, %v301
      %v303 = vrot.slane %v302, 4
      %v305 = vshll.u32 %v206, 16
      %v307 = vrot.slane %v305, 5
      %v308 = vsel %vm210, %v303, %v307
      %v310 = vshrl.u32 %v190, 16
      %v312 = vrot.slane %v310, 4
      %v313 = vshll.u32 %v190, 16
      %v315 = vrot.slane %v313, 5
      %v316 = vor.u32 %v312, %v315
      %v317 = vrot.slane %v316, 4
      %v319 = vshll.u32 %v207, 16
      %v321 = vrot.slane %v319, 5
      %v322 = vsel %vm210, %v317, %v321
      %s323 = scalar_lea.vmem %s172, 144
      %v324 = vld [vmem:[%s323] sm:$0xf]
      %v325 = vld [vmem:[%s323 + $0x8] sm:$0xf]
      %v326 = vld [vmem:[%s323 + $0x10] sm:$0xf]
      %v327 = vld [vmem:[%s323 + $0x18] sm:$0xf]
      %v328 = vld [vmem:[%s323 + $0x20] sm:$0xf]
      %v329 = vld [vmem:[%s323 + $0x28] sm:$0xf]
      %v330 = vld [vmem:[%s323 + $0x30] sm:$0xf]
      %v331 = vld [vmem:[%s323 + $0x38] sm:$0xf]
      %s332 = scalar_lea.vmem %s172, 216
      %v333 = vld [vmem:[%s332] sm:$0xf]
      %v334 = vld [vmem:[%s332 + $0x8] sm:$0xf]
      %v335 = vld [vmem:[%s332 + $0x10] sm:$0xf]
      %v336 = vld [vmem:[%s332 + $0x18] sm:$0xf]
      %v337 = vld [vmem:[%s332 + $0x20] sm:$0xf]
      %v338 = vld [vmem:[%s332 + $0x28] sm:$0xf]
      %v339 = vld [vmem:[%s332 + $0x30] sm:$0xf]
      %v340 = vld [vmem:[%s332 + $0x38] sm:$0xf]
      %v341 = vld [vmem:[%s323 + $0x4] sm:$0x1]
      %v342 = vld [vmem:[%s323 + $0xc] sm:$0x1]
      %v343 = vld [vmem:[%s323 + $0x14] sm:$0x1]
      %v344 = vld [vmem:[%s323 + $0x1c] sm:$0x1]
      %v345 = vld [vmem:[%s323 + $0x24] sm:$0x1]
      %v346 = vld [vmem:[%s323 + $0x2c] sm:$0x1]
      %v347 = vld [vmem:[%s323 + $0x34] sm:$0x1]
      %v348 = vld [vmem:[%s323 + $0x3c] sm:$0x1]
      %v350 = vshrl.u32 %v324, 16
      %v352 = vrot.slane %v350, 4
      %v353 = vshll.u32 %v324, 16
      %v355 = vrot.slane %v353, 5
      %v356 = vor.u32 %v352, %v355
      %v357 = vrot.slane %v356, 4
      %v359 = vshll.u32 %v341, 16
      %v361 = vrot.slane %v359, 5
      %v362 = vsel %vm210, %v357, %v361
      %v364 = vshrl.u32 %v325, 16
      %v366 = vrot.slane %v364, 4
      %v367 = vshll.u32 %v325, 16
      %v369 = vrot.slane %v367, 5
      %v370 = vor.u32 %v366, %v369
      %v371 = vrot.slane %v370, 4
      %v373 = vshll.u32 %v342, 16
      %v375 = vrot.slane %v373, 5
      %v376 = vsel %vm210, %v371, %v375
      %v378 = vshrl.u32 %v326, 16
      %v380 = vrot.slane %v378, 4
      %v381 = vshll.u32 %v326, 16
      %v383 = vrot.slane %v381, 5
      %v384 = vor.u32 %v380, %v383
      %v385 = vrot.slane %v384, 4
      %v387 = vshll.u32 %v343, 16
      %v389 = vrot.slane %v387, 5
      %v390 = vsel %vm210, %v385, %v389
      %v392 = vshrl.u32 %v327, 16
      %v394 = vrot.slane %v392, 4
      %v395 = vshll.u32 %v327, 16
      %v397 = vrot.slane %v395, 5
      %v398 = vor.u32 %v394, %v397
      %v399 = vrot.slane %v398, 4
      %v401 = vshll.u32 %v344, 16
      %v403 = vrot.slane %v401, 5
      %v404 = vsel %vm210, %v399, %v403
      %v406 = vshrl.u32 %v328, 16
      %v408 = vrot.slane %v406, 4
      %v409 = vshll.u32 %v328, 16
      %v411 = vrot.slane %v409, 5
      %v412 = vor.u32 %v408, %v411
      %v413 = vrot.slane %v412, 4
      %v415 = vshll.u32 %v345, 16
      %v417 = vrot.slane %v415, 5
      %v418 = vsel %vm210, %v413, %v417
      %v420 = vshrl.u32 %v329, 16
      %v422 = vrot.slane %v420, 4
      %v423 = vshll.u32 %v329, 16
      %v425 = vrot.slane %v423, 5
      %v426 = vor.u32 %v422, %v425
      %v427 = vrot.slane %v426, 4
      %v429 = vshll.u32 %v346, 16
      %v431 = vrot.slane %v429, 5
      %v432 = vsel %vm210, %v427, %v431
      %v434 = vshrl.u32 %v330, 16
      %v436 = vrot.slane %v434, 4
      %v437 = vshll.u32 %v330, 16
      %v439 = vrot.slane %v437, 5
      %v440 = vor.u32 %v436, %v439
      %v441 = vrot.slane %v440, 4
      %v443 = vshll.u32 %v347, 16
      %v445 = vrot.slane %v443, 5
      %v446 = vsel %vm210, %v441, %v445
      %v448 = vshrl.u32 %v331, 16
      %v450 = vrot.slane %v448, 4
      %v451 = vshll.u32 %v331, 16
      %v453 = vrot.slane %v451, 5
      %v454 = vor.u32 %v450, %v453
      %v455 = vrot.slane %v454, 4
      %v457 = vshll.u32 %v348, 16
      %v459 = vrot.slane %v457, 5
      %v460 = vsel %vm210, %v455, %v459
      %s461 = scalar_lea.vmem %s172, 8
      %v462 = vld [vmem:[%s461] sm:$0xf]
      %v463 = vld [vmem:[%s461 + $0x8] sm:$0xf]
      %v464 = vld [vmem:[%s461 + $0x10] sm:$0xf]
      %v465 = vld [vmem:[%s461 + $0x18] sm:$0xf]
      %v466 = vld [vmem:[%s461 + $0x20] sm:$0xf]
      %v467 = vld [vmem:[%s461 + $0x28] sm:$0xf]
      %v468 = vld [vmem:[%s461 + $0x30] sm:$0xf]
      %v469 = vld [vmem:[%s461 + $0x38] sm:$0xf]
      %s470 = scalar_lea.vmem %s172, 80
      %v471 = vld [vmem:[%s470] sm:$0xf]
      %v472 = vld [vmem:[%s470 + $0x8] sm:$0xf]
      %v473 = vld [vmem:[%s470 + $0x10] sm:$0xf]
      %v474 = vld [vmem:[%s470 + $0x18] sm:$0xf]
      %v475 = vld [vmem:[%s470 + $0x20] sm:$0xf]
      %v476 = vld [vmem:[%s470 + $0x28] sm:$0xf]
      %v477 = vld [vmem:[%s470 + $0x30] sm:$0xf]
      %v478 = vld [vmem:[%s470 + $0x38] sm:$0xf]
      %v479 = vld [vmem:[%s461 + $0x4] sm:$0x1]
      %v480 = vld [vmem:[%s461 + $0xc] sm:$0x1]
      %v481 = vld [vmem:[%s461 + $0x14] sm:$0x1]
      %v482 = vld [vmem:[%s461 + $0x1c] sm:$0x1]
      %v483 = vld [vmem:[%s461 + $0x24] sm:$0x1]
      %v484 = vld [vmem:[%s461 + $0x2c] sm:$0x1]
      %v485 = vld [vmem:[%s461 + $0x34] sm:$0x1]
      %v486 = vld [vmem:[%s461 + $0x3c] sm:$0x1]
      %v488 = vshrl.u32 %v462, 16
      %v490 = vrot.slane %v488, 4
      %v491 = vshll.u32 %v462, 16
      %v493 = vrot.slane %v491, 5
      %v494 = vor.u32 %v490, %v493
      %v495 = vrot.slane %v494, 4
      %v497 = vshll.u32 %v479, 16
      %v499 = vrot.slane %v497, 5
      %v500 = vsel %vm210, %v495, %v499
      %v502 = vshrl.u32 %v463, 16
      %v504 = vrot.slane %v502, 4
      %v505 = vshll.u32 %v463, 16
      %v507 = vrot.slane %v505, 5
      %v508 = vor.u32 %v504, %v507
      %v509 = vrot.slane %v508, 4
      %v511 = vshll.u32 %v480, 16
      %v513 = vrot.slane %v511, 5
      %v514 = vsel %vm210, %v509, %v513
      %v516 = vshrl.u32 %v464, 16
      %v518 = vrot.slane %v516, 4
      %v519 = vshll.u32 %v464, 16
      %v521 = vrot.slane %v519, 5
      %v522 = vor.u32 %v518, %v521
      %v523 = vrot.slane %v522, 4
      %v525 = vshll.u32 %v481, 16
      %v527 = vrot.slane %v525, 5
      %v528 = vsel %vm210, %v523, %v527
      %v530 = vshrl.u32 %v465, 16
      %v532 = vrot.slane %v530, 4
      %v533 = vshll.u32 %v465, 16
      %v535 = vrot.slane %v533, 5
      %v536 = vor.u32 %v532, %v535
      %v537 = vrot.slane %v536, 4
      %v539 = vshll.u32 %v482, 16
      %v541 = vrot.slane %v539, 5
      %v542 = vsel %vm210, %v537, %v541
      %v544 = vshrl.u32 %v466, 16
      %v546 = vrot.slane %v544, 4
      %v547 = vshll.u32 %v466, 16
      %v549 = vrot.slane %v547, 5
      %v550 = vor.u32 %v546, %v549
      %v551 = vrot.slane %v550, 4
      %v553 = vshll.u32 %v483, 16
      %v555 = vrot.slane %v553, 5
      %v556 = vsel %vm210, %v551, %v555
      %v558 = vshrl.u32 %v467, 16
      %v560 = vrot.slane %v558, 4
      %v561 = vshll.u32 %v467, 16
      %v563 = vrot.slane %v561, 5
      %v564 = vor.u32 %v560, %v563
      %v565 = vrot.slane %v564, 4
      %v567 = vshll.u32 %v484, 16
      %v569 = vrot.slane %v567, 5
      %v570 = vsel %vm210, %v565, %v569
      %v572 = vshrl.u32 %v468, 16
      %v574 = vrot.slane %v572, 4
      %v575 = vshll.u32 %v468, 16
      %v577 = vrot.slane %v575, 5
      %v578 = vor.u32 %v574, %v577
      %v579 = vrot.slane %v578, 4
      %v581 = vshll.u32 %v485, 16
      %v583 = vrot.slane %v581, 5
      %v584 = vsel %vm210, %v579, %v583
      %v586 = vshrl.u32 %v469, 16
      %v588 = vrot.slane %v586, 4
      %v589 = vshll.u32 %v469, 16
      %v591 = vrot.slane %v589, 5
      %v592 = vor.u32 %v588, %v591
      %v593 = vrot.slane %v592, 4
      %v595 = vshll.u32 %v486, 16
      %v597 = vrot.slane %v595, 5
      %v598 = vsel %vm210, %v593, %v597
      %v607 = vunpack.c.l.b16 %v183
      %v608 = vunpack.c.l.b16 %v184
      %v609 = vunpack.c.l.b16 %v185
      %v610 = vunpack.c.l.b16 %v186
      %v611 = vunpack.c.l.b16 %v187
      %v612 = vunpack.c.l.b16 %v188
      %v613 = vunpack.c.l.b16 %v189
      %v614 = vunpack.c.l.b16 %v190
      %v615 = vpack.c.b16 %v608, %v607
      %v616 = vpack.c.b16 %v610, %v609
      %v617 = vpack.c.b16 %v612, %v611
      %v618 = vpack.c.b16 %v614, %v613
      %v631 = vunpack.c.l.b16 %v192
      %v632 = vunpack.c.l.b16 %v193
      %v633 = vunpack.c.l.b16 %v194
      %v634 = vunpack.c.l.b16 %v195
      %v635 = vunpack.c.l.b16 %v196
      %v636 = vunpack.c.l.b16 %v197
      %v637 = vunpack.c.l.b16 %v198
      %v638 = vunpack.c.l.b16 %v199
      %v639 = vpack.c.b16 %v632, %v631
      %v640 = vpack.c.b16 %v634, %v633
      %v641 = vpack.c.b16 %v636, %v635
      %v642 = vpack.c.b16 %v638, %v637
      %v647 = vunpack.c.l.b16 %v224
      %v648 = vunpack.c.l.b16 %v238
      %v649 = vunpack.c.l.b16 %v252
      %v650 = vunpack.c.l.b16 %v266
      %v651 = vunpack.c.l.b16 %v280
      %v652 = vunpack.c.l.b16 %v294
      %v653 = vunpack.c.l.b16 %v308
      %v654 = vunpack.c.l.b16 %v322
      %v655 = vpack.c.b16 %v648, %v647
      %v656 = vpack.c.b16 %v650, %v649
      %v657 = vpack.c.b16 %v652, %v651
      %v658 = vpack.c.b16 %v654, %v653
      %v671 = vunpack.c.l.b16 %v324
      %v672 = vunpack.c.l.b16 %v325
      %v673 = vunpack.c.l.b16 %v326
      %v674 = vunpack.c.l.b16 %v327
      %v675 = vunpack.c.l.b16 %v328
      %v676 = vunpack.c.l.b16 %v329
      %v677 = vunpack.c.l.b16 %v330
      %v678 = vunpack.c.l.b16 %v331
      %v679 = vpack.c.b16 %v672, %v671
      %v680 = vpack.c.b16 %v674, %v673
      %v681 = vpack.c.b16 %v676, %v675
      %v682 = vpack.c.b16 %v678, %v677
      %v695 = vunpack.c.l.b16 %v333
      %v696 = vunpack.c.l.b16 %v334
      %v697 = vunpack.c.l.b16 %v335
      %v698 = vunpack.c.l.b16 %v336
      %v699 = vunpack.c.l.b16 %v337
      %v700 = vunpack.c.l.b16 %v338
      %v701 = vunpack.c.l.b16 %v339
      %v702 = vunpack.c.l.b16 %v340
      %v703 = vpack.c.b16 %v696, %v695
      %v704 = vpack.c.b16 %v698, %v697
      %v705 = vpack.c.b16 %v700, %v699
      %v706 = vpack.c.b16 %v702, %v701
      %v711 = vunpack.c.l.b16 %v362
      %v712 = vunpack.c.l.b16 %v376
      %v713 = vunpack.c.l.b16 %v390
      %v714 = vunpack.c.l.b16 %v404
      %v715 = vunpack.c.l.b16 %v418
      %v716 = vunpack.c.l.b16 %v432
      %v717 = vunpack.c.l.b16 %v446
      %v718 = vunpack.c.l.b16 %v460
      %v719 = vpack.c.b16 %v712, %v711
      %v720 = vpack.c.b16 %v714, %v713
      %v721 = vpack.c.b16 %v716, %v715
      %v722 = vpack.c.b16 %v718, %v717
      %v735 = vunpack.c.l.b16 %v462
      %v736 = vunpack.c.l.b16 %v463
      %v737 = vunpack.c.l.b16 %v464
      %v738 = vunpack.c.l.b16 %v465
      %v739 = vunpack.c.l.b16 %v466
      %v740 = vunpack.c.l.b16 %v467
      %v741 = vunpack.c.l.b16 %v468
      %v742 = vunpack.c.l.b16 %v469
      %v743 = vpack.c.b16 %v736, %v735
      %v744 = vpack.c.b16 %v738, %v737
      %v745 = vpack.c.b16 %v740, %v739
      %v746 = vpack.c.b16 %v742, %v741
      %v759 = vunpack.c.l.b16 %v471
      %v760 = vunpack.c.l.b16 %v472
      %v761 = vunpack.c.l.b16 %v473
      %v762 = vunpack.c.l.b16 %v474
      %v763 = vunpack.c.l.b16 %v475
      %v764 = vunpack.c.l.b16 %v476
      %v765 = vunpack.c.l.b16 %v477
      %v766 = vunpack.c.l.b16 %v478
      %v767 = vpack.c.b16 %v760, %v759
      %v768 = vpack.c.b16 %v762, %v761
      %v769 = vpack.c.b16 %v764, %v763
      %v770 = vpack.c.b16 %v766, %v765
      %v775 = vunpack.c.l.b16 %v500
      %v776 = vunpack.c.l.b16 %v514
      %v777 = vunpack.c.l.b16 %v528
      %v778 = vunpack.c.l.b16 %v542
      %v779 = vunpack.c.l.b16 %v556
      %v780 = vunpack.c.l.b16 %v570
      %v781 = vunpack.c.l.b16 %v584
      %v782 = vunpack.c.l.b16 %v598
      %v783 = vpack.c.b16 %v776, %v775
      %v784 = vpack.c.b16 %v778, %v777
      %v785 = vpack.c.b16 %v780, %v779
      %v786 = vpack.c.b16 %v782, %v781
      %v791 = vld [vmem:[%s1] sm:$0xf]
      %v792 = vld [vmem:[%s1 + $0x4] sm:$0xf]
      %v793 = vld [vmem:[%s1 + $0x8] sm:$0xf]
      %v794 = vld [vmem:[%s1 + $0xc] sm:$0xf]
      %v795 = vld [vmem:[%s1 + $0x10] sm:$0xf]
      %v796 = vld [vmem:[%s1 + $0x14] sm:$0xf]
      %v797 = vld [vmem:[%s1 + $0x18] sm:$0xf]
      %v798 = vld [vmem:[%s1 + $0x1c] sm:$0xf]
      %v799 = vld [vmem:[%s1 + $0x20] sm:$0xf]
      %v800 = vld [vmem:[%s1 + $0x24] sm:$0xf]
      %v801 = vld [vmem:[%s1 + $0x28] sm:$0xf]
      %v802 = vld [vmem:[%s1 + $0x2c] sm:$0xf]
      %v803 = vld [vmem:[%s1 + $0x30] sm:$0xf]
      %v804 = vld [vmem:[%s1 + $0x34] sm:$0xf]
      %v805 = vld [vmem:[%s1 + $0x38] sm:$0xf]
      %v806 = vld [vmem:[%s1 + $0x3c] sm:$0xf]
      %v807 = vld [vmem:[%s1 + $0x40] sm:$0xf]
      %v808 = vld [vmem:[%s1 + $0x44] sm:$0xf]
      %v809 = vld [vmem:[%s1 + $0x48] sm:$0xf]
      %v810 = vld [vmem:[%s1 + $0x4c] sm:$0xf]
      %v811 = vld [vmem:[%s1 + $0x50] sm:$0xf]
      %v812 = vld [vmem:[%s1 + $0x54] sm:$0xf]
      %v813 = vld [vmem:[%s1 + $0x58] sm:$0xf]
      %v814 = vld [vmem:[%s1 + $0x5c] sm:$0xf]
      %v815 = vld [vmem:[%s1 + $0x60] sm:$0xf]
      %v816 = vld [vmem:[%s1 + $0x64] sm:$0xf]
      %v817 = vld [vmem:[%s1 + $0x68] sm:$0xf]
      %v818 = vld [vmem:[%s1 + $0x6c] sm:$0xf]
      %v819 = vld [vmem:[%s1 + $0x70] sm:$0xf]
      %v820 = vld [vmem:[%s1 + $0x74] sm:$0xf]
      %v821 = vld [vmem:[%s1 + $0x78] sm:$0xf]
      %v822 = vld [vmem:[%s1 + $0x7c] sm:$0xf]
      %v823 = vld [vmem:[%s1 + $0x80] sm:$0xf]
      %v824 = vld [vmem:[%s1 + $0x84] sm:$0xf]
      %v825 = vld [vmem:[%s1 + $0x88] sm:$0xf]
      %v826 = vld [vmem:[%s1 + $0x8c] sm:$0xf]
      %v827 = vld [vmem:[%s1 + $0x90] sm:$0xf]
      %v828 = vld [vmem:[%s1 + $0x94] sm:$0xf]
      %v829 = vld [vmem:[%s1 + $0x98] sm:$0xf]
      %v830 = vld [vmem:[%s1 + $0x9c] sm:$0xf]
      %v831 = vld [vmem:[%s1 + $0xa0] sm:$0xf]
      %v832 = vld [vmem:[%s1 + $0xa4] sm:$0xf]
      %v833 = vld [vmem:[%s1 + $0xa8] sm:$0xf]
      %v834 = vld [vmem:[%s1 + $0xac] sm:$0xf]
      %v835 = vld [vmem:[%s1 + $0xb0] sm:$0xf]
      %v836 = vld [vmem:[%s1 + $0xb4] sm:$0xf]
      %v837 = vld [vmem:[%s1 + $0xb8] sm:$0xf]
      %v838 = vld [vmem:[%s1 + $0xbc] sm:$0xf]
      %v839 = vld [vmem:[%s1 + $0xc0] sm:$0xf]
      %v840 = vld [vmem:[%s1 + $0xc4] sm:$0xf]
      %v841 = vld [vmem:[%s1 + $0xc8] sm:$0xf]
      %v842 = vld [vmem:[%s1 + $0xcc] sm:$0xf]
      %v843 = vld [vmem:[%s1 + $0xd0] sm:$0xf]
      %v844 = vld [vmem:[%s1 + $0xd4] sm:$0xf]
      %v845 = vld [vmem:[%s1 + $0xd8] sm:$0xf]
      %v846 = vld [vmem:[%s1 + $0xdc] sm:$0xf]
      %v847 = vld [vmem:[%s1 + $0xe0] sm:$0xf]
      %v848 = vld [vmem:[%s1 + $0xe4] sm:$0xf]
      %v849 = vld [vmem:[%s1 + $0xe8] sm:$0xf]
      %v850 = vld [vmem:[%s1 + $0xec] sm:$0xf]
      %v851 = vld [vmem:[%s1 + $0xf0] sm:$0xf]
      %v852 = vld [vmem:[%s1 + $0xf4] sm:$0xf]
      %v853 = vld [vmem:[%s1 + $0xf8] sm:$0xf]
      %v854 = vld [vmem:[%s1 + $0xfc] sm:$0xf]
      %v855 = vld [vmem:[%s1 + $0x100] sm:$0xf]
      %v856 = vld [vmem:[%s1 + $0x104] sm:$0xf]
      %v857 = vld [vmem:[%s1 + $0x108] sm:$0xf]
      %v858 = vld [vmem:[%s1 + $0x10c] sm:$0xf]
      %v859 = vld [vmem:[%s1 + $0x110] sm:$0xf]
      %v860 = vld [vmem:[%s1 + $0x114] sm:$0xf]
      %v861 = vld [vmem:[%s1 + $0x118] sm:$0xf]
      %v862 = vld [vmem:[%s1 + $0x11c] sm:$0xf]
      %v863 = vld [vmem:[%s1 + $0x120] sm:$0xf]
      %v864 = vld [vmem:[%s1 + $0x124] sm:$0xf]
      %v865 = vld [vmem:[%s1 + $0x128] sm:$0xf]
      %v866 = vld [vmem:[%s1 + $0x12c] sm:$0xf]
      %v867 = vld [vmem:[%s1 + $0x130] sm:$0xf]
      %v868 = vld [vmem:[%s1 + $0x134] sm:$0xf]
      %v869 = vld [vmem:[%s1 + $0x138] sm:$0xf]
      %v870 = vld [vmem:[%s1 + $0x13c] sm:$0xf]
      %v871 = vld [vmem:[%s1 + $0x140] sm:$0xf]
      %v872 = vld [vmem:[%s1 + $0x144] sm:$0xf]
      %v873 = vld [vmem:[%s1 + $0x148] sm:$0xf]
      %v874 = vld [vmem:[%s1 + $0x14c] sm:$0xf]
      %v875 = vld [vmem:[%s1 + $0x150] sm:$0xf]
      %v876 = vld [vmem:[%s1 + $0x154] sm:$0xf]
      %v877 = vld [vmem:[%s1 + $0x158] sm:$0xf]
      %v878 = vld [vmem:[%s1 + $0x15c] sm:$0xf]
      %v879 = vld [vmem:[%s1 + $0x160] sm:$0xf]
      %v880 = vld [vmem:[%s1 + $0x164] sm:$0xf]
      %v881 = vld [vmem:[%s1 + $0x168] sm:$0xf]
      %v882 = vld [vmem:[%s1 + $0x16c] sm:$0xf]
      %v883 = vld [vmem:[%s1 + $0x170] sm:$0xf]
      %v884 = vld [vmem:[%s1 + $0x174] sm:$0xf]
      %v885 = vld [vmem:[%s1 + $0x178] sm:$0xf]
      %v886 = vld [vmem:[%s1 + $0x17c] sm:$0xf]
      %v887 = vld [vmem:[%s1 + $0x180] sm:$0xf]
      %v888 = vld [vmem:[%s1 + $0x184] sm:$0xf]
      %v889 = vld [vmem:[%s1 + $0x188] sm:$0xf]
      %v890 = vld [vmem:[%s1 + $0x18c] sm:$0xf]
      %v891 = vld [vmem:[%s1 + $0x190] sm:$0xf]
      %v892 = vld [vmem:[%s1 + $0x194] sm:$0xf]
      %v893 = vld [vmem:[%s1 + $0x198] sm:$0xf]
      %v894 = vld [vmem:[%s1 + $0x19c] sm:$0xf]
      %v895 = vld [vmem:[%s1 + $0x1a0] sm:$0xf]
      %v896 = vld [vmem:[%s1 + $0x1a4] sm:$0xf]
      %v897 = vld [vmem:[%s1 + $0x1a8] sm:$0xf]
      %v898 = vld [vmem:[%s1 + $0x1ac] sm:$0xf]
      %v899 = vld [vmem:[%s1 + $0x1b0] sm:$0xf]
      %v900 = vld [vmem:[%s1 + $0x1b4] sm:$0xf]
      %v901 = vld [vmem:[%s1 + $0x1b8] sm:$0xf]
      %v902 = vld [vmem:[%s1 + $0x1bc] sm:$0xf]
      %v903 = vld [vmem:[%s1 + $0x1c0] sm:$0xf]
      %v904 = vld [vmem:[%s1 + $0x1c4] sm:$0xf]
      %v905 = vld [vmem:[%s1 + $0x1c8] sm:$0xf]
      %v906 = vld [vmem:[%s1 + $0x1cc] sm:$0xf]
      %v907 = vld [vmem:[%s1 + $0x1d0] sm:$0xf]
      %v908 = vld [vmem:[%s1 + $0x1d4] sm:$0xf]
      %v909 = vld [vmem:[%s1 + $0x1d8] sm:$0xf]
      %v910 = vld [vmem:[%s1 + $0x1dc] sm:$0xf]
      %v911 = vld [vmem:[%s1 + $0x1e0] sm:$0xf]
      %v912 = vld [vmem:[%s1 + $0x1e4] sm:$0xf]
      %v913 = vld [vmem:[%s1 + $0x1e8] sm:$0xf]
      %v914 = vld [vmem:[%s1 + $0x1ec] sm:$0xf]
      %v915 = vld [vmem:[%s1 + $0x1f0] sm:$0xf]
      %v916 = vld [vmem:[%s1 + $0x1f4] sm:$0xf]
      %v917 = vld [vmem:[%s1 + $0x1f8] sm:$0xf]
      %v918 = vld [vmem:[%s1 + $0x1fc] sm:$0xf]
      %v919 = vld [vmem:[%s1 + $0x200] sm:$0xf]
      %v920 = vld [vmem:[%s1 + $0x204] sm:$0xf]
      %v921 = vld [vmem:[%s1 + $0x208] sm:$0xf]
      %v922 = vld [vmem:[%s1 + $0x20c] sm:$0xf]
      %v923 = vld [vmem:[%s1 + $0x210] sm:$0xf]
      %v924 = vld [vmem:[%s1 + $0x214] sm:$0xf]
      %v925 = vld [vmem:[%s1 + $0x218] sm:$0xf]
      %v926 = vld [vmem:[%s1 + $0x21c] sm:$0xf]
      %v927 = vld [vmem:[%s1 + $0x220] sm:$0xf]
      %v928 = vld [vmem:[%s1 + $0x224] sm:$0xf]
      %v929 = vld [vmem:[%s1 + $0x228] sm:$0xf]
      %v930 = vld [vmem:[%s1 + $0x22c] sm:$0xf]
      %v931 = vld [vmem:[%s1 + $0x230] sm:$0xf]
      %v932 = vld [vmem:[%s1 + $0x234] sm:$0xf]
      %v933 = vld [vmem:[%s1 + $0x238] sm:$0xf]
      %v934 = vld [vmem:[%s1 + $0x23c] sm:$0xf]
      %v1079 = vunpack.c.l.b16 %v791
      %v1080 = vunpack.c.l.b16 %v792
      %v1081 = vunpack.c.l.b16 %v793
      %v1082 = vunpack.c.l.b16 %v794
      %v1083 = vunpack.c.l.b16 %v795
      %v1084 = vunpack.c.l.b16 %v796
      %v1085 = vunpack.c.l.b16 %v797
      %v1086 = vunpack.c.l.b16 %v798
      %v1087 = vunpack.c.l.b16 %v799
      %v1088 = vunpack.c.l.b16 %v800
      %v1089 = vunpack.c.l.b16 %v801
      %v1090 = vunpack.c.l.b16 %v802
      %v1091 = vunpack.c.l.b16 %v803
      %v1092 = vunpack.c.l.b16 %v804
      %v1093 = vunpack.c.l.b16 %v805
      %v1094 = vunpack.c.l.b16 %v806
      %v1095 = vunpack.c.l.b16 %v807
      %v1096 = vunpack.c.l.b16 %v808
      %v1097 = vunpack.c.l.b16 %v809
      %v1098 = vunpack.c.l.b16 %v810
      %v1099 = vunpack.c.l.b16 %v811
      %v1100 = vunpack.c.l.b16 %v812
      %v1101 = vunpack.c.l.b16 %v813
      %v1102 = vunpack.c.l.b16 %v814
      %v1103 = vunpack.c.l.b16 %v815
      %v1104 = vunpack.c.l.b16 %v816
      %v1105 = vunpack.c.l.b16 %v817
      %v1106 = vunpack.c.l.b16 %v818
      %v1107 = vunpack.c.l.b16 %v819
      %v1108 = vunpack.c.l.b16 %v820
      %v1109 = vunpack.c.l.b16 %v821
      %v1110 = vunpack.c.l.b16 %v822
      %v1111 = vunpack.c.l.b16 %v823
      %v1112 = vunpack.c.l.b16 %v824
      %v1113 = vunpack.c.l.b16 %v825
      %v1114 = vunpack.c.l.b16 %v826
      %v1115 = vunpack.c.l.b16 %v827
      %v1116 = vunpack.c.l.b16 %v828
      %v1117 = vunpack.c.l.b16 %v829
      %v1118 = vunpack.c.l.b16 %v830
      %v1119 = vunpack.c.l.b16 %v831
      %v1120 = vunpack.c.l.b16 %v832
      %v1121 = vunpack.c.l.b16 %v833
      %v1122 = vunpack.c.l.b16 %v834
      %v1123 = vunpack.c.l.b16 %v835
      %v1124 = vunpack.c.l.b16 %v836
      %v1125 = vunpack.c.l.b16 %v837
      %v1126 = vunpack.c.l.b16 %v838
      %v1127 = vunpack.c.l.b16 %v839
      %v1128 = vunpack.c.l.b16 %v840
      %v1129 = vunpack.c.l.b16 %v841
      %v1130 = vunpack.c.l.b16 %v842
      %v1131 = vunpack.c.l.b16 %v843
      %v1132 = vunpack.c.l.b16 %v844
      %v1133 = vunpack.c.l.b16 %v845
      %v1134 = vunpack.c.l.b16 %v846
      %v1135 = vunpack.c.l.b16 %v847
      %v1136 = vunpack.c.l.b16 %v848
      %v1137 = vunpack.c.l.b16 %v849
      %v1138 = vunpack.c.l.b16 %v850
      %v1139 = vunpack.c.l.b16 %v851
      %v1140 = vunpack.c.l.b16 %v852
      %v1141 = vunpack.c.l.b16 %v853
      %v1142 = vunpack.c.l.b16 %v854
      %v1143 = vunpack.c.l.b16 %v855
      %v1144 = vunpack.c.l.b16 %v856
      %v1145 = vunpack.c.l.b16 %v857
      %v1146 = vunpack.c.l.b16 %v858
      %v1147 = vunpack.c.l.b16 %v859
      %v1148 = vunpack.c.l.b16 %v860
      %v1149 = vunpack.c.l.b16 %v861
      %v1150 = vunpack.c.l.b16 %v862
      %v1151 = vunpack.c.l.b16 %v863
      %v1152 = vunpack.c.l.b16 %v864
      %v1153 = vunpack.c.l.b16 %v865
      %v1154 = vunpack.c.l.b16 %v866
      %v1155 = vunpack.c.l.b16 %v867
      %v1156 = vunpack.c.l.b16 %v868
      %v1157 = vunpack.c.l.b16 %v869
      %v1158 = vunpack.c.l.b16 %v870
      %v1159 = vunpack.c.l.b16 %v871
      %v1160 = vunpack.c.l.b16 %v872
      %v1161 = vunpack.c.l.b16 %v873
      %v1162 = vunpack.c.l.b16 %v874
      %v1163 = vunpack.c.l.b16 %v875
      %v1164 = vunpack.c.l.b16 %v876
      %v1165 = vunpack.c.l.b16 %v877
      %v1166 = vunpack.c.l.b16 %v878
      %v1167 = vunpack.c.l.b16 %v879
      %v1168 = vunpack.c.l.b16 %v880
      %v1169 = vunpack.c.l.b16 %v881
      %v1170 = vunpack.c.l.b16 %v882
      %v1171 = vunpack.c.l.b16 %v883
      %v1172 = vunpack.c.l.b16 %v884
      %v1173 = vunpack.c.l.b16 %v885
      %v1174 = vunpack.c.l.b16 %v886
      %v1175 = vunpack.c.l.b16 %v887
      %v1176 = vunpack.c.l.b16 %v888
      %v1177 = vunpack.c.l.b16 %v889
      %v1178 = vunpack.c.l.b16 %v890
      %v1179 = vunpack.c.l.b16 %v891
      %v1180 = vunpack.c.l.b16 %v892
      %v1181 = vunpack.c.l.b16 %v893
      %v1182 = vunpack.c.l.b16 %v894
      %v1183 = vunpack.c.l.b16 %v895
      %v1184 = vunpack.c.l.b16 %v896
      %v1185 = vunpack.c.l.b16 %v897
      %v1186 = vunpack.c.l.b16 %v898
      %v1187 = vunpack.c.l.b16 %v899
      %v1188 = vunpack.c.l.b16 %v900
      %v1189 = vunpack.c.l.b16 %v901
      %v1190 = vunpack.c.l.b16 %v902
      %v1191 = vunpack.c.l.b16 %v903
      %v1192 = vunpack.c.l.b16 %v904
      %v1193 = vunpack.c.l.b16 %v905
      %v1194 = vunpack.c.l.b16 %v906
      %v1195 = vunpack.c.l.b16 %v907
      %v1196 = vunpack.c.l.b16 %v908
      %v1197 = vunpack.c.l.b16 %v909
      %v1198 = vunpack.c.l.b16 %v910
      %v1199 = vunpack.c.l.b16 %v911
      %v1200 = vunpack.c.l.b16 %v912
      %v1201 = vunpack.c.l.b16 %v913
      %v1202 = vunpack.c.l.b16 %v914
      %v1203 = vunpack.c.l.b16 %v915
      %v1204 = vunpack.c.l.b16 %v916
      %v1205 = vunpack.c.l.b16 %v917
      %v1206 = vunpack.c.l.b16 %v918
      %v1207 = vunpack.c.l.b16 %v919
      %v1208 = vunpack.c.l.b16 %v920
      %v1209 = vunpack.c.l.b16 %v921
      %v1210 = vunpack.c.l.b16 %v922
      %v1211 = vunpack.c.l.b16 %v923
      %v1212 = vunpack.c.l.b16 %v924
      %v1213 = vunpack.c.l.b16 %v925
      %v1214 = vunpack.c.l.b16 %v926
      %v1215 = vunpack.c.l.b16 %v927
      %v1216 = vunpack.c.l.b16 %v928
      %v1217 = vunpack.c.l.b16 %v929
      %v1218 = vunpack.c.l.b16 %v930
      %v1219 = vunpack.c.l.b16 %v931
      %v1220 = vunpack.c.l.b16 %v932
      %v1221 = vunpack.c.l.b16 %v933
      %v1222 = vunpack.c.l.b16 %v934
      %v1223 = vpack.c.b16 %v1080, %v1079
      %v1224 = vpack.c.b16 %v1082, %v1081
      %v1225 = vpack.c.b16 %v1084, %v1083
      %v1226 = vpack.c.b16 %v1086, %v1085
      %v1227 = vpack.c.b16 %v1088, %v1087
      %v1228 = vpack.c.b16 %v1090, %v1089
      %v1229 = vpack.c.b16 %v1092, %v1091
      %v1230 = vpack.c.b16 %v1094, %v1093
      %v1231 = vpack.c.b16 %v1096, %v1095
      %v1232 = vpack.c.b16 %v1098, %v1097
      %v1233 = vpack.c.b16 %v1100, %v1099
      %v1234 = vpack.c.b16 %v1102, %v1101
      %v1235 = vpack.c.b16 %v1104, %v1103
      %v1236 = vpack.c.b16 %v1106, %v1105
      %v1237 = vpack.c.b16 %v1108, %v1107
      %v1238 = vpack.c.b16 %v1110, %v1109
      %v1239 = vpack.c.b16 %v1112, %v1111
      %v1240 = vpack.c.b16 %v1114, %v1113
      %v1241 = vpack.c.b16 %v1116, %v1115
      %v1242 = vpack.c.b16 %v1118, %v1117
      %v1243 = vpack.c.b16 %v1120, %v1119
      %v1244 = vpack.c.b16 %v1122, %v1121
      %v1245 = vpack.c.b16 %v1124, %v1123
      %v1246 = vpack.c.b16 %v1126, %v1125
      %v1247 = vpack.c.b16 %v1128, %v1127
      %v1248 = vpack.c.b16 %v1130, %v1129
      %v1249 = vpack.c.b16 %v1132, %v1131
      %v1250 = vpack.c.b16 %v1134, %v1133
      %v1251 = vpack.c.b16 %v1136, %v1135
      %v1252 = vpack.c.b16 %v1138, %v1137
      %v1253 = vpack.c.b16 %v1140, %v1139
      %v1254 = vpack.c.b16 %v1142, %v1141
      %v1255 = vpack.c.b16 %v1144, %v1143
      %v1256 = vpack.c.b16 %v1146, %v1145
      %v1257 = vpack.c.b16 %v1148, %v1147
      %v1258 = vpack.c.b16 %v1150, %v1149
      %v1259 = vpack.c.b16 %v1152, %v1151
      %v1260 = vpack.c.b16 %v1154, %v1153
      %v1261 = vpack.c.b16 %v1156, %v1155
      %v1262 = vpack.c.b16 %v1158, %v1157
      %v1263 = vpack.c.b16 %v1160, %v1159
      %v1264 = vpack.c.b16 %v1162, %v1161
      %v1265 = vpack.c.b16 %v1164, %v1163
      %v1266 = vpack.c.b16 %v1166, %v1165
      %v1267 = vpack.c.b16 %v1168, %v1167
      %v1268 = vpack.c.b16 %v1170, %v1169
      %v1269 = vpack.c.b16 %v1172, %v1171
      %v1270 = vpack.c.b16 %v1174, %v1173
      %v1271 = vpack.c.b16 %v1176, %v1175
      %v1272 = vpack.c.b16 %v1178, %v1177
      %v1273 = vpack.c.b16 %v1180, %v1179
      %v1274 = vpack.c.b16 %v1182, %v1181
      %v1275 = vpack.c.b16 %v1184, %v1183
      %v1276 = vpack.c.b16 %v1186, %v1185
      %v1277 = vpack.c.b16 %v1188, %v1187
      %v1278 = vpack.c.b16 %v1190, %v1189
      %v1279 = vpack.c.b16 %v1192, %v1191
      %v1280 = vpack.c.b16 %v1194, %v1193
      %v1281 = vpack.c.b16 %v1196, %v1195
      %v1282 = vpack.c.b16 %v1198, %v1197
      %v1283 = vpack.c.b16 %v1200, %v1199
      %v1284 = vpack.c.b16 %v1202, %v1201
      %v1285 = vpack.c.b16 %v1204, %v1203
      %v1286 = vpack.c.b16 %v1206, %v1205
      %v1287 = vpack.c.b16 %v1208, %v1207
      %v1288 = vpack.c.b16 %v1210, %v1209
      %v1289 = vpack.c.b16 %v1212, %v1211
      %v1290 = vpack.c.b16 %v1214, %v1213
      %v1291 = vpack.c.b16 %v1216, %v1215
      %v1292 = vpack.c.b16 %v1218, %v1217
      %v1293 = vpack.c.b16 %v1220, %v1219
      %v1294 = vpack.c.b16 %v1222, %v1221
      %1367 = vmatprep.subr.bf16.mxu0 0
      %1368 = vmatpush1.bf16.msra.mxu0 %v1223
      %1369 = vmatprep.subr.bf16.mxu0 0
      %1370 = vmatpush1.bf16.msra.mxu0 %v1224
      %1371 = vmatprep.subr.bf16.mxu0 0
      %1372 = vmatpush1.bf16.msra.mxu0 %v1225
      %1373 = vmatprep.subr.bf16.mxu0 0
      %1374 = vmatpush1.bf16.msra.mxu0 %v1226
      %1375 = vmatprep.subr.bf16.mxu0 0
      %1376 = vmatpush1.bf16.msra.mxu0 %v1227
      %1377 = vmatprep.subr.bf16.mxu0 0
      %1378 = vmatpush1.bf16.msra.mxu0 %v1228
      %1379 = vmatprep.subr.bf16.mxu0 0
      %1380 = vmatpush1.bf16.msra.mxu0 %v1229
      %1381 = vmatprep.subr.bf16.mxu0 0
      %1382 = vmatpush1.bf16.msra.mxu0 %v1230
      %1383 = vmatprep.subr.bf16.mxu0 0
      %1384 = vmatpush1.bf16.msra.mxu0 %v1231
      %1385 = vmatprep.subr.bf16.mxu0 0
      %1386 = vmatpush1.bf16.msra.mxu0 %v1232
      %1387 = vmatprep.subr.bf16.mxu0 0
      %1388 = vmatpush1.bf16.msra.mxu0 %v1233
      %1389 = vmatprep.subr.bf16.mxu0 0
      %1390 = vmatpush1.bf16.msra.mxu0 %v1234
      %1391 = vmatprep.subr.bf16.mxu0 0
      %1392 = vmatpush1.bf16.msra.mxu0 %v1235
      %1393 = vmatprep.subr.bf16.mxu0 0
      %1394 = vmatpush1.bf16.msra.mxu0 %v1236
      %1395 = vmatprep.subr.bf16.mxu0 0
      %1396 = vmatpush1.bf16.msra.mxu0 %v1237
      %1397 = vmatprep.subr.bf16.mxu0 0
      %1398 = vmatpush1.bf16.msra.mxu0 %v1238
      %1399 = vmatprep.mubr.bf16.mxu0 %v639
      %1400 = vmatmul.mubr.bf16.gmra.mrb[0].mxu0 %v615
      %v1401 = vpop.f32.mrb[0].mxu0
      %v1402 = vadd.f32 0.0, %v1401
      %v1403 = vpop.f32.mrb[0].mxu0
      %v1404 = vpop.f32.mrb[0].mxu0
      %v1405 = vadd.f32 0.0, %v1404
      %v1406 = vpop.f32.mrb[0].mxu0
      %1407 = vmatprep.mubr.bf16.mxu0 %v640
      %1408 = vmatmul.mubr.bf16.gmra.mrb[0].mxu0 %v616
      %v1409 = vpop.f32.mrb[0].mxu0
      %v1410 = vadd.f32 0.0, %v1409
      %v1411 = vpop.f32.mrb[0].mxu0
      %v1412 = vpop.f32.mrb[0].mxu0
      %v1413 = vadd.f32 0.0, %v1412
      %v1414 = vpop.f32.mrb[0].mxu0
      %1415 = vmatprep.mubr.bf16.mxu0 %v641
      %1416 = vmatmul.mubr.bf16.gmra.mrb[0].mxu0 %v617
      %v1417 = vpop.f32.mrb[0].mxu0
      %v1418 = vadd.f32 0.0, %v1417
      %v1419 = vpop.f32.mrb[0].mxu0
      %v1420 = vpop.f32.mrb[0].mxu0
      %v1421 = vadd.f32 0.0, %v1420
      %v1422 = vpop.f32.mrb[0].mxu0
      %1423 = vmatprep.mubr.bf16.mxu0 %v642
      %1424 = vmatmul.mubr.bf16.gmra.mrb[0].mxu0 %v618
      %v1425 = vpop.f32.mrb[0].mxu0
      %v1426 = vadd.f32 0.0, %v1425
      %v1427 = vpop.f32.mrb[0].mxu0
      %v1428 = vpop.f32.mrb[0].mxu0
      %v1429 = vadd.f32 0.0, %v1428
      %v1430 = vpop.f32.mrb[0].mxu0
      %1431 = vdwg.mxu0
      %1432 = vmatprep.subr.bf16.mxu0 0
      %1433 = vmatpush1.bf16.msra.mxu0 %v1239
      %1434 = vmatprep.subr.bf16.mxu0 0
      %1435 = vmatpush1.bf16.msra.mxu0 %v1240
      %1436 = vmatprep.subr.bf16.mxu0 0
      %1437 = vmatpush1.bf16.msra.mxu0 %v1241
      %1438 = vmatprep.subr.bf16.mxu0 0
      %1439 = vmatpush1.bf16.msra.mxu0 %v1242
      %1440 = vmatprep.subr.bf16.mxu0 0
      %1441 = vmatpush1.bf16.msra.mxu0 %v1243
      %1442 = vmatprep.subr.bf16.mxu0 0
      %1443 = vmatpush1.bf16.msra.mxu0 %v1244
      %1444 = vmatprep.subr.bf16.mxu0 0
      %1445 = vmatpush1.bf16.msra.mxu0 %v1245
      %1446 = vmatprep.subr.bf16.mxu0 0
      %1447 = vmatpush1.bf16.msra.mxu0 %v1246
      %1448 = vmatprep.subr.bf16.mxu0 0
      %1449 = vmatpush1.bf16.msra.mxu0 %v1247
      %1450 = vmatprep.subr.bf16.mxu0 0
      %1451 = vmatpush1.bf16.msra.mxu0 %v1248
      %1452 = vmatprep.subr.bf16.mxu0 0
      %1453 = vmatpush1.bf16.msra.mxu0 %v1249
      %1454 = vmatprep.subr.bf16.mxu0 0
      %1455 = vmatpush1.bf16.msra.mxu0 %v1250
      %1456 = vmatprep.subr.bf16.mxu0 0
      %1457 = vmatpush1.bf16.msra.mxu0 %v1251
      %1458 = vmatprep.subr.bf16.mxu0 0
      %1459 = vmatpush1.bf16.msra.mxu0 %v1252
      %1460 = vmatprep.subr.bf16.mxu0 0
      %1461 = vmatpush1.bf16.msra.mxu0 %v1253
      %1462 = vmatprep.subr.bf16.mxu0 0
      %1463 = vmatpush1.bf16.msra.mxu0 %v1254
      %1464 = vmatprep.mubr.bf16.mxu0 %v679
      %1465 = vmatmul.mubr.bf16.gmra.mrb[0].mxu0 %v655
      %v1466 = vpop.f32.mrb[0].mxu0
      %v1467 = vadd.f32 %v1402, %v1466
      %v1468 = vpop.f32.mrb[0].mxu0
      %v1469 = vpop.f32.mrb[0].mxu0
      %v1470 = vadd.f32 %v1405, %v1469
      %v1471 = vpop.f32.mrb[0].mxu0
      %1472 = vmatprep.mubr.bf16.mxu0 %v680
      %1473 = vmatmul.mubr.bf16.gmra.mrb[0].mxu0 %v656
      %v1474 = vpop.f32.mrb[0].mxu0
      %v1475 = vadd.f32 %v1410, %v1474
      %v1476 = vpop.f32.mrb[0].mxu0
      %v1477 = vpop.f32.mrb[0].mxu0
      %v1478 = vadd.f32 %v1413, %v1477
      %v1479 = vpop.f32.mrb[0].mxu0
      %1480 = vmatprep.mubr.bf16.mxu0 %v681
      %1481 = vmatmul.mubr.bf16.gmra.mrb[0].mxu0 %v657
      %v1482 = vpop.f32.mrb[0].mxu0
      %v1483 = vadd.f32 %v1418, %v1482
      %v1484 = vpop.f32.mrb[0].mxu0
      %v1485 = vpop.f32.mrb[0].mxu0
      %v1486 = vadd.f32 %v1421, %v1485
      %v1487 = vpop.f32.mrb[0].mxu0
      %1488 = vmatprep.mubr.bf16.mxu0 %v682
      %1489 = vmatmul.mubr.bf16.gmra.mrb[0].mxu0 %v658
      %v1490 = vpop.f32.mrb[0].mxu0
      %v1491 = vadd.f32 %v1426, %v1490
      %v1492 = vpop.f32.mrb[0].mxu0
      %v1493 = vpop.f32.mrb[0].mxu0
      %v1494 = vadd.f32 %v1429, %v1493
      %v1495 = vpop.f32.mrb[0].mxu0
      %1496 = vdwg.mxu0
      %1497 = vmatprep.subr.bf16.mxu0 0
      %1498 = vmatpush1.bf16.msra.mxu0 %v1255
      %1499 = vmatprep.subr.bf16.mxu0 0
      %1500 = vmatpush1.bf16.msra.mxu0 %v1256
      %1501 = vmatprep.subr.bf16.mxu0 0
      %1502 = vmatpush1.bf16.msra.mxu0 %v1257
      %1503 = vmatprep.subr.bf16.mxu0 0
      %1504 = vmatpush1.bf16.msra.mxu0 %v1258
      %1505 = vmatprep.subr.bf16.mxu0 0
      %1506 = vmatpush1.bf16.msra.mxu0 %v1259
      %1507 = vmatprep.subr.bf16.mxu0 0
      %1508 = vmatpush1.bf16.msra.mxu0 %v1260
      %1509 = vmatprep.subr.bf16.mxu0 0
      %1510 = vmatpush1.bf16.msra.mxu0 %v1261
      %1511 = vmatprep.subr.bf16.mxu0 0
      %1512 = vmatpush1.bf16.msra.mxu0 %v1262
      %1513 = vmatprep.subr.bf16.mxu0 0
      %1514 = vmatpush1.bf16.msra.mxu0 %v1263
      %1515 = vmatprep.subr.bf16.mxu0 0
      %1516 = vmatpush1.bf16.msra.mxu0 %v1264
      %1517 = vmatprep.subr.bf16.mxu0 0
      %1518 = vmatpush1.bf16.msra.mxu0 %v1265
      %1519 = vmatprep.subr.bf16.mxu0 0
      %1520 = vmatpush1.bf16.msra.mxu0 %v1266
      %1521 = vmatprep.subr.bf16.mxu0 0
      %1522 = vmatpush1.bf16.msra.mxu0 %v1267
      %1523 = vmatprep.subr.bf16.mxu0 0
      %1524 = vmatpush1.bf16.msra.mxu0 %v1268
      %1525 = vmatprep.subr.bf16.mxu0 0
      %1526 = vmatpush1.bf16.msra.mxu0 %v1269
      %1527 = vmatprep.subr.bf16.mxu0 0
      %1528 = vmatpush1.bf16.msra.mxu0 %v1270
      %1529 = vmatprep.mubr.bf16.mxu0 %v719
      %1530 = vmatmul.mubr.bf16.gmra.mrb[0].mxu0 %v703
      %v1531 = vpop.f32.mrb[0].mxu0
      %v1532 = vadd.f32 %v1467, %v1531
      %v1533 = vpop.f32.mrb[0].mxu0
      %v1534 = vpop.f32.mrb[0].mxu0
      %v1535 = vadd.f32 %v1470, %v1534
      %v1536 = vpop.f32.mrb[0].mxu0
      %1537 = vmatprep.mubr.bf16.mxu0 %v720
      %1538 = vmatmul.mubr.bf16.gmra.mrb[0].mxu0 %v704
      %v1539 = vpop.f32.mrb[0].mxu0
      %v1540 = vadd.f32 %v1475, %v1539
      %v1541 = vpop.f32.mrb[0].mxu0
      %v1542 = vpop.f32.mrb[0].mxu0
      %v1543 = vadd.f32 %v1478, %v1542
      %v1544 = vpop.f32.mrb[0].mxu0
      %1545 = vmatprep.mubr.bf16.mxu0 %v721
      %1546 = vmatmul.mubr.bf16.gmra.mrb[0].mxu0 %v705
      %v1547 = vpop.f32.mrb[0].mxu0
      %v1548 = vadd.f32 %v1483, %v1547
      %v1549 = vpop.f32.mrb[0].mxu0
      %v1550 = vpop.f32.mrb[0].mxu0
      %v1551 = vadd.f32 %v1486, %v1550
      %v1552 = vpop.f32.mrb[0].mxu0
      %1553 = vmatprep.mubr.bf16.mxu0 %v722
      %1554 = vmatmul.mubr.bf16.gmra.mrb[0].mxu0 %v706
      %v1555 = vpop.f32.mrb[0].mxu0
      %v1556 = vadd.f32 %v1491, %v1555
      %v1557 = vpop.f32.mrb[0].mxu0
      %v1558 = vpop.f32.mrb[0].mxu0
      %v1559 = vadd.f32 %v1494, %v1558
      %v1560 = vpop.f32.mrb[0].mxu0
      %1561 = vdwg.mxu0
      %1562 = vmatprep.subr.bf16.mxu0 0
      %1563 = vmatpush1.bf16.msra.mxu0 %v1271
      %1564 = vmatprep.subr.bf16.mxu0 0
      %1565 = vmatpush1.bf16.msra.mxu0 %v1272
      %1566 = vmatprep.subr.bf16.mxu0 0
      %1567 = vmatpush1.bf16.msra.mxu0 %v1273
      %1568 = vmatprep.subr.bf16.mxu0 0
      %1569 = vmatpush1.bf16.msra.mxu0 %v1274
      %1570 = vmatprep.subr.bf16.mxu0 0
      %1571 = vmatpush1.bf16.msra.mxu0 %v1275
      %1572 = vmatprep.subr.bf16.mxu0 0
      %1573 = vmatpush1.bf16.msra.mxu0 %v1276
      %1574 = vmatprep.subr.bf16.mxu0 0
      %1575 = vmatpush1.bf16.msra.mxu0 %v1277
      %1576 = vmatprep.subr.bf16.mxu0 0
      %1577 = vmatpush1.bf16.msra.mxu0 %v1278
      %1578 = vmatprep.subr.bf16.mxu0 0
      %1579 = vmatpush1.bf16.msra.mxu0 %v1279
      %1580 = vmatprep.subr.bf16.mxu0 0
      %1581 = vmatpush1.bf16.msra.mxu0 %v1280
      %1582 = vmatprep.subr.bf16.mxu0 0
      %1583 = vmatpush1.bf16.msra.mxu0 %v1281
      %1584 = vmatprep.subr.bf16.mxu0 0
      %1585 = vmatpush1.bf16.msra.mxu0 %v1282
      %1586 = vmatprep.subr.bf16.mxu0 0
      %1587 = vmatpush1.bf16.msra.mxu0 %v1283
      %1588 = vmatprep.subr.bf16.mxu0 0
      %1589 = vmatpush1.bf16.msra.mxu0 %v1284
      %1590 = vmatprep.subr.bf16.mxu0 0
      %1591 = vmatpush1.bf16.msra.mxu0 %v1285
      %1592 = vmatprep.subr.bf16.mxu0 0
      %1593 = vmatpush1.bf16.msra.mxu0 %v1286
      %1594 = vmatprep.mubr.bf16.mxu0 %v767
      %1595 = vmatmul.mubr.bf16.gmra.mrb[0].mxu0 %v743
      %v1596 = vpop.f32.mrb[0].mxu0
      %v1597 = vadd.f32 %v1532, %v1596
      %v1598 = vpop.f32.mrb[0].mxu0
      %v1599 = vpop.f32.mrb[0].mxu0
      %v1600 = vadd.f32 %v1535, %v1599
      %v1601 = vpop.f32.mrb[0].mxu0
      %1602 = vmatprep.mubr.bf16.mxu0 %v768
      %1603 = vmatmul.mubr.bf16.gmra.mrb[0].mxu0 %v744
      %v1604 = vpop.f32.mrb[0].mxu0
      %v1605 = vadd.f32 %v1540, %v1604
      %v1606 = vpop.f32.mrb[0].mxu0
      %v1607 = vpop.f32.mrb[0].mxu0
      %v1608 = vadd.f32 %v1543, %v1607
      %v1609 = vpop.f32.mrb[0].mxu0
      %1610 = vmatprep.mubr.bf16.mxu0 %v769
      %1611 = vmatmul.mubr.bf16.gmra.mrb[0].mxu0 %v745
      %v1612 = vpop.f32.mrb[0].mxu0
      %v1613 = vadd.f32 %v1548, %v1612
      %v1614 = vpop.f32.mrb[0].mxu0
      %v1615 = vpop.f32.mrb[0].mxu0
      %v1616 = vadd.f32 %v1551, %v1615
      %v1617 = vpop.f32.mrb[0].mxu0
      %1618 = vmatprep.mubr.bf16.mxu0 %v770
      %1619 = vmatmul.mubr.bf16.gmra.mrb[0].mxu0 %v746
      %v1620 = vpop.f32.mrb[0].mxu0
      %v1621 = vadd.f32 %v1556, %v1620
      %v1622 = vpop.f32.mrb[0].mxu0
      %v1623 = vpop.f32.mrb[0].mxu0
      %v1624 = vadd.f32 %v1559, %v1623
      %v1625 = vpop.f32.mrb[0].mxu0
      %1626 = vdwg.mxu0
      %1627 = vmatprep.subr.bf16.mxu0 0
      %1628 = vmatpush1.bf16.msra.mxu0 %v1287
      %1629 = vmatprep.subr.bf16.mxu0 0
      %1630 = vmatpush1.bf16.msra.mxu0 %v1288
      %1631 = vmatprep.subr.bf16.mxu0 0
      %1632 = vmatpush1.bf16.msra.mxu0 %v1289
      %1633 = vmatprep.subr.bf16.mxu0 0
      %1634 = vmatpush1.bf16.msra.mxu0 %v1290
      %1635 = vmatprep.subr.bf16.mxu0 0
      %1636 = vmatpush1.bf16.msra.mxu0 %v1291
      %1637 = vmatprep.subr.bf16.mxu0 0
      %1638 = vmatpush1.bf16.msra.mxu0 %v1292
      %1639 = vmatprep.subr.bf16.mxu0 0
      %1640 = vmatpush1.bf16.msra.mxu0 %v1293
      %1641 = vmatprep.subr.bf16.mxu0 0
      %1642 = vmatpush1.bf16.msra.mxu0 %v1294
      %1643 = vmatprep.subr.bf16.mxu0 0
      %1644 = vmatpush1.bf16.msra.mxu0 0
      %1645 = vmatprep.subr.bf16.mxu0 0
      %1646 = vmatpush1.bf16.msra.mxu0 0
      %1647 = vmatprep.subr.bf16.mxu0 0
      %1648 = vmatpush1.bf16.msra.mxu0 0
      %1649 = vmatprep.subr.bf16.mxu0 0
      %1650 = vmatpush1.bf16.msra.mxu0 0
      %1651 = vmatprep.subr.bf16.mxu0 0
      %1652 = vmatpush1.bf16.msra.mxu0 0
      %1653 = vmatprep.subr.bf16.mxu0 0
      %1654 = vmatpush1.bf16.msra.mxu0 0
      %1655 = vmatprep.subr.bf16.mxu0 0
      %1656 = vmatpush1.bf16.msra.mxu0 0
      %1657 = vmatprep.subr.bf16.mxu0 0
      %1658 = vmatpush1.bf16.msra.mxu0 0
      %1659 = vmatprep.mubr.bf16.mxu0 0
      %1660 = vmatmul.mubr.bf16.gmra.mrb[0].mxu0 %v783
      %v1661 = vpop.f32.mrb[0].mxu0
      %v1662 = vadd.f32 %v1597, %v1661
      %v1663 = vpop.f32.mrb[0].mxu0
      %v1664 = vpop.f32.mrb[0].mxu0
      %v1665 = vadd.f32 %v1600, %v1664
      %v1666 = vpop.f32.mrb[0].mxu0
      %1667 = vmatprep.mubr.bf16.mxu0 0
      %1668 = vmatmul.mubr.bf16.gmra.mrb[0].mxu0 %v784
      %v1669 = vpop.f32.mrb[0].mxu0
      %v1670 = vadd.f32 %v1605, %v1669
      %v1671 = vpop.f32.mrb[0].mxu0
      %v1672 = vpop.f32.mrb[0].mxu0
      %v1673 = vadd.f32 %v1608, %v1672
      %v1674 = vpop.f32.mrb[0].mxu0
      %1675 = vmatprep.mubr.bf16.mxu0 0
      %1676 = vmatmul.mubr.bf16.gmra.mrb[0].mxu0 %v785
      %v1677 = vpop.f32.mrb[0].mxu0
      %v1678 = vadd.f32 %v1613, %v1677
      %v1679 = vpop.f32.mrb[0].mxu0
      %v1680 = vpop.f32.mrb[0].mxu0
      %v1681 = vadd.f32 %v1616, %v1680
      %v1682 = vpop.f32.mrb[0].mxu0
      %1683 = vmatprep.mubr.bf16.mxu0 0
      %1684 = vmatmul.mubr.bf16.gmra.mrb[0].mxu0 %v786
      %v1685 = vpop.f32.mrb[0].mxu0
      %v1686 = vadd.f32 %v1621, %v1685
      %v1687 = vpop.f32.mrb[0].mxu0
      %v1688 = vpop.f32.mrb[0].mxu0
      %v1689 = vadd.f32 %v1624, %v1688
      %v1690 = vpop.f32.mrb[0].mxu0
      %1691 = vdwg.mxu0
      %v1692 = vpack.c.bf16 %v1665, %v1662
      %v1693 = vpack.c.bf16 %v1673, %v1670
      %v1694 = vpack.c.bf16 %v1681, %v1678
      %v1695 = vpack.c.bf16 %v1689, %v1686
      %v1700 = vunpack.c.l.b16 %v1692
      %v1701 = vunpack.c.h.b16 %v1692
      %v1702 = vunpack.c.l.b16 %v1693
      %v1703 = vunpack.c.h.b16 %v1693
      %v1704 = vunpack.c.l.b16 %v1694
      %v1705 = vunpack.c.h.b16 %v1694
      %v1706 = vunpack.c.l.b16 %v1695
      %v1707 = vunpack.c.h.b16 %v1695
      %v1708 = vpack.c.b16 %v1700, %v1700
      %v1709 = vpack.c.b16 %v1701, %v1701
      %v1710 = vpack.c.b16 %v1702, %v1702
      %v1711 = vpack.c.b16 %v1703, %v1703
      %v1712 = vpack.c.b16 %v1704, %v1704
      %v1713 = vpack.c.b16 %v1705, %v1705
      %v1714 = vpack.c.b16 %v1706, %v1706
      %v1715 = vpack.c.b16 %v1707, %v1707
      %1724 = vst [vmem:[%s177] sm:$0xf] %v1708
      %1725 = vst [vmem:[%s177 + $0x4] sm:$0xf] %v1709
      %1726 = vst [vmem:[%s177 + $0x8] sm:$0xf] %v1710
      %1727 = vst [vmem:[%s177 + $0xc] sm:$0xf] %v1711
      %1728 = vst [vmem:[%s177 + $0x10] sm:$0xf] %v1712
      %1729 = vst [vmem:[%s177 + $0x14] sm:$0xf] %v1713
      %1730 = vst [vmem:[%s177 + $0x18] sm:$0xf] %v1714
      %1731 = vst [vmem:[%s177 + $0x1c] sm:$0xf] %v1715
      %v1732 = vunpack.c.l.bf16 %v1692
      %v1733 = vunpack.c.h.bf16 %v1692
      %v1734 = vunpack.c.l.bf16 %v1693
      %v1735 = vunpack.c.h.bf16 %v1693
      %v1736 = vunpack.c.l.bf16 %v1694
      %v1737 = vunpack.c.h.bf16 %v1694
      %v1738 = vunpack.c.l.bf16 %v1695
      %v1739 = vunpack.c.h.bf16 %v1695
      %v1740 = vadd.f32 %v1732, %v1733
      %v1741 = vadd.f32 %v1740, %v1734
      %v1742 = vadd.f32 %v1741, %v1735
      %v1743 = vadd.f32 %v1742, %v1736
      %v1744 = vadd.f32 %v1743, %v1737
      %v1745 = vadd.f32 %v1744, %v1738
      %v1746 = vadd.f32 %v1745, %v1739
      %v1747 = vrot.slane %v1746, 4
      %v1748 = vadd.f32 %v1746, %v1747
      %v1749 = vrot.slane %v1748, 2
      %v1750 = vadd.f32 %v1748, %v1749
      %v1751 = vrot.slane %v1750, 1
      %v1752 = vadd.f32 %v1750, %v1751
      %v1753 = vmul.f32 %v1732, %v1732
      %v1754 = vmul.f32 %v1733, %v1733
      %v1755 = vmul.f32 %v1734, %v1734
      %v1756 = vmul.f32 %v1735, %v1735
      %v1757 = vmul.f32 %v1736, %v1736
      %v1758 = vmul.f32 %v1737, %v1737
      %v1759 = vmul.f32 %v1738, %v1738
      %v1760 = vmul.f32 %v1739, %v1739
      %v1761 = vadd.f32 %v1753, %v1754
      %v1762 = vadd.f32 %v1761, %v1755
      %v1763 = vadd.f32 %v1762, %v1756
      %v1764 = vadd.f32 %v1763, %v1757
      %v1765 = vadd.f32 %v1764, %v1758
      %v1766 = vadd.f32 %v1765, %v1759
      %v1767 = vadd.f32 %v1766, %v1760
      %v1768 = vrot.slane %v1767, 4
      %v1769 = vadd.f32 %v1767, %v1768
      %v1770 = vrot.slane %v1769, 2
      %v1771 = vadd.f32 %v1769, %v1770
      %v1772 = vrot.slane %v1771, 1
      %v1773 = vadd.f32 %v1771, %v1772
      %vm1774 = vcmask 1040384
      %v1775 = vsel %vm1774, %v1752, %v1773
      %1776 = vst [vmem:[%s181] sm:$0x3] %v1775
      %p1777 = scmp.lt.s32.totalorder %s15, 1
      %s1778 = scalar_select %p1777, %s15, 1
      %s1779 = smul.addr %s1778, 8
      %s1780 = smul.addr %s1779, 4
      %s1781 = scalar_lea.vmem %s2, %s1780
      %p1782 = scmp.lt.s32.totalorder %s15, 1
      %s1783 = scalar_select %p1782, %s15, 1
      %s1784 = smul.addr %s1783, 2
      %s1785 = scalar_lea.vmem %s3, %s1784
      // Predicated region
      $region29: #{preact_block_forward.7} parent=27 // pred_check
        %p1786 = pneg %p80
      $region30: #{preact_block_forward.7} parent=27 // pred_check_branch
        %1788 = sbr.rel (%p1786) target = $region32
      $region31: #{preact_block_forward.7} parent=27 // pred_region
        _
      $region32: #{preact_block_forward.7} parent=27 // pred_fallthru
        _
      // Predicated region
      $region33: #{preact_block_forward.7} parent=27 // pred_check
        %p1789 = pneg %p106
      $region34: #{preact_block_forward.7} parent=27 // pred_check_branch
        %1791 = sbr.rel (%p1789) target = $region36
      $region35: #{preact_block_forward.7} parent=27 // pred_region
        _
      $region36: #{preact_block_forward.7} parent=27 // pred_fallthru
        _
    $region28: #{preact_block_forward.7} parent=5 // pred_fallthru
      _
    %p1792 = scmp.le.s32.totalorder 2, %s10
    // Predicated region
    $region37: #{preact_block_forward.7} parent=5 // pred_check
      %p1793 = pneg %p1792
    $region38: #{preact_block_forward.7} parent=5 // pred_check_branch
      %1795 = sbr.rel (%p1793) target = $region40
    $region39: #{preact_block_forward.7} parent=5 // pred_region
      %s1796 = ssub.s32 %s10, 2
      // Predicated region
      $region41: #{preact_block_forward.7} parent=39 // pred_check
        %p1797 = pneg %p86
      $region42: #{preact_block_forward.7} parent=39 // pred_check_branch
        %1799 = sbr.rel (%p1797) target = $region44
      $region43: #{preact_block_forward.7} parent=39 // pred_region
        %p1800 = scmp.lt.s32.totalorder %s16, 1
        %s1801 = scalar_select %p1800, %s16, 1
        %s1802 = smul.addr %s1801, 8
        %s1803 = smul.addr %s1802, 4
        %s1804 = scalar_lea.vmem %s2, %s1803
      $region44: #{preact_block_forward.7} parent=39 // pred_fallthru
        _
      // Predicated region
      $region45: #{preact_block_forward.7} parent=39 // pred_check
        %p1805 = pneg %p112
      $region46: #{preact_block_forward.7} parent=39 // pred_check_branch
        %1807 = sbr.rel (%p1805) target = $region48
      $region47: #{preact_block_forward.7} parent=39 // pred_region
        %p1808 = scmp.lt.s32.totalorder %s16, 1
        %s1809 = scalar_select %p1808, %s16, 1
        %s1810 = smul.addr %s1809, 2
        %s1811 = scalar_lea.vmem %s3, %s1810
      $region48: #{preact_block_forward.7} parent=39 // pred_fallthru
        _
    $region40: #{preact_block_forward.7} parent=5 // pred_fallthru
      _
  $region6: #{preact_block_forward.7} parent=0 // loop_footer
    %s14 = sadd.s32 1, %s10
  $region7: #{preact_block_forward.7} parent=0 // loop_footer_branch
    %9 = sbr.rel target = $region3
  $region8: #{preact_block_forward.7} parent=0 // loop_exit
    _

// kernel: preact_block_forward.9
$region0: #{preact_block_forward.9}
  #allocation0 [shape = 'u32[]', space=smem, size = 0x4, offset = 0x4, fixed_abs, tag = 'smem constant byte address 0x4 - core index']
  #allocation1 [shape = 'u32[144,128]{1,0:T(1,128)}', space=vmem, size = 0x12000, scoped, tag = 'internal scratch']
  %s0 = inlined_call_operand.vmem [shape: bf16[2,10,10,128], index: 0, kind: input, shape index: {}]
  %s1 = inlined_call_operand.vmem [shape: bf16[1152,128], index: 1, kind: input, shape index: {}]
  %s2 = inlined_call_operand.vmem [shape: bf16[2,9,9,128], index: 2, kind: input, shape index: {}]
  %s3 = inlined_call_operand.vmem [shape: bf16[128,128], index: 3, kind: input, shape index: {}]
  %s4 = inlined_call_operand.vmem [shape: bf16[2,8,8,128], index: 4, kind: output, shape index: {}]
  %s5 = sld [smem:[#allocation0]]
  $region49: #{preact_block_forward.9} parent=0
    _
  %s7 = ssub.s32 1, %s5
  %s8 = scalar_select 0, %s7, %s5
  loop: start=0, step=1, limit=4
  $region2: #{preact_block_forward.9} parent=0 // loop_pre_header
    _
  $region3: #{preact_block_forward.9} parent=0 // loop_header
    %s10 = sphi 0, %s14
    %p11 = scmp.ge.s32.totalorder %s10, 4
    %s20 = sphi 0, %s22
    %s23 = sphi 0, %s20
    %s24 = sphi 0, %s23
    %s40 = sphi 0, %s24
    %s44 = sphi 0, %s44
    %s46 = sphi 0, %s44
    %s47 = sphi 0, %s46
    %s61 = sphi 0, %s47
    %s67 = sphi 0, %s69
    %s70 = sphi 0, %s67
    %s71 = sphi 0, %s70
    %s87 = sphi 0, %s71
    %s91 = sphi 0, %s91
    %s93 = sphi 0, %s91
    %s94 = sphi 0, %s93
    %s108 = sphi 0, %s94
    %s114 = sphi 0, %s116
    %s117 = sphi 0, %s114
    %s118 = sphi 0, %s117
    %s134 = sphi 0, %s118
  $region4: #{preact_block_forward.9} parent=0 // loop_header_branch
    %13 = sbr.rel (%p11) target = $region8
  $region5: #{preact_block_forward.9} parent=0 // loop_body
    %s15 = ssub.s32 %s10, 1
    %s16 = ssub.s32 %s10, 2
    %s17 = sadd.s32 %s10, 1
    %s18 = ssub.s32 %s10, %s17
    %p19 = scmp.eq.s32.totalorder %s18, 0
    %s21 = sadd.s32 %s20, 1
    %s22 = scalar_select %p19, %s20, %s21
    %p25 = pneg %p19
    %p26 = scmp.eq.s32.totalorder %s10, 1
    %p27 = por %p25, %p26
    %p28 = scmp.ne.s32.totalorder %s20, %s23
    %p29 = scmp.eq.s32.totalorder %s10, 0
    %p30 = por %p28, %p29
    %p31 = scmp.ne.s32.totalorder %s20, %s23
    %p32 = scmp.eq.s32.totalorder %s15, 1
    %p33 = por %p31, %p32
    %p34 = scmp.ne.s32.totalorder %s23, %s24
    %p35 = scmp.eq.s32.totalorder %s15, 0
    %p36 = por %p34, %p35
    %p37 = scmp.ne.s32.totalorder %s23, %s24
    %p38 = scmp.eq.s32.totalorder %s16, 1
    %p39 = por %p37, %p38
    %p41 = scmp.ne.s32.totalorder %s24, %s40
    %p42 = scmp.eq.s32.totalorder %s16, 0
    %p43 = por %p41, %p42
    %s45 = sadd.s32 %s44, 1
    %p48 = scmp.eq.s32.totalorder %s10, 1
    %p49 = scmp.ne.s32.totalorder %s44, %s46
    %p50 = scmp.eq.s32.totalorder %s10, 0
    %p51 = por %p49, %p50
    %p52 = scmp.ne.s32.totalorder %s44, %s46
    %p53 = scmp.eq.s32.totalorder %s15, 1
    %p54 = por %p52, %p53
    %p55 = scmp.ne.s32.totalorder %s46, %s47
    %p56 = scmp.eq.s32.totalorder %s15, 0
    %p57 = por %p55, %p56
    %p58 = scmp.ne.s32.totalorder %s46, %s47
    %p59 = scmp.eq.s32.totalorder %s16, 1
    %p60 = por %p58, %p59
    %p62 = scmp.ne.s32.totalorder %s47, %s61
    %p63 = scmp.eq.s32.totalorder %s16, 0
    %p64 = por %p62, %p63
    %s65 = ssub.s32 %s10, %s17
    %p66 = scmp.eq.s32.totalorder %s65, 0
    %s68 = sadd.s32 %s67, 1
    %s69 = scalar_select %p66, %s67, %s68
    %p72 = pneg %p66
    %p73 = scmp.eq.s32.totalorder %s10, 1
    %p74 = por %p72, %p73
    %p75 = scmp.ne.s32.totalorder %s67, %s70
    %p76 = scmp.eq.s32.totalorder %s10, 0
    %p77 = por %p75, %p76
    %p78 = scmp.ne.s32.totalorder %s67, %s70
    %p79 = scmp.eq.s32.totalorder %s15, 1
    %p80 = por %p78, %p79
    %p81 = scmp.ne.s32.totalorder %s70, %s71
    %p82 = scmp.eq.s32.totalorder %s15, 0
    %p83 = por %p81, %p82
    %p84 = scmp.ne.s32.totalorder %s70, %s71
    %p85 = scmp.eq.s32.totalorder %s16, 1
    %p86 = por %p84, %p85
    %p88 = scmp.ne.s32.totalorder %s71, %s87
    %p89 = scmp.eq.s32.totalorder %s16, 0
    %p90 = por %p88, %p89
    %s92 = sadd.s32 %s91, 1
    %p95 = scmp.eq.s32.totalorder %s10, 1
    %p96 = scmp.ne.s32.totalorder %s91, %s93
    %p97 = scmp.eq.s32.totalorder %s10, 0
    %p98 = por %p96, %p97
    %p99 = scmp.ne.s32.totalorder %s91, %s93
    %p100 = scmp.eq.s32.totalorder %s15, 1
    %p101 = por %p99, %p100
    %p102 = scmp.ne.s32.totalorder %s93, %s94
    %p103 = scmp.eq.s32.totalorder %s15, 0
    %p104 = por %p102, %p103
    %p105 = scmp.ne.s32.totalorder %s93, %s94
    %p106 = scmp.eq.s32.totalorder %s16, 1
    %p107 = por %p105, %p106
    %p109 = scmp.ne.s32.totalorder %s94, %s108
    %p110 = scmp.eq.s32.totalorder %s16, 0
    %p111 = por %p109, %p110
    %s112 = ssub.s32 %s10, %s17
    %p113 = scmp.eq.s32.totalorder %s112, 0
    %s115 = sadd.s32 %s114, 1
    %s116 = scalar_select %p113, %s114, %s115
    %p119 = pneg %p113
    %p120 = scmp.eq.s32.totalorder %s10, 1
    %p121 = por %p119, %p120
    %p122 = scmp.ne.s32.totalorder %s114, %s117
    %p123 = scmp.eq.s32.totalorder %s10, 0
    %p124 = por %p122, %p123
    %p125 = scmp.ne.s32.totalorder %s114, %s117
    %p126 = scmp.eq.s32.totalorder %s15, 1
    %p127 = por %p125, %p126
    %p128 = scmp.ne.s32.totalorder %s117, %s118
    %p129 = scmp.eq.s32.totalorder %s15, 0
    %p130 = por %p128, %p129
    %p131 = scmp.ne.s32.totalorder %s117, %s118
    %p132 = scmp.eq.s32.totalorder %s16, 1
    %p133 = por %p131, %p132
    %p135 = scmp.ne.s32.totalorder %s118, %s134
    %p136 = scmp.eq.s32.totalorder %s16, 0
    %p137 = por %p135, %p136
    %p138 = scmp.le.s32.totalorder 1, %s10
    %p139 = scmp.lt.s32.totalorder %s10, 3
    %p140 = pnand %p138, %p139
    %p141 = pneg %p140
    // Predicated region
    $region9: #{preact_block_forward.9} parent=5 // pred_check
      _
    $region10: #{preact_block_forward.9} parent=5 // pred_check_branch
      %143 = sbr.rel (%p140) target = $region12
    $region11: #{preact_block_forward.9} parent=5 // pred_region
      %s144 = ssub.s32 %s10, 1
      // Predicated region
      $region13: #{preact_block_forward.9} parent=11 // pred_check
        %p145 = pneg %p57
      $region14: #{preact_block_forward.9} parent=11 // pred_check_branch
        %147 = sbr.rel (%p145) target = $region16
      $region15: #{preact_block_forward.9} parent=11 // pred_region
        _
      $region16: #{preact_block_forward.9} parent=11 // pred_fallthru
        _
      // Predicated region
      $region17: #{preact_block_forward.9} parent=11 // pred_check
        %p148 = pneg %p104
      $region18: #{preact_block_forward.9} parent=11 // pred_check_branch
        %150 = sbr.rel (%p148) target = $region20
      $region19: #{preact_block_forward.9} parent=11 // pred_region
        _
      $region20: #{preact_block_forward.9} parent=11 // pred_fallthru
        _
    $region12: #{preact_block_forward.9} parent=5 // pred_fallthru
      _
    %p151 = scmp.lt.s32.totalorder %s10, 2
    // Predicated region
    $region21: #{preact_block_forward.9} parent=5 // pred_check
      %p152 = pneg %p151
    $region22: #{preact_block_forward.9} parent=5 // pred_check_branch
      %154 = sbr.rel (%p152) target = $region24
    $region23: #{preact_block_forward.9} parent=5 // pred_region
      // Predicated region
      $region25: #{preact_block_forward.9} parent=23 // pred_check
        %p155 = pneg %p30
      $region26: #{preact_block_forward.9} parent=23 // pred_check_branch
        %157 = sbr.rel (%p155) target = $region28
      $region27: #{preact_block_forward.9} parent=23 // pred_region
        %p158 = scmp.lt.s32.totalorder %s10, 1
        %s159 = scalar_select %p158, %s10, 1
        %s160 = smul.addr %s159, 20
        %s161 = smul.addr %s160, 4
        %s162 = scalar_lea.vmem %s0, %s161
      $region28: #{preact_block_forward.9} parent=23 // pred_fallthru
        _
      // Predicated region
      $region29: #{preact_block_forward.9} parent=23 // pred_check
        %p163 = pneg %p77
      $region30: #{preact_block_forward.9} parent=23 // pred_check_branch
        %165 = sbr.rel (%p163) target = $region32
      $region31: #{preact_block_forward.9} parent=23 // pred_region
        %p166 = scmp.lt.s32.totalorder %s10, 1
        %s167 = scalar_select %p166, %s10, 1
        %s168 = smul.addr %s167, 18
        %s169 = smul.addr %s168, 4
        %s170 = scalar_lea.vmem %s2, %s169
      $region32: #{preact_block_forward.9} parent=23 // pred_fallthru
        _
    $region24: #{preact_block_forward.9} parent=5 // pred_fallthru
      _
    %p171 = scmp.le.s32.totalorder 1, %s10
    %p172 = scmp.lt.s32.totalorder %s10, 3
    %p173 = pnand %p171, %p172
    %p174 = pneg %p173
    // Predicated region
    $region33: #{preact_block_forward.9} parent=5 // pred_check
      _
    $region34: #{preact_block_forward.9} parent=5 // pred_check_branch
      %176 = sbr.rel (%p173) target = $region36
    $region35: #{preact_block_forward.9} parent=5 // pred_region
      %s177 = ssub.s32 %s10, 1
      %p178 = scmp.lt.s32.totalorder %s15, 1
      %s179 = scalar_select %p178, %s15, 1
      %s180 = smul.addr %s179, 20
      %s181 = smul.addr %s180, 4
      %s182 = scalar_lea.vmem %s0, %s181
      %p183 = pneg %p36
      %p184 = pneg %p33
      %p185 = pneg %p57
      %p186 = pneg %p54
      %p187 = scmp.lt.s32.totalorder %s15, 1
      %s188 = scalar_select %p187, %s15, 1
      %s189 = smul.addr %s188, 18
      %s190 = smul.addr %s189, 4
      %s191 = scalar_lea.vmem %s2, %s190
      %p192 = pneg %p83
      %p193 = pneg %p80
      %p194 = pneg %p104
      %p195 = pneg %p101
      %p196 = pneg %p130
      %p197 = pneg %p127
      %p198 = scmp.lt.s32.totalorder %s15, 1
      %s199 = scalar_select %p198, %s15, 1
      %s200 = smul.addr %s199, 8
      %s201 = smul.addr %s200, 4
      %s202 = scalar_lea.vmem %s4, %s201
      %p203 = scmp.lt.s32.totalorder %s15, 1
      %s204 = scalar_select %p203, %s15, 1
      %s205 = smul.addr %s204, 20
      %s206 = smul.addr %s205, 4
      %s207 = scalar_lea.vmem %s0, %s206
      %p208 = scmp.lt.s32.totalorder %s15, 1
      %s209 = scalar_select %p208, %s15, 1
      %s210 = smul.addr %s209, 18
      %s211 = smul.addr %s210, 4
      %s212 = scalar_lea.vmem %s2, %s211
      %p213 = scmp.lt.s32.totalorder %s15, 1
      %s214 = scalar_select %p213, %s15, 1
      %s215 = smul.addr %s214, 8
      %s216 = smul.addr %s215, 4
      %s217 = scalar_lea.vmem %s4, %s216
      %v219 = vld [vmem:[%s207] sm:$0xf]
      %v220 = vld [vmem:[%s207 + $0x8] sm:$0xf]
      %v221 = vld [vmem:[%s207 + $0x10] sm:$0xf]
      %v222 = vld [vmem:[%s207 + $0x18] sm:$0xf]
      %v223 = vld [vmem:[%s207 + $0x20] sm:$0xf]
      %v224 = vld [vmem:[%s207 + $0x28] sm:$0xf]
      %v225 = vld [vmem:[%s207 + $0x30] sm:$0xf]
      %v226 = vld [vmem:[%s207 + $0x38] sm:$0xf]
      %v227 = vld [vmem:[%s207 + $0x4] sm:$0x1]
      %v228 = vld [vmem:[%s207 + $0xc] sm:$0x1]
      %v229 = vld [vmem:[%s207 + $0x14] sm:$0x1]
      %v230 = vld [vmem:[%s207 + $0x1c] sm:$0x1]
      %v231 = vld [vmem:[%s207 + $0x24] sm:$0x1]
      %v232 = vld [vmem:[%s207 + $0x2c] sm:$0x1]
      %v233 = vld [vmem:[%s207 + $0x34] sm:$0x1]
      %v234 = vld [vmem:[%s207 + $0x3c] sm:$0x1]
      %vm235 = vsmask.f32 3328
      %vm236 = vsmask.f32 7440
      %vm237 = vmor %vm235, %vm236
      %v239 = vshrl.u32 %v219, 16
      %v241 = vrot.slane %v239, 4
      %v242 = vshll.u32 %v219, 16
      %v244 = vrot.slane %v242, 5
      %v245 = vor.u32 %v241, %v244
      %v246 = vrot.slane %v245, 4
      %v248 = vshll.u32 %v227, 16
      %v250 = vrot.slane %v248, 5
      %v251 = vsel %vm237, %v246, %v250
      %v253 = vshrl.u32 %v220, 16
      %v255 = vrot.slane %v253, 4
      %v256 = vshll.u32 %v220, 16
      %v258 = vrot.slane %v256, 5
      %v259 = vor.u32 %v255, %v258
      %v260 = vrot.slane %v259, 4
      %v262 = vshll.u32 %v228, 16
      %v264 = vrot.slane %v262, 5
      %v265 = vsel %vm237, %v260, %v264
      %v267 = vshrl.u32 %v221, 16
      %v269 = vrot.slane %v267, 4
      %v270 = vshll.u32 %v221, 16
      %v272 = vrot.slane %v270, 5
      %v273 = vor.u32 %v269, %v272
      %v274 = vrot.slane %v273, 4
      %v276 = vshll.u32 %v229, 16
      %v278 = vrot.slane %v276, 5
      %v279 = vsel %vm237, %v274, %v278
      %v281 = vshrl.u32 %v222, 16
      %v283 = vrot.slane %v281, 4
      %v284 = vshll.u32 %v222, 16
      %v286 = vrot.slane %v284, 5
      %v287 = vor.u32 %v283, %v286
      %v288 = vrot.slane %v287, 4
      %v290 = vshll.u32 %v230, 16
      %v292 = vrot.slane %v290, 5
      %v293 = vsel %vm237, %v288, %v292
      %v295 = vshrl.u32 %v223, 16
      %v297 = vrot.slane %v295, 4
      %v298 = vshll.u32 %v223, 16
      %v300 = vrot.slane %v298, 5
      %v301 = vor.u32 %v297, %v300
      %v302 = vrot.slane %v301, 4
      %v304 = vshll.u32 %v231, 16
      %v306 = vrot.slane %v304, 5
      %v307 = vsel %vm237, %v302, %v306
      %v309 = vshrl.u32 %v224, 16
      %v311 = vrot.slane %v309, 4
      %v312 = vshll.u32 %v224, 16
      %v314 = vrot.slane %v312, 5
      %v315 = vor.u32 %v311, %v314
      %v316 = vrot.slane %v315, 4
      %v318 = vshll.u32 %v232, 16
      %v320 = vrot.slane %v318, 5
      %v321 = vsel %vm237, %v316, %v320
      %v323 = vshrl.u32 %v225, 16
      %v325 = vrot.slane %v323, 4
      %v326 = vshll.u32 %v225, 16
      %v328 = vrot.slane %v326, 5
      %v329 = vor.u32 %v325, %v328
      %v330 = vrot.slane %v329, 4
      %v332 = vshll.u32 %v233, 16
      %v334 = vrot.slane %v332, 5
      %v335 = vsel %vm237, %v330, %v334
      %v337 = vshrl.u32 %v226, 16
      %v339 = vrot.slane %v337, 4
      %v340 = vshll.u32 %v226, 16
      %v342 = vrot.slane %v340, 5
      %v343 = vor.u32 %v339, %v342
      %v344 = vrot.slane %v343, 4
      %v346 = vshll.u32 %v234, 16
      %v348 = vrot.slane %v346, 5
      %v349 = vsel %vm237, %v344, %v348
      %v350 = vld [vmem:[%s207] sm:$0xe]
      %v351 = vld [vmem:[%s207 + $0x8] sm:$0xe]
      %v352 = vld [vmem:[%s207 + $0x10] sm:$0xe]
      %v353 = vld [vmem:[%s207 + $0x18] sm:$0xe]
      %v354 = vld [vmem:[%s207 + $0x20] sm:$0xe]
      %v355 = vld [vmem:[%s207 + $0x28] sm:$0xe]
      %v356 = vld [vmem:[%s207 + $0x30] sm:$0xe]
      %v357 = vld [vmem:[%s207 + $0x38] sm:$0xe]
      %vm374 = vcmask 1042432
      %vm375 = vcmask 1046532
      %vm376 = vmor %vm374, %vm375
      %v377 = vrot.slane %v350, 5
      %v378 = vrot.slane %v377, 4
      %v379 = vrot.slane %v227, 5
      %v380 = vsel %vm376, %v378, %v379
      %v381 = vrot.slane %v351, 5
      %v382 = vrot.slane %v381, 4
      %v383 = vrot.slane %v228, 5
      %v384 = vsel %vm376, %v382, %v383
      %v385 = vrot.slane %v352, 5
      %v386 = vrot.slane %v385, 4
      %v387 = vrot.slane %v229, 5
      %v388 = vsel %vm376, %v386, %v387
      %v389 = vrot.slane %v353, 5
      %v390 = vrot.slane %v389, 4
      %v391 = vrot.slane %v230, 5
      %v392 = vsel %vm376, %v390, %v391
      %v393 = vrot.slane %v354, 5
      %v394 = vrot.slane %v393, 4
      %v395 = vrot.slane %v231, 5
      %v396 = vsel %vm376, %v394, %v395
      %v397 = vrot.slane %v355, 5
      %v398 = vrot.slane %v397, 4
      %v399 = vrot.slane %v232, 5
      %v400 = vsel %vm376, %v398, %v399
      %v401 = vrot.slane %v356, 5
      %v402 = vrot.slane %v401, 4
      %v403 = vrot.slane %v233, 5
      %v404 = vsel %vm376, %v402, %v403
      %v405 = vrot.slane %v357, 5
      %v406 = vrot.slane %v405, 4
      %v407 = vrot.slane %v234, 5
      %v408 = vsel %vm376, %v406, %v407
      %s409 = scalar_lea.vmem %s207, 8
      %v410 = vld [vmem:[%s409] sm:$0xf]
      %v411 = vld [vmem:[%s409 + $0x8] sm:$0xf]
      %v412 = vld [vmem:[%s409 + $0x10] sm:$0xf]
      %v413 = vld [vmem:[%s409 + $0x18] sm:$0xf]
      %v414 = vld [vmem:[%s409 + $0x20] sm:$0xf]
      %v415 = vld [vmem:[%s409 + $0x28] sm:$0xf]
      %v416 = vld [vmem:[%s409 + $0x30] sm:$0xf]
      %v417 = vld [vmem:[%s409 + $0x38] sm:$0xf]
      %v418 = vld [vmem:[%s409 + $0x4] sm:$0x1]
      %v419 = vld [vmem:[%s409 + $0xc] sm:$0x1]
      %v420 = vld [vmem:[%s409 + $0x14] sm:$0x1]
      %v421 = vld [vmem:[%s409 + $0x1c] sm:$0x1]
      %v422 = vld [vmem:[%s409 + $0x24] sm:$0x1]
      %v423 = vld [vmem:[%s409 + $0x2c] sm:$0x1]
      %v424 = vld [vmem:[%s409 + $0x34] sm:$0x1]
      %v425 = vld [vmem:[%s409 + $0x3c] sm:$0x1]
      %v427 = vshrl.u32 %v410, 16
      %v429 = vrot.slane %v427, 4
      %v430 = vshll.u32 %v410, 16
      %v432 = vrot.slane %v430, 5
      %v433 = vor.u32 %v429, %v432
      %v434 = vrot.slane %v433, 4
      %v436 = vshll.u32 %v418, 16
      %v438 = vrot.slane %v436, 5
      %v439 = vsel %vm237, %v434, %v438
      %v441 = vshrl.u32 %v411, 16
      %v443 = vrot.slane %v441, 4
      %v444 = vshll.u32 %v411, 16
      %v446 = vrot.slane %v444, 5
      %v447 = vor.u32 %v443, %v446
      %v448 = vrot.slane %v447, 4
      %v450 = vshll.u32 %v419, 16
      %v452 = vrot.slane %v450, 5
      %v453 = vsel %vm237, %v448, %v452
      %v455 = vshrl.u32 %v412, 16
      %v457 = vrot.slane %v455, 4
      %v458 = vshll.u32 %v412, 16
      %v460 = vrot.slane %v458, 5
      %v461 = vor.u32 %v457, %v460
      %v462 = vrot.slane %v461, 4
      %v464 = vshll.u32 %v420, 16
      %v466 = vrot.slane %v464, 5
      %v467 = vsel %vm237, %v462, %v466
      %v469 = vshrl.u32 %v413, 16
      %v471 = vrot.slane %v469, 4
      %v472 = vshll.u32 %v413, 16
      %v474 = vrot.slane %v472, 5
      %v475 = vor.u32 %v471, %v474
      %v476 = vrot.slane %v475, 4
      %v478 = vshll.u32 %v421, 16
      %v480 = vrot.slane %v478, 5
      %v481 = vsel %vm237, %v476, %v480
      %v483 = vshrl.u32 %v414, 16
      %v485 = vrot.slane %v483, 4
      %v486 = vshll.u32 %v414, 16
      %v488 = vrot.slane %v486, 5
      %v489 = vor.u32 %v485, %v488
      %v490 = vrot.slane %v489, 4
      %v492 = vshll.u32 %v422, 16
      %v494 = vrot.slane %v492, 5
      %v495 = vsel %vm237, %v490, %v494
      %v497 = vshrl.u32 %v415, 16
      %v499 = vrot.slane %v497, 4
      %v500 = vshll.u32 %v415, 16
      %v502 = vrot.slane %v500, 5
      %v503 = vor.u32 %v499, %v502
      %v504 = vrot.slane %v503, 4
      %v506 = vshll.u32 %v423, 16
      %v508 = vrot.slane %v506, 5
      %v509 = vsel %vm237, %v504, %v508
      %v511 = vshrl.u32 %v416, 16
      %v513 = vrot.slane %v511, 4
      %v514 = vshll.u32 %v416, 16
      %v516 = vrot.slane %v514, 5
      %v517 = vor.u32 %v513, %v516
      %v518 = vrot.slane %v517, 4
      %v520 = vshll.u32 %v424, 16
      %v522 = vrot.slane %v520, 5
      %v523 = vsel %vm237, %v518, %v522
      %v525 = vshrl.u32 %v417, 16
      %v527 = vrot.slane %v525, 4
      %v528 = vshll.u32 %v417, 16
      %v530 = vrot.slane %v528, 5
      %v531 = vor.u32 %v527, %v530
      %v532 = vrot.slane %v531, 4
      %v534 = vshll.u32 %v425, 16
      %v536 = vrot.slane %v534, 5
      %v537 = vsel %vm237, %v532, %v536
      %v538 = vld [vmem:[%s409] sm:$0xe]
      %v539 = vld [vmem:[%s409 + $0x8] sm:$0xe]
      %v540 = vld [vmem:[%s409 + $0x10] sm:$0xe]
      %v541 = vld [vmem:[%s409 + $0x18] sm:$0xe]
      %v542 = vld [vmem:[%s409 + $0x20] sm:$0xe]
      %v543 = vld [vmem:[%s409 + $0x28] sm:$0xe]
      %v544 = vld [vmem:[%s409 + $0x30] sm:$0xe]
      %v545 = vld [vmem:[%s409 + $0x38] sm:$0xe]
      %v562 = vrot.slane %v538, 5
      %v563 = vrot.slane %v562, 4
      %v564 = vrot.slane %v418, 5
      %v565 = vsel %vm376, %v563, %v564
      %v566 = vrot.slane %v539, 5
      %v567 = vrot.slane %v566, 4
      %v568 = vrot.slane %v419, 5
      %v569 = vsel %vm376, %v567, %v568
      %v570 = vrot.slane %v540, 5
      %v571 = vrot.slane %v570, 4
      %v572 = vrot.slane %v420, 5
      %v573 = vsel %vm376, %v571, %v572
      %v574 = vrot.slane %v541, 5
      %v575 = vrot.slane %v574, 4
      %v576 = vrot.slane %v421, 5
      %v577 = vsel %vm376, %v575, %v576
      %v578 = vrot.slane %v542, 5
      %v579 = vrot.slane %v578, 4
      %v580 = vrot.slane %v422, 5
      %v581 = vsel %vm376, %v579, %v580
      %v582 = vrot.slane %v543, 5
      %v583 = vrot.slane %v582, 4
      %v584 = vrot.slane %v423, 5
      %v585 = vsel %vm376, %v583, %v584
      %v586 = vrot.slane %v544, 5
      %v587 = vrot.slane %v586, 4
      %v588 = vrot.slane %v424, 5
      %v589 = vsel %vm376, %v587, %v588
      %v590 = vrot.slane %v545, 5
      %v591 = vrot.slane %v590, 4
      %v592 = vrot.slane %v425, 5
      %v593 = vsel %vm376, %v591, %v592
      %s594 = scalar_lea.vmem %s207, 16
      %v595 = vld [vmem:[%s594] sm:$0xf]
      %v596 = vld [vmem:[%s594 + $0x8] sm:$0xf]
      %v597 = vld [vmem:[%s594 + $0x10] sm:$0xf]
      %v598 = vld [vmem:[%s594 + $0x18] sm:$0xf]
      %v599 = vld [vmem:[%s594 + $0x20] sm:$0xf]
      %v600 = vld [vmem:[%s594 + $0x28] sm:$0xf]
      %v601 = vld [vmem:[%s594 + $0x30] sm:$0xf]
      %v602 = vld [vmem:[%s594 + $0x38] sm:$0xf]
      %v603 = vld [vmem:[%s594 + $0x4] sm:$0x1]
      %v604 = vld [vmem:[%s594 + $0xc] sm:$0x1]
      %v605 = vld [vmem:[%s594 + $0x14] sm:$0x1]
      %v606 = vld [vmem:[%s594 + $0x1c] sm:$0x1]
      %v607 = vld [vmem:[%s594 + $0x24] sm:$0x1]
      %v608 = vld [vmem:[%s594 + $0x2c] sm:$0x1]
      %v609 = vld [vmem:[%s594 + $0x34] sm:$0x1]
      %v610 = vld [vmem:[%s594 + $0x3c] sm:$0x1]
      %v612 = vshrl.u32 %v595, 16
      %v614 = vrot.slane %v612, 4
      %v615 = vshll.u32 %v595, 16
      %v617 = vrot.slane %v615, 5
      %v618 = vor.u32 %v614, %v617
      %v619 = vrot.slane %v618, 4
      %v621 = vshll.u32 %v603, 16
      %v623 = vrot.slane %v621, 5
      %v624 = vsel %vm237, %v619, %v623
      %v626 = vshrl.u32 %v596, 16
      %v628 = vrot.slane %v626, 4
      %v629 = vshll.u32 %v596, 16
      %v631 = vrot.slane %v629, 5
      %v632 = vor.u32 %v628, %v631
      %v633 = vrot.slane %v632, 4
      %v635 = vshll.u32 %v604, 16
      %v637 = vrot.slane %v635, 5
      %v638 = vsel %vm237, %v633, %v637
      %v640 = vshrl.u32 %v597, 16
      %v642 = vrot.slane %v640, 4
      %v643 = vshll.u32 %v597, 16
      %v645 = vrot.slane %v643, 5
      %v646 = vor.u32 %v642, %v645
      %v647 = vrot.slane %v646, 4
      %v649 = vshll.u32 %v605, 16
      %v651 = vrot.slane %v649, 5
      %v652 = vsel %vm237, %v647, %v651
      %v654 = vshrl.u32 %v598, 16
      %v656 = vrot.slane %v654, 4
      %v657 = vshll.u32 %v598, 16
      %v659 = vrot.slane %v657, 5
      %v660 = vor.u32 %v656, %v659
      %v661 = vrot.slane %v660, 4
      %v663 = vshll.u32 %v606, 16
      %v665 = vrot.slane %v663, 5
      %v666 = vsel %vm237, %v661, %v665
      %v668 = vshrl.u32 %v599, 16
      %v670 = vrot.slane %v668, 4
      %v671 = vshll.u32 %v599, 16
      %v673 = vrot.slane %v671, 5
      %v674 = vor.u32 %v670, %v673
      %v675 = vrot.slane %v674, 4
      %v677 = vshll.u32 %v607, 16
      %v679 = vrot.slane %v677, 5
      %v680 = vsel %vm237, %v675, %v679
      %v682 = vshrl.u32 %v600, 16
      %v684 = vrot.slane %v682, 4
      %v685 = vshll.u32 %v600, 16
      %v687 = vrot.slane %v685, 5
      %v688 = vor.u32 %v684, %v687
      %v689 = vrot.slane %v688, 4
      %v691 = vshll.u32 %v608, 16
      %v693 = vrot.slane %v691, 5
      %v694 = vsel %vm237, %v689, %v693
      %v696 = vshrl.u32 %v601, 16
      %v698 = vrot.slane %v696, 4
      %v699 = vshll.u32 %v601, 16
      %v701 = vrot.slane %v699, 5
      %v702 = vor.u32 %v698, %v701
      %v703 = vrot.slane %v702, 4
      %v705 = vshll.u32 %v609, 16
      %v707 = vrot.slane %v705, 5
      %v708 = vsel %vm237, %v703, %v707
      %v710 = vshrl.u32 %v602, 16
      %v712 = vrot.slane %v710, 4
      %v713 = vshll.u32 %v602, 16
      %v715 = vrot.slane %v713, 5
      %v716 = vor.u32 %v712, %v715
      %v717 = vrot.slane %v716, 4
      %v719 = vshll.u32 %v610, 16
      %v721 = vrot.slane %v719, 5
      %v722 = vsel %vm237, %v717, %v721
      %v723 = vld [vmem:[%s594] sm:$0xe]
      %v724 = vld [vmem:[%s594 + $0x8] sm:$0xe]
      %v725 = vld [vmem:[%s594 + $0x10] sm:$0xe]
      %v726 = vld [vmem:[%s594 + $0x18] sm:$0xe]
      %v727 = vld [vmem:[%s594 + $0x20] sm:$0xe]
      %v728 = vld [vmem:[%s594 + $0x28] sm:$0xe]
      %v729 = vld [vmem:[%s594 + $0x30] sm:$0xe]
      %v730 = vld [vmem:[%s594 + $0x38] sm:$0xe]
      %v747 = vrot.slane %v723, 5
      %v748 = vrot.slane %v747, 4
      %v749 = vrot.slane %v603, 5
      %v750 = vsel %vm376, %v748, %v749
      %v751 = vrot.slane %v724, 5
      %v752 = vrot.slane %v751, 4
      %v753 = vrot.slane %v604, 5
      %v754 = vsel %vm376, %v752, %v753
      %v755 = vrot.slane %v725, 5
      %v756 = vrot.slane %v755, 4
      %v757 = vrot.slane %v605, 5
      %v758 = vsel %vm376, %v756, %v757
      %v759 = vrot.slane %v726, 5
      %v760 = vrot.slane %v759, 4
      %v761 = vrot.slane %v606, 5
      %v762 = vsel %vm376, %v760, %v761
      %v763 = vrot.slane %v727, 5
      %v764 = vrot.slane %v763, 4
      %v765 = vrot.slane %v607, 5
      %v766 = vsel %vm376, %v764, %v765
      %v767 = vrot.slane %v728, 5
      %v768 = vrot.slane %v767, 4
      %v769 = vrot.slane %v608, 5
      %v770 = vsel %vm376, %v768, %v769
      %v771 = vrot.slane %v729, 5
      %v772 = vrot.slane %v771, 4
      %v773 = vrot.slane %v609, 5
      %v774 = vsel %vm376, %v772, %v773
      %v775 = vrot.slane %v730, 5
      %v776 = vrot.slane %v775, 4
      %v777 = vrot.slane %v610, 5
      %v778 = vsel %vm376, %v776, %v777
      %v787 = vunpack.c.l.b16 %v219
      %v788 = vunpack.c.l.b16 %v220
      %v789 = vunpack.c.l.b16 %v221
      %v790 = vunpack.c.l.b16 %v222
      %v791 = vunpack.c.l.b16 %v223
      %v792 = vunpack.c.l.b16 %v224
      %v793 = vunpack.c.l.b16 %v225
      %v794 = vunpack.c.l.b16 %v226
      %v795 = vpack.c.b16 %v788, %v787
      %v796 = vpack.c.b16 %v790, %v789
      %v797 = vpack.c.b16 %v792, %v791
      %v798 = vpack.c.b16 %v794, %v793
      %v803 = vunpack.c.l.b16 %v251
      %v804 = vunpack.c.l.b16 %v265
      %v805 = vunpack.c.l.b16 %v279
      %v806 = vunpack.c.l.b16 %v293
      %v807 = vunpack.c.l.b16 %v307
      %v808 = vunpack.c.l.b16 %v321
      %v809 = vunpack.c.l.b16 %v335
      %v810 = vunpack.c.l.b16 %v349
      %v811 = vpack.c.b16 %v804, %v803
      %v812 = vpack.c.b16 %v806, %v805
      %v813 = vpack.c.b16 %v808, %v807
      %v814 = vpack.c.b16 %v810, %v809
      %v819 = vunpack.c.l.b16 %v380
      %v820 = vunpack.c.l.b16 %v384
      %v821 = vunpack.c.l.b16 %v388
      %v822 = vunpack.c.l.b16 %v392
      %v823 = vunpack.c.l.b16 %v396
      %v824 = vunpack.c.l.b16 %v400
      %v825 = vunpack.c.l.b16 %v404
      %v826 = vunpack.c.l.b16 %v408
      %v827 = vpack.c.b16 %v820, %v819
      %v828 = vpack.c.b16 %v822, %v821
      %v829 = vpack.c.b16 %v824, %v823
      %v830 = vpack.c.b16 %v826, %v825
      %v843 = vunpack.c.l.b16 %v410
      %v844 = vunpack.c.l.b16 %v411
      %v845 = vunpack.c.l.b16 %v412
      %v846 = vunpack.c.l.b16 %v413
      %v847 = vunpack.c.l.b16 %v414
      %v848 = vunpack.c.l.b16 %v415
      %v849 = vunpack.c.l.b16 %v416
      %v850 = vunpack.c.l.b16 %v417
      %v851 = vpack.c.b16 %v844, %v843
      %v852 = vpack.c.b16 %v846, %v845
      %v853 = vpack.c.b16 %v848, %v847
      %v854 = vpack.c.b16 %v850, %v849
      %v859 = vunpack.c.l.b16 %v439
      %v860 = vunpack.c.l.b16 %v453
      %v861 = vunpack.c.l.b16 %v467
      %v862 = vunpack.c.l.b16 %v481
      %v863 = vunpack.c.l.b16 %v495
      %v864 = vunpack.c.l.b16 %v509
      %v865 = vunpack.c.l.b16 %v523
      %v866 = vunpack.c.l.b16 %v537
      %v867 = vpack.c.b16 %v860, %v859
      %v868 = vpack.c.b16 %v862, %v861
      %v869 = vpack.c.b16 %v864, %v863
      %v870 = vpack.c.b16 %v866, %v865
      %v875 = vunpack.c.l.b16 %v565
      %v876 = vunpack.c.l.b16 %v569
      %v877 = vunpack.c.l.b16 %v573
      %v878 = vunpack.c.l.b16 %v577
      %v879 = vunpack.c.l.b16 %v581
      %v880 = vunpack.c.l.b16 %v585
      %v881 = vunpack.c.l.b16 %v589
      %v882 = vunpack.c.l.b16 %v593
      %v883 = vpack.c.b16 %v876, %v875
      %v884 = vpack.c.b16 %v878, %v877
      %v885 = vpack.c.b16 %v880, %v879
      %v886 = vpack.c.b16 %v882, %v881
      %v899 = vunpack.c.l.b16 %v595
      %v900 = vunpack.c.l.b16 %v596
      %v901 = vunpack.c.l.b16 %v597
      %v902 = vunpack.c.l.b16 %v598
      %v903 = vunpack.c.l.b16 %v599
      %v904 = vunpack.c.l.b16 %v600
      %v905 = vunpack.c.l.b16 %v601
      %v906 = vunpack.c.l.b16 %v602
      %v907 = vpack.c.b16 %v900, %v899
      %v908 = vpack.c.b16 %v902, %v901
      %v909 = vpack.c.b16 %v904, %v903
      %v910 = vpack.c.b16 %v906, %v905
      %v915 = vunpack.c.l.b16 %v624
      %v916 = vunpack.c.l.b16 %v638
      %v917 = vunpack.c.l.b16 %v652
      %v918 = vunpack.c.l.b16 %v666
      %v919 = vunpack.c.l.b16 %v680
      %v920 = vunpack.c.l.b16 %v694
      %v921 = vunpack.c.l.b16 %v708
      %v922 = vunpack.c.l.b16 %v722
      %v923 = vpack.c.b16 %v916, %v915
      %v924 = vpack.c.b16 %v918, %v917
      %v925 = vpack.c.b16 %v920, %v919
      %v926 = vpack.c.b16 %v922, %v921
      %v931 = vunpack.c.l.b16 %v750
      %v932 = vunpack.c.l.b16 %v754
      %v933 = vunpack.c.l.b16 %v758
      %v934 = vunpack.c.l.b16 %v762
      %v935 = vunpack.c.l.b16 %v766
      %v936 = vunpack.c.l.b16 %v770
      %v937 = vunpack.c.l.b16 %v774
      %v938 = vunpack.c.l.b16 %v778
      %v939 = vpack.c.b16 %v932, %v931
      %v940 = vpack.c.b16 %v934, %v933
      %v941 = vpack.c.b16 %v936, %v935
      %v942 = vpack.c.b16 %v938, %v937
      %v947 = vld [vmem:[%s1] sm:$0xf]
      %v948 = vld [vmem:[%s1 + $0x4] sm:$0xf]
      %v949 = vld [vmem:[%s1 + $0x8] sm:$0xf]
      %v950 = vld [vmem:[%s1 + $0xc] sm:$0xf]
      %v951 = vld [vmem:[%s1 + $0x10] sm:$0xf]
      %v952 = vld [vmem:[%s1 + $0x14] sm:$0xf]
      %v953 = vld [vmem:[%s1 + $0x18] sm:$0xf]
      %v954 = vld [vmem:[%s1 + $0x1c] sm:$0xf]
      %v955 = vld [vmem:[%s1 + $0x20] sm:$0xf]
      %v956 = vld [vmem:[%s1 + $0x24] sm:$0xf]
      %v957 = vld [vmem:[%s1 + $0x28] sm:$0xf]
      %v958 = vld [vmem:[%s1 + $0x2c] sm:$0xf]
      %v959 = vld [vmem:[%s1 + $0x30] sm:$0xf]
      %v960 = vld [vmem:[%s1 + $0x34] sm:$0xf]
      %v961 = vld [vmem:[%s1 + $0x38] sm:$0xf]
      %v962 = vld [vmem:[%s1 + $0x3c] sm:$0xf]
      %v963 = vld [vmem:[%s1 + $0x40] sm:$0xf]
      %v964 = vld [vmem:[%s1 + $0x44] sm:$0xf]
      %v965 = vld [vmem:[%s1 + $0x48] sm:$0xf]
      %v966 = vld [vmem:[%s1 + $0x4c] sm:$0xf]
      %v967 = vld [vmem:[%s1 + $0x50] sm:$0xf]
      %v968 = vld [vmem:[%s1 + $0x54] sm:$0xf]
      %v969 = vld [vmem:[%s1 + $0x58] sm:$0xf]
      %v970 = vld [vmem:[%s1 + $0x5c] sm:$0xf]
      %v971 = vld [vmem:[%s1 + $0x60] sm:$0xf]
      %v972 = vld [vmem:[%s1 + $0x64] sm:$0xf]
      %v973 = vld [vmem:[%s1 + $0x68] sm:$0xf]
      %v974 = vld [vmem:[%s1 + $0x6c] sm:$0xf]
      %v975 = vld [vmem:[%s1 + $0x70] sm:$0xf]
      %v976 = vld [vmem:[%s1 + $0x74] sm:$0xf]
      %v977 = vld [vmem:[%s1 + $0x78] sm:$0xf]
      %v978 = vld [vmem:[%s1 + $0x7c] sm:$0xf]
      %v979 = vld [vmem:[%s1 + $0x80] sm:$0xf]
      %v980 = vld [vmem:[%s1 + $0x84] sm:$0xf]
      %v981 = vld [vmem:[%s1 + $0x88] sm:$0xf]
      %v982 = vld [vmem:[%s1 + $0x8c] sm:$0xf]
      %v983 = vld [vmem:[%s1 + $0x90] sm:$0xf]
      %v984 = vld [vmem:[%s1 + $0x94] sm:$0xf]
      %v985 = vld [vmem:[%s1 + $0x98] sm:$0xf]
      %v986 = vld [vmem:[%s1 + $0x9c] sm:$0xf]
      %v987 = vld [vmem:[%s1 + $0xa0] sm:$0xf]
      %v988 = vld [vmem:[%s1 + $0xa4] sm:$0xf]
      %v989 = vld [vmem:[%s1 + $0xa8] sm:$0xf]
      %v990 = vld [vmem:[%s1 + $0xac] sm:$0xf]
      %v991 = vld [vmem:[%s1 + $0xb0] sm:$0xf]
      %v992 = vld [vmem:[%s1 + $0xb4] sm:$0xf]
      %v993 = vld [vmem:[%s1 + $0xb8] sm:$0xf]
      %v994 = vld [vmem:[%s1 + $0xbc] sm:$0xf]
      %v995 = vld [vmem:[%s1 + $0xc0] sm:$0xf]
      %v996 = vld [vmem:[%s1 + $0xc4] sm:$0xf]
      %v997 = vld [vmem:[%s1 + $0xc8] sm:$0xf]
      %v998 = vld [vmem:[%s1 + $0xcc] sm:$0xf]
      %v999 = vld [vmem:[%s1 + $0xd0] sm:$0xf]
      %v1000 = vld [vmem:[%s1 + $0xd4] sm:$0xf]
      %v1001 = vld [vmem:[%s1 + $0xd8] sm:$0xf]
      %v1002 = vld [vmem:[%s1 + $0xdc] sm:$0xf]
      %v1003 = vld [vmem:[%s1 + $0xe0] sm:$0xf]
      %v1004 = vld [vmem:[%s1 + $0xe4] sm:$0xf]
      %v1005 = vld [vmem:[%s1 + $0xe8] sm:$0xf]
      %v1006 = vld [vmem:[%s1 + $0xec] sm:$0xf]
      %v1007 = vld [vmem:[%s1 + $0xf0] sm:$0xf]
      %v1008 = vld [vmem:[%s1 + $0xf4] sm:$0xf]
      %v1009 = vld [vmem:[%s1 + $0xf8] sm:$0xf]
      %v1010 = vld [vmem:[%s1 + $0xfc] sm:$0xf]
      %v1011 = vld [vmem:[%s1 + $0x100] sm:$0xf]
      %v1012 = vld [vmem:[%s1 + $0x104] sm:$0xf]
      %v1013 = vld [vmem:[%s1 + $0x108] sm:$0xf]
      %v1014 = vld [vmem:[%s1 + $0x10c] sm:$0xf]
      %v1015 = vld [vmem:[%s1 + $0x110] sm:$0xf]
      %v1016 = vld [vmem:[%s1 + $0x114] sm:$0xf]
      %v1017 = vld [vmem:[%s1 + $0x118] sm:$0xf]
      %v1018 = vld [vmem:[%s1 + $0x11c] sm:$0xf]
      %v1019 = vld [vmem:[%s1 + $0x120] sm:$0xf]
      %v1020 = vld [vmem:[%s1 + $0x124] sm:$0xf]
      %v1021 = vld [vmem:[%s1 + $0x128] sm:$0xf]
      %v1022 = vld [vmem:[%s1 + $0x12c] sm:$0xf]
      %v1023 = vld [vmem:[%s1 + $0x130] sm:$0xf]
      %v1024 = vld [vmem:[%s1 + $0x134] sm:$0xf]
      %v1025 = vld [vmem:[%s1 + $0x138] sm:$0xf]
      %v1026 = vld [vmem:[%s1 + $0x13c] sm:$0xf]
      %v1027 = vld [vmem:[%s1 + $0x140] sm:$0xf]
      %v1028 = vld [vmem:[%s1 + $0x144] sm:$0xf]
      %v1029 = vld [vmem:[%s1 + $0x148] sm:$0xf]
      %v1030 = vld [vmem:[%s1 + $0x14c] sm:$0xf]
      %v1031 = vld [vmem:[%s1 + $0x150] sm:$0xf]
      %v1032 = vld [vmem:[%s1 + $0x154] sm:$0xf]
      %v1033 = vld [vmem:[%s1 + $0x158] sm:$0xf]
      %v1034 = vld [vmem:[%s1 + $0x15c] sm:$0xf]
      %v1035 = vld [vmem:[%s1 + $0x160] sm:$0xf]
      %v1036 = vld [vmem:[%s1 + $0x164] sm:$0xf]
      %v1037 = vld [vmem:[%s1 + $0x168] sm:$0xf]
      %v1038 = vld [vmem:[%s1 + $0x16c] sm:$0xf]
      %v1039 = vld [vmem:[%s1 + $0x170] sm:$0xf]
      %v1040 = vld [vmem:[%s1 + $0x174] sm:$0xf]
      %v1041 = vld [vmem:[%s1 + $0x178] sm:$0xf]
      %v1042 = vld [vmem:[%s1 + $0x17c] sm:$0xf]
      %v1043 = vld [vmem:[%s1 + $0x180] sm:$0xf]
      %v1044 = vld [vmem:[%s1 + $0x184] sm:$0xf]
      %v1045 = vld [vmem:[%s1 + $0x188] sm:$0xf]
      %v1046 = vld [vmem:[%s1 + $0x18c] sm:$0xf]
      %v1047 = vld [vmem:[%s1 + $0x190] sm:$0xf]
      %v1048 = vld [vmem:[%s1 + $0x194] sm:$0xf]
      %v1049 = vld [vmem:[%s1 + $0x198] sm:$0xf]
      %v1050 = vld [vmem:[%s1 + $0x19c] sm:$0xf]
      %v1051 = vld [vmem:[%s1 + $0x1a0] sm:$0xf]
      %v1052 = vld [vmem:[%s1 + $0x1a4] sm:$0xf]
      %v1053 = vld [vmem:[%s1 + $0x1a8] sm:$0xf]
      %v1054 = vld [vmem:[%s1 + $0x1ac] sm:$0xf]
      %v1055 = vld [vmem:[%s1 + $0x1b0] sm:$0xf]
      %v1056 = vld [vmem:[%s1 + $0x1b4] sm:$0xf]
      %v1057 = vld [vmem:[%s1 + $0x1b8] sm:$0xf]
      %v1058 = vld [vmem:[%s1 + $0x1bc] sm:$0xf]
      %v1059 = vld [vmem:[%s1 + $0x1c0] sm:$0xf]
      %v1060 = vld [vmem:[%s1 + $0x1c4] sm:$0xf]
      %v1061 = vld [vmem:[%s1 + $0x1c8] sm:$0xf]
      %v1062 = vld [vmem:[%s1 + $0x1cc] sm:$0xf]
      %v1063 = vld [vmem:[%s1 + $0x1d0] sm:$0xf]
      %v1064 = vld [vmem:[%s1 + $0x1d4] sm:$0xf]
      %v1065 = vld [vmem:[%s1 + $0x1d8] sm:$0xf]
      %v1066 = vld [vmem:[%s1 + $0x1dc] sm:$0xf]
      %v1067 = vld [vmem:[%s1 + $0x1e0] sm:$0xf]
      %v1068 = vld [vmem:[%s1 + $0x1e4] sm:$0xf]
      %v1069 = vld [vmem:[%s1 + $0x1e8] sm:$0xf]
      %v1070 = vld [vmem:[%s1 + $0x1ec] sm:$0xf]
      %v1071 = vld [vmem:[%s1 + $0x1f0] sm:$0xf]
      %v1072 = vld [vmem:[%s1 + $0x1f4] sm:$0xf]
      %v1073 = vld [vmem:[%s1 + $0x1f8] sm:$0xf]
      %v1074 = vld [vmem:[%s1 + $0x1fc] sm:$0xf]
      %v1075 = vld [vmem:[%s1 + $0x200] sm:$0xf]
      %v1076 = vld [vmem:[%s1 + $0x204] sm:$0xf]
      %v1077 = vld [vmem:[%s1 + $0x208] sm:$0xf]
      %v1078 = vld [vmem:[%s1 + $0x20c] sm:$0xf]
      %v1079 = vld [vmem:[%s1 + $0x210] sm:$0xf]
      %v1080 = vld [vmem:[%s1 + $0x214] sm:$0xf]
      %v1081 = vld [vmem:[%s1 + $0x218] sm:$0xf]
      %v1082 = vld [vmem:[%s1 + $0x21c] sm:$0xf]
      %v1083 = vld [vmem:[%s1 + $0x220] sm:$0xf]
      %v1084 = vld [vmem:[%s1 + $0x224] sm:$0xf]
      %v1085 = vld [vmem:[%s1 + $0x228] sm:$0xf]
      %v1086 = vld [vmem:[%s1 + $0x22c] sm:$0xf]
      %v1087 = vld [vmem:[%s1 + $0x230] sm:$0xf]
      %v1088 = vld [vmem:[%s1 + $0x234] sm:$0xf]
      %v1089 = vld [vmem:[%s1 + $0x238] sm:$0xf]
      %v1090 = vld [vmem:[%s1 + $0x23c] sm:$0xf]
      %v1091 = vld [vmem:[%s212] sm:$0xf]
      %v1092 = vld [vmem:[%s212 + $0x8] sm:$0xf]
      %v1093 = vld [vmem:[%s212 + $0x10] sm:$0xf]
      %v1094 = vld [vmem:[%s212 + $0x18] sm:$0xf]
      %v1095 = vld [vmem:[%s212 + $0x20] sm:$0xf]
      %v1096 = vld [vmem:[%s212 + $0x28] sm:$0xf]
      %v1097 = vld [vmem:[%s212 + $0x30] sm:$0xf]
      %v1098 = vld [vmem:[%s212 + $0x38] sm:$0xf]
      %v1099 = vld [vmem:[%s3] sm:$0xf]
      %v1100 = vld [vmem:[%s3 + $0x4] sm:$0xf]
      %v1101 = vld [vmem:[%s3 + $0x8] sm:$0xf]
      %v1102 = vld [vmem:[%s3 + $0xc] sm:$0xf]
      %v1103 = vld [vmem:[%s3 + $0x10] sm:$0xf]
      %v1104 = vld [vmem:[%s3 + $0x14] sm:$0xf]
      %v1105 = vld [vmem:[%s3 + $0x18] sm:$0xf]
      %v1106 = vld [vmem:[%s3 + $0x1c] sm:$0xf]
      %v1107 = vld [vmem:[%s3 + $0x20] sm:$0xf]
      %v1108 = vld [vmem:[%s3 + $0x24] sm:$0xf]
      %v1109 = vld [vmem:[%s3 + $0x28] sm:$0xf]
      %v1110 = vld [vmem:[%s3 + $0x2c] sm:$0xf]
      %v1111 = vld [vmem:[%s3 + $0x30] sm:$0xf]
      %v1112 = vld [vmem:[%s3 + $0x34] sm:$0xf]
      %v1113 = vld [vmem:[%s3 + $0x38] sm:$0xf]
      %v1114 = vld [vmem:[%s3 + $0x3c] sm:$0xf]
      %v1123 = vunpack.c.l.b16 %v1091
      %v1124 = vunpack.c.l.b16 %v1092
      %v1125 = vunpack.c.l.b16 %v1093
      %v1126 = vunpack.c.l.b16 %v1094
      %v1127 = vunpack.c.l.b16 %v1095
      %v1128 = vunpack.c.l.b16 %v1096
      %v1129 = vunpack.c.l.b16 %v1097
      %v1130 = vunpack.c.l.b16 %v1098
      %v1131 = vpack.c.b16 %v1124, %v1123
      %v1132 = vpack.c.b16 %v1126, %v1125
      %v1133 = vpack.c.b16 %v1128, %v1127
      %v1134 = vpack.c.b16 %v1130, %v1129
      %v1155 = vunpack.c.l.b16 %v1099
      %v1156 = vunpack.c.l.b16 %v1100
      %v1157 = vunpack.c.l.b16 %v1101
      %v1158 = vunpack.c.l.b16 %v1102
      %v1159 = vunpack.c.l.b16 %v1103
      %v1160 = vunpack.c.l.b16 %v1104
      %v1161 = vunpack.c.l.b16 %v1105
      %v1162 = vunpack.c.l.b16 %v1106
      %v1163 = vunpack.c.l.b16 %v1107
      %v1164 = vunpack.c.l.b16 %v1108
      %v1165 = vunpack.c.l.b16 %v1109
      %v1166 = vunpack.c.l.b16 %v1110
      %v1167 = vunpack.c.l.b16 %v1111
      %v1168 = vunpack.c.l.b16 %v1112
      %v1169 = vunpack.c.l.b16 %v1113
      %v1170 = vunpack.c.l.b16 %v1114
      %v1171 = vpack.c.b16 %v1156, %v1155
      %v1172 = vpack.c.b16 %v1158, %v1157
      %v1173 = vpack.c.b16 %v1160, %v1159
      %v1174 = vpack.c.b16 %v1162, %v1161
      %v1175 = vpack.c.b16 %v1164, %v1163
      %v1176 = vpack.c.b16 %v1166, %v1165
      %v1177 = vpack.c.b16 %v1168, %v1167
      %v1178 = vpack.c.b16 %v1170, %v1169
      %1187 = vmatprep.subr.bf16.mxu0 0
      %1188 = vmatpush1.bf16.msra.mxu0 %v1171
      %1189 = vmatprep.subr.bf16.mxu0 0
      %1190 = vmatpush1.bf16.msra.mxu0 %v1172
      %1191 = vmatprep.subr.bf16.mxu0 0
      %1192 = vmatpush1.bf16.msra.mxu0 %v1173
      %1193 = vmatprep.subr.bf16.mxu0 0
      %1194 = vmatpush1.bf16.msra.mxu0 %v1174
      %1195 = vmatprep.subr.bf16.mxu0 0
      %1196 = vmatpush1.bf16.msra.mxu0 %v1175
      %1197 = vmatprep.subr.bf16.mxu0 0
      %1198 = vmatpush1.bf16.msra.mxu0 %v1176
      %1199 = vmatprep.subr.bf16.mxu0 0
      %1200 = vmatpush1.bf16.msra.mxu0 %v1177
      %1201 = vmatprep.subr.bf16.mxu0 0
      %1202 = vmatpush1.bf16.msra.mxu0 %v1178
      %1203 = vmatprep.subr.bf16.mxu0 0
      %1204 = vmatpush1.bf16.msra.mxu0 0
      %1205 = vmatprep.subr.bf16.mxu0 0
      %1206 = vmatpush1.bf16.msra.mxu0 0
      %1207 = vmatprep.subr.bf16.mxu0 0
      %1208 = vmatpush1.bf16.msra.mxu0 0
      %1209 = vmatprep.subr.bf16.mxu0 0
      %1210 = vmatpush1.bf16.msra.mxu0 0
      %1211 = vmatprep.subr.bf16.mxu0 0
      %1212 = vmatpush1.bf16.msra.mxu0 0
      %1213 = vmatprep.subr.bf16.mxu0 0
      %1214 = vmatpush1.bf16.msra.mxu0 0
      %1215 = vmatprep.subr.bf16.mxu0 0
      %1216 = vmatpush1.bf16.msra.mxu0 0
      %1217 = vmatprep.subr.bf16.mxu0 0
      %1218 = vmatpush1.bf16.msra.mxu0 0
      %1219 = vmatprep.mubr.bf16.mxu0 0
      %1220 = vmatmul.mubr.bf16.gmra.mrb[0].mxu0 %v1131
      %v1221 = vpop.f32.mrb[0].mxu0
      %v1222 = vadd.f32 0.0, %v1221
      %v1223 = vpop.f32.mrb[0].mxu0
      %v1224 = vpop.f32.mrb[0].mxu0
      %v1225 = vadd.f32 0.0, %v1224
      %v1226 = vpop.f32.mrb[0].mxu0
      %1227 = vmatprep.mubr.bf16.mxu0 0
      %1228 = vmatmul.mubr.bf16.gmra.mrb[0].mxu0 %v1132
      %v1229 = vpop.f32.mrb[0].mxu0
      %v1230 = vadd.f32 0.0, %v1229
      %v1231 = vpop.f32.mrb[0].mxu0
      %v1232 = vpop.f32.mrb[0].mxu0
      %v1233 = vadd.f32 0.0, %v1232
      %v1234 = vpop.f32.mrb[0].mxu0
      %1235 = vmatprep.mubr.bf16.mxu0 0
      %1236 = vmatmul.mubr.bf16.gmra.mrb[0].mxu0 %v1133
      %v1237 = vpop.f32.mrb[0].mxu0
      %v1238 = vadd.f32 0.0, %v1237
      %v1239 = vpop.f32.mrb[0].mxu0
      %v1240 = vpop.f32.mrb[0].mxu0
      %v1241 = vadd.f32 0.0, %v1240
      %v1242 = vpop.f32.mrb[0].mxu0
      %1243 = vmatprep.mubr.bf16.mxu0 0
      %1244 = vmatmul.mubr.bf16.gmra.mrb[0].mxu0 %v1134
      %v1245 = vpop.f32.mrb[0].mxu0
      %v1246 = vadd.f32 0.0, %v1245
      %v1247 = vpop.f32.mrb[0].mxu0
      %v1248 = vpop.f32.mrb[0].mxu0
      %v1249 = vadd.f32 0.0, %v1248
      %v1250 = vpop.f32.mrb[0].mxu0
      %1251 = vdwg.mxu0
      %v1396 = vunpack.c.l.b16 %v947
      %v1397 = vunpack.c.l.b16 %v948
      %v1398 = vunpack.c.l.b16 %v949
      %v1399 = vunpack.c.l.b16 %v950
      %v1400 = vunpack.c.l.b16 %v951
      %v1401 = vunpack.c.l.b16 %v952
      %v1402 = vunpack.c.l.b16 %v953
      %v1403 = vunpack.c.l.b16 %v954
      %v1404 = vunpack.c.l.b16 %v955
      %v1405 = vunpack.c.l.b16 %v956
      %v1406 = vunpack.c.l.b16 %v957
      %v1407 = vunpack.c.l.b16 %v958
      %v1408 = vunpack.c.l.b16 %v959
      %v1409 = vunpack.c.l.b16 %v960
      %v1410 = vunpack.c.l.b16 %v961
      %v1411 = vunpack.c.l.b16 %v962
      %v1412 = vunpack.c.l.b16 %v963
      %v1413 = vunpack.c.l.b16 %v964
      %v1414 = vunpack.c.l.b16 %v965
      %v1415 = vunpack.c.l.b16 %v966
      %v1416 = vunpack.c.l.b16 %v967
      %v1417 = vunpack.c.l.b16 %v968
      %v1418 = vunpack.c.l.b16 %v969
      %v1419 = vunpack.c.l.b16 %v970
      %v1420 = vunpack.c.l.b16 %v971
      %v1421 = vunpack.c.l.b16 %v972
      %v1422 = vunpack.c.l.b16 %v973
      %v1423 = vunpack.c.l.b16 %v974
      %v1424 = vunpack.c.l.b16 %v975
      %v1425 = vunpack.c.l.b16 %v976
      %v1426 = vunpack.c.l.b16 %v977
      %v1427 = vunpack.c.l.b16 %v978
      %v1428 = vunpack.c.l.b16 %v979
      %v1429 = vunpack.c.l.b16 %v980
      %v1430 = vunpack.c.l.b16 %v981
      %v1431 = vunpack.c.l.b16 %v982
      %v1432 = vunpack.c.l.b16 %v983
      %v1433 = vunpack.c.l.b16 %v984
      %v1434 = vunpack.c.l.b16 %v985
      %v1435 = vunpack.c.l.b16 %v986
      %v1436 = vunpack.c.l.b16 %v987
      %v1437 = vunpack.c.l.b16 %v988
      %v1438 = vunpack.c.l.b16 %v989
      %v1439 = vunpack.c.l.b16 %v990
      %v1440 = vunpack.c.l.b16 %v991
      %v1441 = vunpack.c.l.b16 %v992
      %v1442 = vunpack.c.l.b16 %v993
      %v1443 = vunpack.c.l.b16 %v994
      %v1444 = vunpack.c.l.b16 %v995
      %v1445 = vunpack.c.l.b16 %v996
      %v1446 = vunpack.c.l.b16 %v997
      %v1447 = vunpack.c.l.b16 %v998
      %v1448 = vunpack.c.l.b16 %v999
      %v1449 = vunpack.c.l.b16 %v1000
      %v1450 = vunpack.c.l.b16 %v1001
      %v1451 = vunpack.c.l.b16 %v1002
      %v1452 = vunpack.c.l.b16 %v1003
      %v1453 = vunpack.c.l.b16 %v1004
      %v1454 = vunpack.c.l.b16 %v1005
      %v1455 = vunpack.c.l.b16 %v1006
      %v1456 = vunpack.c.l.b16 %v1007
      %v1457 = vunpack.c.l.b16 %v1008
      %v1458 = vunpack.c.l.b16 %v1009
      %v1459 = vunpack.c.l.b16 %v1010
      %v1460 = vunpack.c.l.b16 %v1011
      %v1461 = vunpack.c.l.b16 %v1012
      %v1462 = vunpack.c.l.b16 %v1013
      %v1463 = vunpack.c.l.b16 %v1014
      %v1464 = vunpack.c.l.b16 %v1015
      %v1465 = vunpack.c.l.b16 %v1016
      %v1466 = vunpack.c.l.b16 %v1017
      %v1467 = vunpack.c.l.b16 %v1018
      %v1468 = vunpack.c.l.b16 %v1019
      %v1469 = vunpack.c.l.b16 %v1020
      %v1470 = vunpack.c.l.b16 %v1021
      %v1471 = vunpack.c.l.b16 %v1022
      %v1472 = vunpack.c.l.b16 %v1023
      %v1473 = vunpack.c.l.b16 %v1024
      %v1474 = vunpack.c.l.b16 %v1025
      %v1475 = vunpack.c.l.b16 %v1026
      %v1476 = vunpack.c.l.b16 %v1027
      %v1477 = vunpack.c.l.b16 %v1028
      %v1478 = vunpack.c.l.b16 %v1029
      %v1479 = vunpack.c.l.b16 %v1030
      %v1480 = vunpack.c.l.b16 %v1031
      %v1481 = vunpack.c.l.b16 %v1032
      %v1482 = vunpack.c.l.b16 %v1033
      %v1483 = vunpack.c.l.b16 %v1034
      %v1484 = vunpack.c.l.b16 %v1035
      %v1485 = vunpack.c.l.b16 %v1036
      %v1486 = vunpack.c.l.b16 %v1037
      %v1487 = vunpack.c.l.b16 %v1038
      %v1488 = vunpack.c.l.b16 %v1039
      %v1489 = vunpack.c.l.b16 %v1040
      %v1490 = vunpack.c.l.b16 %v1041
      %v1491 = vunpack.c.l.b16 %v1042
      %v1492 = vunpack.c.l.b16 %v1043
      %v1493 = vunpack.c.l.b16 %v1044
      %v1494 = vunpack.c.l.b16 %v1045
      %v1495 = vunpack.c.l.b16 %v1046
      %v1496 = vunpack.c.l.b16 %v1047
      %v1497 = vunpack.c.l.b16 %v1048
      %v1498 = vunpack.c.l.b16 %v1049
      %v1499 = vunpack.c.l.b16 %v1050
      %v1500 = vunpack.c.l.b16 %v1051
      %v1501 = vunpack.c.l.b16 %v1052
      %v1502 = vunpack.c.l.b16 %v1053
      %v1503 = vunpack.c.l.b16 %v1054
      %v1504 = vunpack.c.l.b16 %v1055
      %v1505 = vunpack.c.l.b16 %v1056
      %v1506 = vunpack.c.l.b16 %v1057
      %v1507 = vunpack.c.l.b16 %v1058
      %v1508 = vunpack.c.l.b16 %v1059
      %v1509 = vunpack.c.l.b16 %v1060
      %v1510 = vunpack.c.l.b16 %v1061
      %v1511 = vunpack.c.l.b16 %v1062
      %v1512 = vunpack.c.l.b16 %v1063
      %v1513 = vunpack.c.l.b16 %v1064
      %v1514 = vunpack.c.l.b16 %v1065
      %v1515 = vunpack.c.l.b16 %v1066
      %v1516 = vunpack.c.l.b16 %v1067
      %v1517 = vunpack.c.l.b16 %v1068
      %v1518 = vunpack.c.l.b16 %v1069
      %v1519 = vunpack.c.l.b16 %v1070
      %v1520 = vunpack.c.l.b16 %v1071
      %v1521 = vunpack.c.l.b16 %v1072
      %v1522 = vunpack.c.l.b16 %v1073
      %v1523 = vunpack.c.l.b16 %v1074
      %v1524 = vunpack.c.l.b16 %v1075
      %v1525 = vunpack.c.l.b16 %v1076
      %v1526 = vunpack.c.l.b16 %v1077
      %v1527 = vunpack.c.l.b16 %v1078
      %v1528 = vunpack.c.l.b16 %v1079
      %v1529 = vunpack.c.l.b16 %v1080
      %v1530 = vunpack.c.l.b16 %v1081
      %v1531 = vunpack.c.l.b16 %v1082
      %v1532 = vunpack.c.l.b16 %v1083
      %v1533 = vunpack.c.l.b16 %v1084
      %v1534 = vunpack.c.l.b16 %v1085
      %v1535 = vunpack.c.l.b16 %v1086
      %v1536 = vunpack.c.l.b16 %v1087
      %v1537 = vunpack.c.l.b16 %v1088
      %v1538 = vunpack.c.l.b16 %v1089
      %v1539 = vunpack.c.l.b16 %v1090
      %v1540 = vpack.c.b16 %v1397, %v1396
      %v1541 = vpack.c.b16 %v1399, %v1398
      %v1542 = vpack.c.b16 %v1401, %v1400
      %v1543 = vpack.c.b16 %v1403, %v1402
      %v1544 = vpack.c.b16 %v1405, %v1404
      %v1545 = vpack.c.b16 %v1407, %v1406
      %v1546 = vpack.c.b16 %v1409, %v1408
      %v1547 = vpack.c.b16 %v1411, %v1410
      %v1548 = vpack.c.b16 %v1413, %v1412
      %v1549 = vpack.c.b16 %v1415, %v1414
      %v1550 = vpack.c.b16 %v1417, %v1416
      %v1551 = vpack.c.b16 %v1419, %v1418
      %v1552 = vpack.c.b16 %v1421, %v1420
      %v1553 = vpack.c.b16 %v1423, %v1422
      %v1554 = vpack.c.b16 %v1425, %v1424
      %v1555 = vpack.c.b16 %v1427, %v1426
      %v1556 = vpack.c.b16 %v1429, %v1428
      %v1557 = vpack.c.b16 %v1431, %v1430
      %v1558 = vpack.c.b16 %v1433, %v1432
      %v1559 = vpack.c.b16 %v1435, %v1434
      %v1560 = vpack.c.b16 %v1437, %v1436
      %v1561 = vpack.c.b16 %v1439, %v1438
      %v1562 = vpack.c.b16 %v1441, %v1440
      %v1563 = vpack.c.b16 %v1443, %v1442
      %v1564 = vpack.c.b16 %v1445, %v1444
      %v1565 = vpack.c.b16 %v1447, %v1446
      %v1566 = vpack.c.b16 %v1449, %v1448
      %v1567 = vpack.c.b16 %v1451, %v1450
      %v1568 = vpack.c.b16 %v1453, %v1452
      %v1569 = vpack.c.b16 %v1455, %v1454
      %v1570 = vpack.c.b16 %v1457, %v1456
      %v1571 = vpack.c.b16 %v1459, %v1458
      %v1572 = vpack.c.b16 %v1461, %v1460
      %v1573 = vpack.c.b16 %v1463, %v1462
      %v1574 = vpack.c.b16 %v1465, %v1464
      %v1575 = vpack.c.b16 %v1467, %v1466
      %v1576 = vpack.c.b16 %v1469, %v1468
      %v1577 = vpack.c.b16 %v1471, %v1470
      %v1578 = vpack.c.b16 %v1473, %v1472
      %v1579 = vpack.c.b16 %v1475, %v1474
      %v1580 = vpack.c.b16 %v1477, %v1476
      %v1581 = vpack.c.b16 %v1479, %v1478
      %v1582 = vpack.c.b16 %v1481, %v1480
      %v1583 = vpack.c.b16 %v1483, %v1482
      %v1584 = vpack.c.b16 %v1485, %v1484
      %v1585 = vpack.c.b16 %v1487, %v1486
      %v1586 = vpack.c.b16 %v1489, %v1488
      %v1587 = vpack.c.b16 %v1491, %v1490
      %v1588 = vpack.c.b16 %v1493, %v1492
      %v1589 = vpack.c.b16 %v1495, %v1494
      %v1590 = vpack.c.b16 %v1497, %v1496
      %v1591 = vpack.c.b16 %v1499, %v1498
      %v1592 = vpack.c.b16 %v1501, %v1500
      %v1593 = vpack.c.b16 %v1503, %v1502
      %v1594 = vpack.c.b16 %v1505, %v1504
      %v1595 = vpack.c.b16 %v1507, %v1506
      %v1596 = vpack.c.b16 %v1509, %v1508
      %v1597 = vpack.c.b16 %v1511, %v1510
      %v1598 = vpack.c.b16 %v1513, %v1512
      %v1599 = vpack.c.b16 %v1515, %v1514
      %v1600 = vpack.c.b16 %v1517, %v1516
      %v1601 = vpack.c.b16 %v1519, %v1518
      %v1602 = vpack.c.b16 %v1521, %v1520
      %v1603 = vpack.c.b16 %v1523, %v1522
      %v1604 = vpack.c.b16 %v1525, %v1524
      %v1605 = vpack.c.b16 %v1527, %v1526
      %v1606 = vpack.c.b16 %v1529, %v1528
      %v1607 = vpack.c.b16 %v1531, %v1530
      %v1608 = vpack.c.b16 %v1533, %v1532
      %v1609 = vpack.c.b16 %v1535, %v1534
      %v1610 = vpack.c.b16 %v1537, %v1536
      %v1611 = vpack.c.b16 %v1539, %v1538
      %1684 = vmatprep.subr.bf16.mxu0 0
      %1685 = vmatpush1.bf16.msra.mxu0 %v1540
      %1686 = vmatprep.subr.bf16.mxu0 0
      %1687 = vmatpush1.bf16.msra.mxu0 %v1541
      %1688 = vmatprep.subr.bf16.mxu0 0
      %1689 = vmatpush1.bf16.msra.mxu0 %v1542
      %1690 = vmatprep.subr.bf16.mxu0 0
      %1691 = vmatpush1.bf16.msra.mxu0 %v1543
      %1692 = vmatprep.subr.bf16.mxu0 0
      %1693 = vmatpush1.bf16.msra.mxu0 %v1544
      %1694 = vmatprep.subr.bf16.mxu0 0
      %1695 = vmatpush1.bf16.msra.mxu0 %v1545
      %1696 = vmatprep.subr.bf16.mxu0 0
      %1697 = vmatpush1.bf16.msra.mxu0 %v1546
      %1698 = vmatprep.subr.bf16.mxu0 0
      %1699 = vmatpush1.bf16.msra.mxu0 %v1547
      %1700 = vmatprep.subr.bf16.mxu0 0
      %1701 = vmatpush1.bf16.msra.mxu0 %v1548
      %1702 = vmatprep.subr.bf16.mxu0 0
      %1703 = vmatpush1.bf16.msra.mxu0 %v1549
      %1704 = vmatprep.subr.bf16.mxu0 0
      %1705 = vmatpush1.bf16.msra.mxu0 %v1550
      %1706 = vmatprep.subr.bf16.mxu0 0
      %1707 = vmatpush1.bf16.msra.mxu0 %v1551
      %1708 = vmatprep.subr.bf16.mxu0 0
      %1709 = vmatpush1.bf16.msra.mxu0 %v1552
      %1710 = vmatprep.subr.bf16.mxu0 0
      %1711 = vmatpush1.bf16.msra.mxu0 %v1553
      %1712 = vmatprep.subr.bf16.mxu0 0
      %1713 = vmatpush1.bf16.msra.mxu0 %v1554
      %1714 = vmatprep.subr.bf16.mxu0 0
      %1715 = vmatpush1.bf16.msra.mxu0 %v1555
      %1716 = vmatprep.mubr.bf16.mxu0 %v811
      %1717 = vmatmul.mubr.bf16.gmra.mrb[0].mxu0 %v795
      %v1718 = vpop.f32.mrb[0].mxu0
      %v1719 = vadd.f32 %v1222, %v1718
      %v1720 = vpop.f32.mrb[0].mxu0
      %v1721 = vpop.f32.mrb[0].mxu0
      %v1722 = vadd.f32 %v1225, %v1721
      %v1723 = vpop.f32.mrb[0].mxu0
      %1724 = vmatprep.mubr.bf16.mxu0 %v812
      %1725 = vmatmul.mubr.bf16.gmra.mrb[0].mxu0 %v796
      %v1726 = vpop.f32.mrb[0].mxu0
      %v1727 = vadd.f32 %v1230, %v1726
      %v1728 = vpop.f32.mrb[0].mxu0
      %v1729 = vpop.f32.mrb[0].mxu0
      %v1730 = vadd.f32 %v1233, %v1729
      %v1731 = vpop.f32.mrb[0].mxu0
      %1732 = vmatprep.mubr.bf16.mxu0 %v813
      %1733 = vmatmul.mubr.bf16.gmra.mrb[0].mxu0 %v797
      %v1734 = vpop.f32.mrb[0].mxu0
      %v1735 = vadd.f32 %v1238, %v1734
      %v1736 = vpop.f32.mrb[0].mxu0
      %v1737 = vpop.f32.mrb[0].mxu0
      %v1738 = vadd.f32 %v1241, %v1737
      %v1739 = vpop.f32.mrb[0].mxu0
      %1740 = vmatprep.mubr.bf16.mxu0 %v814
      %1741 = vmatmul.mubr.bf16.gmra.mrb[0].mxu0 %v798
      %v1742 = vpop.f32.mrb[0].mxu0
      %v1743 = vadd.f32 %v1246, %v1742
      %v1744 = vpop.f32.mrb[0].mxu0
      %v1745 = vpop.f32.mrb[0].mxu0
      %v1746 = vadd.f32 %v1249, %v1745
      %v1747 = vpop.f32.mrb[0].mxu0
      %1748 = vdwg.mxu0
      %1749 = vmatprep.subr.bf16.mxu0 0
      %1750 = vmatpush1.bf16.msra.mxu0 %v1556
      %1751 = vmatprep.subr.bf16.mxu0 0
      %1752 = vmatpush1.bf16.msra.mxu0 %v1557
      %1753 = vmatprep.subr.bf16.mxu0 0
      %1754 = vmatpush1.bf16.msra.mxu0 %v1558
      %1755 = vmatprep.subr.bf16.mxu0 0
      %1756 = vmatpush1.bf16.msra.mxu0 %v1559
      %1757 = vmatprep.subr.bf16.mxu0 0
      %1758 = vmatpush1.bf16.msra.mxu0 %v1560
      %1759 = vmatprep.subr.bf16.mxu0 0
      %1760 = vmatpush1.bf16.msra.mxu0 %v1561
      %1761 = vmatprep.subr.bf16.mxu0 0
      %1762 = vmatpush1.bf16.msra.mxu0 %v1562
      %1763 = vmatprep.subr.bf16.mxu0 0
      %1764 = vmatpush1.bf16.msra.mxu0 %v1563
      %1765 = vmatprep.subr.bf16.mxu0 0
      %1766 = vmatpush1.bf16.msra.mxu0 %v1564
      %1767 = vmatprep.subr.bf16.mxu0 0
      %1768 = vmatpush1.bf16.msra.mxu0 %v1565
      %1769 = vmatprep.subr.bf16.mxu0 0
      %1770 = vmatpush1.bf16.msra.mxu0 %v1566
      %1771 = vmatprep.subr.bf16.mxu0 0
      %1772 = vmatpush1.bf16.msra.mxu0 %v1567
      %1773 = vmatprep.subr.bf16.mxu0 0
      %1774 = vmatpush1.bf16.msra.mxu0 %v1568
      %1775 = vmatprep.subr.bf16.mxu0 0
      %1776 = vmatpush1.bf16.msra.mxu0 %v1569
      %1777 = vmatprep.subr.bf16.mxu0 0
      %1778 = vmatpush1.bf16.msra.mxu0 %v1570
      %1779 = vmatprep.subr.bf16.mxu0 0
      %1780 = vmatpush1.bf16.msra.mxu0 %v1571
      %1781 = vmatprep.mubr.bf16.mxu0 %v851
      %1782 = vmatmul.mubr.bf16.gmra.mrb[0].mxu0 %v827
      %v1783 = vpop.f32.mrb[0].mxu0
      %v1784 = vadd.f32 %v1719, %v1783
      %v1785 = vpop.f32.mrb[0].mxu0
      %v1786 = vpop.f32.mrb[0].mxu0
      %v1787 = vadd.f32 %v1722, %v1786
      %v1788 = vpop.f32.mrb[0].mxu0
      %1789 = vmatprep.mubr.bf16.mxu0 %v852
      %1790 = vmatmul.mubr.bf16.gmra.mrb[0].mxu0 %v828
      %v1791 = vpop.f32.mrb[0].mxu0
      %v1792 = vadd.f32 %v1727, %v1791
      %v1793 = vpop.f32.mrb[0].mxu0
      %v1794 = vpop.f32.mrb[0].mxu0
      %v1795 = vadd.f32 %v1730, %v1794
      %v1796 = vpop.f32.mrb[0].mxu0
      %1797 = vmatprep.mubr.bf16.mxu0 %v853
      %1798 = vmatmul.mubr.bf16.gmra.mrb[0].mxu0 %v829
      %v1799 = vpop.f32.mrb[0].mxu0
      %v1800 = vadd.f32 %v1735, %v1799
      %v1801 = vpop.f32.mrb[0].mxu0
      %v1802 = vpop.f32.mrb[0].mxu0
      %v1803 = vadd.f32 %v1738, %v1802
      %v1804 = vpop.f32.mrb[0].mxu0
      %1805 = vmatprep.mubr.bf16.mxu0 %v854
      %1806 = vmatmul.mubr.bf16.gmra.mrb[0].mxu0 %v830
      %v1807 = vpop.f32.mrb[0].mxu0
      %v1808 = vadd.f32 %v1743, %v1807
      %v1809 = vpop.f32.mrb[0].mxu0
      %v1810 = vpop.f32.mrb[0].mxu0
      %v1811 = vadd.f32 %v1746, %v1810
      %v1812 = vpop.f32.mrb[0].mxu0
      %1813 = vdwg.mxu0
      %1814 = vmatprep.subr.bf16.mxu0 0
      %1815 = vmatpush1.bf16.msra.mxu0 %v1572
      %1816 = vmatprep.subr.bf16.mxu0 0
      %1817 = vmatpush1.bf16.msra.mxu0 %v1573
      %1818 = vmatprep.subr.bf16.mxu0 0
      %1819 = vmatpush1.bf16.msra.mxu0 %v1574
      %1820 = vmatprep.subr.bf16.mxu0 0
      %1821 = vmatpush1.bf16.msra.mxu0 %v1575
      %1822 = vmatprep.subr.bf16.mxu0 0
      %1823 = vmatpush1.bf16.msra.mxu0 %v1576
      %1824 = vmatprep.subr.bf16.mxu0 0
      %1825 = vmatpush1.bf16.msra.mxu0 %v1577
      %1826 = vmatprep.subr.bf16.mxu0 0
      %1827 = vmatpush1.bf16.msra.mxu0 %v1578
      %1828 = vmatprep.subr.bf16.mxu0 0
      %1829 = vmatpush1.bf16.msra.mxu0 %v1579
      %1830 = vmatprep.subr.bf16.mxu0 0
      %1831 = vmatpush1.bf16.msra.mxu0 %v1580
      %1832 = vmatprep.subr.bf16.mxu0 0
      %1833 = vmatpush1.bf16.msra.mxu0 %v1581
      %1834 = vmatprep.subr.bf16.mxu0 0
      %1835 = vmatpush1.bf16.msra.mxu0 %v1582
      %1836 = vmatprep.subr.bf16.mxu0 0
      %1837 = vmatpush1.bf16.msra.mxu0 %v1583
      %1838 = vmatprep.subr.bf16.mxu0 0
      %1839 = vmatpush1.bf16.msra.mxu0 %v1584
      %1840 = vmatprep.subr.bf16.mxu0 0
      %1841 = vmatpush1.bf16.msra.mxu0 %v1585
      %1842 = vmatprep.subr.bf16.mxu0 0
      %1843 = vmatpush1.bf16.msra.mxu0 %v1586
      %1844 = vmatprep.subr.bf16.mxu0 0
      %1845 = vmatpush1.bf16.msra.mxu0 %v1587
      %1846 = vmatprep.mubr.bf16.mxu0 %v883
      %1847 = vmatmul.mubr.bf16.gmra.mrb[0].mxu0 %v867
      %v1848 = vpop.f32.mrb[0].mxu0
      %v1849 = vadd.f32 %v1784, %v1848
      %v1850 = vpop.f32.mrb[0].mxu0
      %v1851 = vpop.f32.mrb[0].mxu0
      %v1852 = vadd.f32 %v1787, %v1851
      %v1853 = vpop.f32.mrb[0].mxu0
      %1854 = vmatprep.mubr.bf16.mxu0 %v884
      %1855 = vmatmul.mubr.bf16.gmra.mrb[0].mxu0 %v868
      %v1856 = vpop.f32.mrb[0].mxu0
      %v1857 = vadd.f32 %v1792, %v1856
      %v1858 = vpop.f32.mrb[0].mxu0
      %v1859 = vpop.f32.mrb[0].mxu0
      %v1860 = vadd.f32 %v1795, %v1859
      %v1861 = vpop.f32.mrb[0].mxu0
      %1862 = vmatprep.mubr.bf16.mxu0 %v885
      %1863 = vmatmul.mubr.bf16.gmra.mrb[0].mxu0 %v869
      %v1864 = vpop.f32.mrb[0].mxu0
      %v1865 = vadd.f32 %v1800, %v1864
      %v1866 = vpop.f32.mrb[0].mxu0
      %v1867 = vpop.f32.mrb[0].mxu0
      %v1868 = vadd.f32 %v1803, %v1867
      %v1869 = vpop.f32.mrb[0].mxu0
      %1870 = vmatprep.mubr.bf16.mxu0 %v886
      %1871 = vmatmul.mubr.bf16.gmra.mrb[0].mxu0 %v870
      %v1872 = vpop.f32.mrb[0].mxu0
      %v1873 = vadd.f32 %v1808, %v1872
      %v1874 = vpop.f32.mrb[0].mxu0
      %v1875 = vpop.f32.mrb[0].mxu0
      %v1876 = vadd.f32 %v1811, %v1875
      %v1877 = vpop.f32.mrb[0].mxu0
      %1878 = vdwg.mxu0
      %1879 = vmatprep.subr.bf16.mxu0 0
      %1880 = vmatpush1.bf16.msra.mxu0 %v1588
      %1881 = vmatprep.subr.bf16.mxu0 0
      %1882 = vmatpush1.bf16.msra.mxu0 %v1589
      %1883 = vmatprep.subr.bf16.mxu0 0
      %1884 = vmatpush1.bf16.msra.mxu0 %v1590
      %1885 = vmatprep.subr.bf16.mxu0 0
      %1886 = vmatpush1.bf16.msra.mxu0 %v1591
      %1887 = vmatprep.subr.bf16.mxu0 0
      %1888 = vmatpush1.bf16.msra.mxu0 %v1592
      %1889 = vmatprep.subr.bf16.mxu0 0
      %1890 = vmatpush1.bf16.msra.mxu0 %v1593
      %1891 = vmatprep.subr.bf16.mxu0 0
      %1892 = vmatpush1.bf16.msra.mxu0 %v1594
      %1893 = vmatprep.subr.bf16.mxu0 0
      %1894 = vmatpush1.bf16.msra.mxu0 %v1595
      %1895 = vmatprep.subr.bf16.mxu0 0
      %1896 = vmatpush1.bf16.msra.mxu0 %v1596
      %1897 = vmatprep.subr.bf16.mxu0 0
      %1898 = vmatpush1.bf16.msra.mxu0 %v1597
      %1899 = vmatprep.subr.bf16.mxu0 0
      %1900 = vmatpush1.bf16.msra.mxu0 %v1598
      %1901 = vmatprep.subr.bf16.mxu0 0
      %1902 = vmatpush1.bf16.msra.mxu0 %v1599
      %1903 = vmatprep.subr.bf16.mxu0 0
      %1904 = vmatpush1.bf16.msra.mxu0 %v1600
      %1905 = vmatprep.subr.bf16.mxu0 0
      %1906 = vmatpush1.bf16.msra.mxu0 %v1601
      %1907 = vmatprep.subr.bf16.mxu0 0
      %1908 = vmatpush1.bf16.msra.mxu0 %v1602
      %1909 = vmatprep.subr.bf16.mxu0 0
      %1910 = vmatpush1.bf16.msra.mxu0 %v1603
      %1911 = vmatprep.mubr.bf16.mxu0 %v923
      %1912 = vmatmul.mubr.bf16.gmra.mrb[0].mxu0 %v907
      %v1913 = vpop.f32.mrb[0].mxu0
      %v1914 = vadd.f32 %v1849, %v1913
      %v1915 = vpop.f32.mrb[0].mxu0
      %v1916 = vpop.f32.mrb[0].mxu0
      %v1917 = vadd.f32 %v1852, %v1916
      %v1918 = vpop.f32.mrb[0].mxu0
      %1919 = vmatprep.mubr.bf16.mxu0 %v924
      %1920 = vmatmul.mubr.bf16.gmra.mrb[0].mxu0 %v908
      %v1921 = vpop.f32.mrb[0].mxu0
      %v1922 = vadd.f32 %v1857, %v1921
      %v1923 = vpop.f32.mrb[0].mxu0
      %v1924 = vpop.f32.mrb[0].mxu0
      %v1925 = vadd.f32 %v1860, %v1924
      %v1926 = vpop.f32.mrb[0].mxu0
      %1927 = vmatprep.mubr.bf16.mxu0 %v925
      %1928 = vmatmul.mubr.bf16.gmra.mrb[0].mxu0 %v909
      %v1929 = vpop.f32.mrb[0].mxu0
      %v1930 = vadd.f32 %v1865, %v1929
      %v1931 = vpop.f32.mrb[0].mxu0
      %v1932 = vpop.f32.mrb[0].mxu0
      %v1933 = vadd.f32 %v1868, %v1932
      %v1934 = vpop.f32.mrb[0].mxu0
      %1935 = vmatprep.mubr.bf16.mxu0 %v926
      %1936 = vmatmul.mubr.bf16.gmra.mrb[0].mxu0 %v910
      %v1937 = vpop.f32.mrb[0].mxu0
      %v1938 = vadd.f32 %v1873, %v1937
      %v1939 = vpop.f32.mrb[0].mxu0
      %v1940 = vpop.f32.mrb[0].mxu0
      %v1941 = vadd.f32 %v1876, %v1940
      %v1942 = vpop.f32.mrb[0].mxu0
      %1943 = vdwg.mxu0
      %1944 = vmatprep.subr.bf16.mxu0 0
      %1945 = vmatpush1.bf16.msra.mxu0 %v1604
      %1946 = vmatprep.subr.bf16.mxu0 0
      %1947 = vmatpush1.bf16.msra.mxu0 %v1605
      %1948 = vmatprep.subr.bf16.mxu0 0
      %1949 = vmatpush1.bf16.msra.mxu0 %v1606
      %1950 = vmatprep.subr.bf16.mxu0 0
      %1951 = vmatpush1.bf16.msra.mxu0 %v1607
      %1952 = vmatprep.subr.bf16.mxu0 0
      %1953 = vmatpush1.bf16.msra.mxu0 %v1608
      %1954 = vmatprep.subr.bf16.mxu0 0
      %1955 = vmatpush1.bf16.msra.mxu0 %v1609
      %1956 = vmatprep.subr.bf16.mxu0 0
      %1957 = vmatpush1.bf16.msra.mxu0 %v1610
      %1958 = vmatprep.subr.bf16.mxu0 0
      %1959 = vmatpush1.bf16.msra.mxu0 %v1611
      %1960 = vmatprep.subr.bf16.mxu0 0
      %1961 = vmatpush1.bf16.msra.mxu0 0
      %1962 = vmatprep.subr.bf16.mxu0 0
      %1963 = vmatpush1.bf16.msra.mxu0 0
      %1964 = vmatprep.subr.bf16.mxu0 0
      %1965 = vmatpush1.bf16.msra.mxu0 0
      %1966 = vmatprep.subr.bf16.mxu0 0
      %1967 = vmatpush1.bf16.msra.mxu0 0
      %1968 = vmatprep.subr.bf16.mxu0 0
      %1969 = vmatpush1.bf16.msra.mxu0 0
      %1970 = vmatprep.subr.bf16.mxu0 0
      %1971 = vmatpush1.bf16.msra.mxu0 0
      %1972 = vmatprep.subr.bf16.mxu0 0
      %1973 = vmatpush1.bf16.msra.mxu0 0
      %1974 = vmatprep.subr.bf16.mxu0 0
      %1975 = vmatpush1.bf16.msra.mxu0 0
      %1976 = vmatprep.mubr.bf16.mxu0 0
      %1977 = vmatmul.mubr.bf16.gmra.mrb[0].mxu0 %v939
      %v1978 = vpop.f32.mrb[0].mxu0
      %v1979 = vadd.f32 %v1914, %v1978
      %v1980 = vpop.f32.mrb[0].mxu0
      %v1981 = vpop.f32.mrb[0].mxu0
      %v1982 = vadd.f32 %v1917, %v1981
      %v1983 = vpop.f32.mrb[0].mxu0
      %1984 = vmatprep.mubr.bf16.mxu0 0
      %1985 = vmatmul.mubr.bf16.gmra.mrb[0].mxu0 %v940
      %v1986 = vpop.f32.mrb[0].mxu0
      %v1987 = vadd.f32 %v1922, %v1986
      %v1988 = vpop.f32.mrb[0].mxu0
      %v1989 = vpop.f32.mrb[0].mxu0
      %v1990 = vadd.f32 %v1925, %v1989
      %v1991 = vpop.f32.mrb[0].mxu0
      %1992 = vmatprep.mubr.bf16.mxu0 0
      %1993 = vmatmul.mubr.bf16.gmra.mrb[0].mxu0 %v941
      %v1994 = vpop.f32.mrb[0].mxu0
      %v1995 = vadd.f32 %v1930, %v1994
      %v1996 = vpop.f32.mrb[0].mxu0
      %v1997 = vpop.f32.mrb[0].mxu0
      %v1998 = vadd.f32 %v1933, %v1997
      %v1999 = vpop.f32.mrb[0].mxu0
      %2000 = vmatprep.mubr.bf16.mxu0 0
      %2001 = vmatmul.mubr.bf16.gmra.mrb[0].mxu0 %v942
      %v2002 = vpop.f32.mrb[0].mxu0
      %v2003 = vadd.f32 %v1938, %v2002
      %v2004 = vpop.f32.mrb[0].mxu0
      %v2005 = vpop.f32.mrb[0].mxu0
      %v2006 = vadd.f32 %v1941, %v2005
      %v2007 = vpop.f32.mrb[0].mxu0
      %2008 = vdwg.mxu0
      %v2009 = vpack.c.bf16 %v1979, %v1979
      %v2010 = vpack.c.bf16 %v1982, %v1982
      %v2011 = vpack.c.bf16 %v1987, %v1987
      %v2012 = vpack.c.bf16 %v1990, %v1990
      %v2013 = vpack.c.bf16 %v1995, %v1995
      %v2014 = vpack.c.bf16 %v1998, %v1998
      %v2015 = vpack.c.bf16 %v2003, %v2003
      %v2016 = vpack.c.bf16 %v2006, %v2006
      %2017 = vst [vmem:[%s217] sm:$0xf] %v2009
      %2018 = vst [vmem:[%s217 + $0x4] sm:$0xf] %v2010
      %2019 = vst [vmem:[%s217 + $0x8] sm:$0xf] %v2011
      %2020 = vst [vmem:[%s217 + $0xc] sm:$0xf] %v2012
      %2021 = vst [vmem:[%s217 + $0x10] sm:$0xf] %v2013
      %2022 = vst [vmem:[%s217 + $0x14] sm:$0xf] %v2014
      %2023 = vst [vmem:[%s217 + $0x18] sm:$0xf] %v2015
      %2024 = vst [vmem:[%s217 + $0x1c] sm:$0xf] %v2016
      %p2025 = scmp.lt.s32.totalorder %s15, 1
      %s2026 = scalar_select %p2025, %s15, 1
      %s2027 = smul.addr %s2026, 8
      %s2028 = smul.addr %s2027, 4
      %s2029 = scalar_lea.vmem %s4, %s2028
      // Predicated region
      $region37: #{preact_block_forward.9} parent=35 // pred_check
        %p2030 = pneg %p127
      $region38: #{preact_block_forward.9} parent=35 // pred_check_branch
        %2032 = sbr.rel (%p2030) target = $region40
      $region39: #{preact_block_forward.9} parent=35 // pred_region
        _
      $region40: #{preact_block_forward.9} parent=35 // pred_fallthru
        _
    $region36: #{preact_block_forward.9} parent=5 // pred_fallthru
      _
    %p2033 = scmp.le.s32.totalorder 2, %s10
    // Predicated region
    $region41: #{preact_block_forward.9} parent=5 // pred_check
      %p2034 = pneg %p2033
    $region42: #{preact_block_forward.9} parent=5 // pred_check_branch
      %2036 = sbr.rel (%p2034) target = $region44
    $region43: #{preact_block_forward.9} parent=5 // pred_region
      %s2037 = ssub.s32 %s10, 2
      // Predicated region
      $region45: #{preact_block_forward.9} parent=43 // pred_check
        %p2038 = pneg %p133
      $region46: #{preact_block_forward.9} parent=43 // pred_check_branch
        %2040 = sbr.rel (%p2038) target = $region48
      $region47: #{preact_block_forward.9} parent=43 // pred_region
        %p2041 = scmp.lt.s32.totalorder %s16, 1
        %s2042 = scalar_select %p2041, %s16, 1
        %s2043 = smul.addr %s2042, 8
        %s2044 = smul.addr %s2043, 4
        %s2045 = scalar_lea.vmem %s4, %s2044
      $region48: #{preact_block_forward.9} parent=43 // pred_fallthru
        _
    $region44: #{preact_block_forward.9} parent=5 // pred_fallthru
      _
  $region6: #{preact_block_forward.9} parent=0 // loop_footer
    %s14 = sadd.s32 1, %s10
  $region7: #{preact_block_forward.9} parent=0 // loop_footer_branch
    %9 = sbr.rel target = $region3
  $region8: #{preact_block_forward.9} parent=0 // loop_exit
    _

</llo_original>
